<compile_context>
chip_gen: v5e
topology: v5e:2x2
jax: 0.10.0
libtpu: 0.0.40
codegen_flags: <defaults>
</compile_context>

<pallas_src>
import functools

import jax
import jax.numpy as jnp
from jax.experimental import pallas as pl
from jax.experimental.pallas import tpu as pltpu

D_IN = 28 * 28        # 784 — nn.Flatten feature width (NCHW row-major)
D_PAD = 896           # 784 padded up to a lane multiple (128)
HIDDEN = 512
LANE = 128
ROW_ALIGN = 16        # bf16 packs 16 rows per sublane group — align tiles to 16
WEIGHT_DTYPE = jnp.bfloat16
ACT_DTYPE = jnp.bfloat16   # dtype of the x / reconstruction HBM streams


def _round_up(x, m):
    return ((x + m - 1) // m) * m


def _tpu_config():
    """Generation-aware batch-tile cap and VMEM limit (safe fallbacks)."""
    try:
        vmem_cap = int(pltpu.get_tpu_info().vmem_capacity_bytes)
    except Exception:
        vmem_cap = 64 * 1024 * 1024          # conservative (v7x-sized)
    try:
        kind = jax.devices()[0].device_kind.lower()
    except Exception:
        kind = ""
    is_v5e = ("v5 lite" in kind) or ("v5e" in kind) or ("v5litepod" in kind)
    # v5e is already MXU-bound at 512 rows; v6e/v7x amortize the ~0.35 us
    # per-grid-step overhead better with 1024-row tiles.
    tile_cap = 512 if is_v5e else 1024
    # ~48 MiB on v7x (64 MiB physical), capped at 96 MiB on v5e/v6e (128 MiB).
    vmem_limit = max(32 * 1024 * 1024,
                     min(vmem_cap * 3 // 4, 96 * 1024 * 1024))
    return tile_cap, vmem_limit


def _generator_kernel(x_ref, w1_ref, b1_ref, w2_ref, b2_ref,
                      w3_ref, b3_ref, w4_ref, b4_ref,
                      latent_ref, recon_ref):
    f32 = jnp.float32
    x = x_ref[...]                                                        # (TB, 896) bf16

    # Encoder: Linear(784 -> 512) + ReLU, Linear(512 -> latent_dim)
    h1 = jnp.dot(x, w1_ref[...], preferred_element_type=f32)             # (TB, 512) f32
    h1 = jnp.maximum(h1 + b1_ref[...], 0.0)
    latent = jnp.dot(h1.astype(w2_ref.dtype), w2_ref[...],
                     preferred_element_type=f32) + b2_ref[...]            # (TB, L_PAD) f32
    latent_ref[...] = latent.astype(latent_ref.dtype)

    # Decoder: Linear(latent_dim -> 512) + ReLU, Linear(512 -> 784) + Tanh
    # (decoder consumes the pre-cast f32 `latent`, not latent_ref's dtype)
    h2 = jnp.dot(latent.astype(w3_ref.dtype), w3_ref[...],
                 preferred_element_type=f32)                              # (TB, 512) f32
    h2 = jnp.maximum(h2 + b3_ref[...], 0.0)
    recon = jnp.dot(h2.astype(w4_ref.dtype), w4_ref[...],
                    preferred_element_type=f32) + b4_ref[...]             # (TB, 896) f32
    recon_ref[...] = jnp.tanh(recon).astype(recon_ref.dtype)             # bf16 store


@functools.partial(jax.jit, static_argnames=("latent_dim",))
def generator_forward(x_nchw, params, latent_dim):
    """x_nchw: (B, 1, 28, 28) float32. Returns (latent, reconstruction)."""
    w1, b1, w2, b2, w3, b3, w4, b4 = params
    B = x_nchw.shape[0]
    L_PAD = w2.shape[1]

    tile_cap, vmem_limit = _tpu_config()

    # Balanced tiling: padding waste <= ROW_ALIGN-1 rows, all tiles equal size,
    # even tile count when multi-tile (v7x 2-TC sharding of the parallel axis).
    n_tiles = pl.cdiv(B, tile_cap)
    if n_tiles > 1 and n_tiles % 2 == 1:
        n_tiles += 1
    tile_b = _round_up(pl.cdiv(B, n_tiles), ROW_ALIGN)
    B_pad = n_tiles * tile_b

    # Flatten exactly like nn.Flatten, cast to bf16 *before* padding (halves the
    # wrapper pad pass and the x DMA), then zero-pad rows + feature lanes.
    x_flat = x_nchw.reshape(B, D_IN).astype(ACT_DTYPE)
    x_pad = jnp.pad(x_flat, ((0, B_pad - B), (0, D_PAD - D_IN)))

    act_isz = jnp.dtype(ACT_DTYPE).itemsize
    flops = 2 * B_pad * (D_PAD * HIDDEN + HIDDEN * L_PAD + L_PAD * HIDDEN + HIDDEN * D_PAD)
    weight_bytes = sum(int(p.size) * jnp.dtype(p.dtype).itemsize for p in params)
    bytes_accessed = (weight_bytes
                      + B_pad * D_PAD * act_isz       # x in      (bf16)
                      + B_pad * L_PAD * 4             # latent out (f32)
                      + B_pad * D_PAD * act_isz)      # recon out  (bf16)
    cost = pl.CostEstimate(flops=flops,
                           transcendentals=B_pad * D_PAD,   # tanh
                           bytes_accessed=bytes_accessed)

    latent_pad, recon_pad = pl.pallas_call(
        _generator_kernel,
        out_shape=(
            jax.ShapeDtypeStruct((B_pad, L_PAD), jnp.float32),   # latent stays f32
            jax.ShapeDtypeStruct((B_pad, D_PAD), ACT_DTYPE),     # recon in bf16
        ),
        grid=(n_tiles,),
        in_specs=[
            pl.BlockSpec((tile_b, D_PAD), lambda i: (i, 0)),   # x tile (pipelined)
            pl.BlockSpec(w1.shape, lambda i: (0, 0)),          # weights/biases resident
            pl.BlockSpec(b1.shape, lambda i: (0, 0)),
            pl.BlockSpec(w2.shape, lambda i: (0, 0)),
            pl.BlockSpec(b2.shape, lambda i: (0, 0)),
            pl.BlockSpec(w3.shape, lambda i: (0, 0)),
            pl.BlockSpec(b3.shape, lambda i: (0, 0)),
            pl.BlockSpec(w4.shape, lambda i: (0, 0)),
            pl.BlockSpec(b4.shape, lambda i: (0, 0)),
        ],
        out_specs=(
            pl.BlockSpec((tile_b, L_PAD), lambda i: (i, 0)),
            pl.BlockSpec((tile_b, D_PAD), lambda i: (i, 0)),
        ),
        compiler_params=pltpu.CompilerParams(
            dimension_semantics=("parallel",),
            vmem_limit_bytes=vmem_limit,
        ),
        cost_estimate=cost,
    )(x_pad, *params)

    latent = latent_pad[:B, :latent_dim]
    reconstruction = recon_pad[:B, :D_IN].astype(jnp.float32).reshape(B, 1, 28, 28)
    return latent, reconstruction


def init_params(key, latent_dim):
    """Deterministic synthetic weights, (in, out) layout, zero-padded to lane
    multiples (784->896, latent->128). Weights bf16, biases f32."""
    l_pad = _round_up(latent_dim, LANE)
    ks = jax.random.split(key, 8)

    def lin(kw, kb, fan_in, fan_out, pad_in, pad_out):
        scale = 1.0 / jnp.sqrt(fan_in)
        w = jax.random.uniform(kw, (fan_in, fan_out), jnp.float32, -scale, scale)
        b = jax.random.uniform(kb, (1, fan_out), jnp.float32, -scale, scale)
        w = jnp.pad(w, ((0, pad_in - fan_in), (0, pad_out - fan_out)))
        b = jnp.pad(b, ((0, 0), (0, pad_out - fan_out)))
        return w.astype(WEIGHT_DTYPE), b   # bias stays f32

    w1, b1 = lin(ks[0], ks[1], D_IN, HIDDEN, D_PAD, HIDDEN)        # encoder layer 1
    w2, b2 = lin(ks[2], ks[3], HIDDEN, latent_dim, HIDDEN, l_pad)  # encoder layer 2
    w3, b3 = lin(ks[4], ks[5], latent_dim, HIDDEN, l_pad, HIDDEN)  # decoder layer 1
    w4, b4 = lin(ks[6], ks[7], HIDDEN, D_IN, HIDDEN, D_PAD)        # decoder layer 2
    return (w1, b1, w2, b2, w3, b3, w4, b4)


def _reference_forward(x_nchw, params, latent_dim):
    """Pure-JAX reference with identical semantics (bf16 x/weights, f32 accum)."""
    w1, b1, w2, b2, w3, b3, w4, b4 = params
    B = x_nchw.shape[0]
    x = jnp.pad(x_nchw.reshape(B, D_IN).astype(ACT_DTYPE),
                ((0, 0), (0, D_PAD - D_IN)))

    def mm(a, w):
        return jnp.dot(a.astype(w.dtype), w, preferred_element_type=jnp.float32)

    h1 = jnp.maximum(mm(x, w1) + b1, 0.0)
    latent = mm(h1, w2) + b2
    h2 = jnp.maximum(mm(latent, w3) + b3, 0.0)
    recon = jnp.tanh(mm(h2, w4) + b4)
    return latent[:, :latent_dim], recon[:, :D_IN].reshape(B, 1, 28, 28)


if __name__ == "__main__":
    key = jax.random.PRNGKey(0)
    k_x, k_p = jax.random.split(key)

    latent_dim = 32
    batch = 2   # NOTE: perf tuning should be done at realistic batch (>=256)
    x = jax.random.normal(k_x, (batch, 1, 28, 28), jnp.float32)
    params = init_params(k_p, latent_dim)

    latent, reconstruction = generator_forward(x, params, latent_dim)
    jax.block_until_ready((latent, reconstruction))

    lat_ref, rec_ref = _reference_forward(x, params, latent_dim)
    assert latent.shape == (batch, latent_dim)
    assert reconstruction.shape == (batch, 1, 28, 28)
    assert jnp.allclose(latent, lat_ref, atol=2e-2, rtol=2e-2)
    assert jnp.allclose(reconstruction, rec_ref, atol=2e-2, rtol=2e-2)

    print("KERNEL_OK")
</pallas_src>

<mosaic_0001>
module attributes {stable_mosaic.version = 11 : i64} {
  func.func @_generator_kernel(%arg0: i32, %arg1: memref<16x896xbf16, #tpu.memory_space<vmem>>, %arg2: memref<896x512xbf16, #tpu.memory_space<vmem>>, %arg3: memref<1x512xf32, #tpu.memory_space<vmem>>, %arg4: memref<512x128xbf16, #tpu.memory_space<vmem>>, %arg5: memref<1x128xf32, #tpu.memory_space<vmem>>, %arg6: memref<128x512xbf16, #tpu.memory_space<vmem>>, %arg7: memref<1x512xf32, #tpu.memory_space<vmem>>, %arg8: memref<512x896xbf16, #tpu.memory_space<vmem>>, %arg9: memref<1x896xf32, #tpu.memory_space<vmem>>, %arg10: memref<16x128xf32, #tpu.memory_space<vmem>>, %arg11: memref<16x896xbf16, #tpu.memory_space<vmem>>) attributes {dimension_semantics = [#tpu.dimension_semantics<parallel>], iteration_bounds = array<i64: 1>, scalar_prefetch = 0 : i64, scratch_operands = 0 : i64, tpu.core_type = #tpu.core_type<tc>, window_params = [{transform_indices = @transform_0, window_bounds = array<i64: 16, 896>}, {pipeline_mode = #tpu.pipeline_mode<synchronous>, transform_indices = @transform_1, window_bounds = array<i64: 896, 512>}, {pipeline_mode = #tpu.pipeline_mode<synchronous>, transform_indices = @transform_2, window_bounds = array<i64: 1, 512>}, {pipeline_mode = #tpu.pipeline_mode<synchronous>, transform_indices = @transform_3, window_bounds = array<i64: 512, 128>}, {pipeline_mode = #tpu.pipeline_mode<synchronous>, transform_indices = @transform_4, window_bounds = array<i64: 1, 128>}, {pipeline_mode = #tpu.pipeline_mode<synchronous>, transform_indices = @transform_5, window_bounds = array<i64: 128, 512>}, {pipeline_mode = #tpu.pipeline_mode<synchronous>, transform_indices = @transform_6, window_bounds = array<i64: 1, 512>}, {pipeline_mode = #tpu.pipeline_mode<synchronous>, transform_indices = @transform_7, window_bounds = array<i64: 512, 896>}, {pipeline_mode = #tpu.pipeline_mode<synchronous>, transform_indices = @transform_8, window_bounds = array<i64: 1, 896>}, {transform_indices = @transform_9, window_bounds = array<i64: 16, 128>}, {transform_indices = @transform_10, window_bounds = array<i64: 16, 896>}]} {
    %c0 = arith.constant 0 : index
    %c0_0 = arith.constant 0 : index
    %0 = vector.load %arg1[%c0, %c0_0] : memref<16x896xbf16, #tpu.memory_space<vmem>>, vector<16x896xbf16>
    %c0_1 = arith.constant 0 : index
    %c0_2 = arith.constant 0 : index
    %1 = vector.load %arg2[%c0_1, %c0_2] : memref<896x512xbf16, #tpu.memory_space<vmem>>, vector<896x512xbf16>
    %cst = arith.constant dense<0.000000e+00> : vector<16x512xf32>
    %2 = tpu.matmul %0, %1, %cst {dimension_numbers = #tpu.dot_dimension_numbers<[1], [0], [0], [1], [0, 0, 1, 1], [], []>} : vector<16x896xbf16>, vector<896x512xbf16>, vector<16x512xf32> -> vector<16x512xf32>
    %c0_3 = arith.constant 0 : index
    %c0_4 = arith.constant 0 : index
    %3 = vector.load %arg3[%c0_3, %c0_4] : memref<1x512xf32, #tpu.memory_space<vmem>>, vector<1x512xf32>
    %4 = vector.broadcast %3 : vector<1x512xf32> to vector<16x512xf32>
    %5 = arith.addf %2, %4 : vector<16x512xf32>
    %cst_5 = arith.constant 0.000000e+00 : f32
    %6 = vector.broadcast %cst_5 : f32 to vector<16x512xf32>
    %7 = arith.maximumf %5, %6 : vector<16x512xf32>
    %8 = arith.truncf %7 : vector<16x512xf32> to vector<16x512xbf16>
    %c0_6 = arith.constant 0 : index
    %c0_7 = arith.constant 0 : index
    %9 = vector.load %arg4[%c0_6, %c0_7] : memref<512x128xbf16, #tpu.memory_space<vmem>>, vector<512x128xbf16>
    %cst_8 = arith.constant dense<0.000000e+00> : vector<16x128xf32>
    %10 = tpu.matmul %8, %9, %cst_8 {dimension_numbers = #tpu.dot_dimension_numbers<[1], [0], [0], [1], [0, 0, 1, 1], [], []>} : vector<16x512xbf16>, vector<512x128xbf16>, vector<16x128xf32> -> vector<16x128xf32>
    %c0_9 = arith.constant 0 : index
    %c0_10 = arith.constant 0 : index
    %11 = vector.load %arg5[%c0_9, %c0_10] : memref<1x128xf32, #tpu.memory_space<vmem>>, vector<1x128xf32>
    %12 = vector.broadcast %11 : vector<1x128xf32> to vector<16x128xf32>
    %13 = arith.addf %10, %12 : vector<16x128xf32>
    %c0_11 = arith.constant 0 : index
    %c0_12 = arith.constant 0 : index
    %14 = vector.load %arg10[%c0_11, %c0_12] : memref<16x128xf32, #tpu.memory_space<vmem>>, vector<16x128xf32>
    tpu.vector_store %arg10[%c0_11, %c0_12], %13 {strides = array<i32>} : memref<16x128xf32, #tpu.memory_space<vmem>>, vector<16x128xf32>,
    %15 = arith.truncf %13 : vector<16x128xf32> to vector<16x128xbf16>
    %c0_13 = arith.constant 0 : index
    %c0_14 = arith.constant 0 : index
    %16 = vector.load %arg6[%c0_13, %c0_14] : memref<128x512xbf16, #tpu.memory_space<vmem>>, vector<128x512xbf16>
    %cst_15 = arith.constant dense<0.000000e+00> : vector<16x512xf32>
    %17 = tpu.matmul %15, %16, %cst_15 {dimension_numbers = #tpu.dot_dimension_numbers<[1], [0], [0], [1], [0, 0, 1, 1], [], []>} : vector<16x128xbf16>, vector<128x512xbf16>, vector<16x512xf32> -> vector<16x512xf32>
    %c0_16 = arith.constant 0 : index
    %c0_17 = arith.constant 0 : index
    %18 = vector.load %arg7[%c0_16, %c0_17] : memref<1x512xf32, #tpu.memory_space<vmem>>, vector<1x512xf32>
    %19 = vector.broadcast %18 : vector<1x512xf32> to vector<16x512xf32>
    %20 = arith.addf %17, %19 : vector<16x512xf32>
    %cst_18 = arith.constant 0.000000e+00 : f32
    %21 = vector.broadcast %cst_18 : f32 to vector<16x512xf32>
    %22 = arith.maximumf %20, %21 : vector<16x512xf32>
    %23 = arith.truncf %22 : vector<16x512xf32> to vector<16x512xbf16>
    %c0_19 = arith.constant 0 : index
    %c0_20 = arith.constant 0 : index
    %24 = vector.load %arg8[%c0_19, %c0_20] : memref<512x896xbf16, #tpu.memory_space<vmem>>, vector<512x896xbf16>
    %cst_21 = arith.constant dense<0.000000e+00> : vector<16x896xf32>
    %25 = tpu.matmul %23, %24, %cst_21 {dimension_numbers = #tpu.dot_dimension_numbers<[1], [0], [0], [1], [0, 0, 1, 1], [], []>} : vector<16x512xbf16>, vector<512x896xbf16>, vector<16x896xf32> -> vector<16x896xf32>
    %c0_22 = arith.constant 0 : index
    %c0_23 = arith.constant 0 : index
    %26 = vector.load %arg9[%c0_22, %c0_23] : memref<1x896xf32, #tpu.memory_space<vmem>>, vector<1x896xf32>
    %27 = vector.broadcast %26 : vector<1x896xf32> to vector<16x896xf32>
    %28 = arith.addf %25, %27 : vector<16x896xf32>
    %29 = math.tanh %28 : vector<16x896xf32>
    %30 = arith.truncf %29 : vector<16x896xf32> to vector<16x896xbf16>
    %c0_24 = arith.constant 0 : index
    %c0_25 = arith.constant 0 : index
    %31 = vector.load %arg11[%c0_24, %c0_25] : memref<16x896xbf16, #tpu.memory_space<vmem>>, vector<16x896xbf16>
    tpu.vector_store %arg11[%c0_24, %c0_25], %30 {strides = array<i32>} : memref<16x896xbf16, #tpu.memory_space<vmem>>, vector<16x896xbf16>,
    return
  }
  func.func @transform_0(%arg0: i32) -> (i32, i32) {
    %c0_i32 = arith.constant 0 : i32
    %c0_i32_0 = arith.constant 0 : i32
    return %arg0, %c0_i32 : i32, i32
  }
  func.func @transform_1(%arg0: i32) -> (i32, i32) {
    %c0_i32 = arith.constant 0 : i32
    %c0_i32_0 = arith.constant 0 : i32
    %c0_i32_1 = arith.constant 0 : i32
    return %c0_i32, %c0_i32_0 : i32, i32
  }
  func.func @transform_2(%arg0: i32) -> (i32, i32) {
    %c0_i32 = arith.constant 0 : i32
    %c0_i32_0 = arith.constant 0 : i32
    %c0_i32_1 = arith.constant 0 : i32
    return %c0_i32, %c0_i32_0 : i32, i32
  }
  func.func @transform_3(%arg0: i32) -> (i32, i32) {
    %c0_i32 = arith.constant 0 : i32
    %c0_i32_0 = arith.constant 0 : i32
    %c0_i32_1 = arith.constant 0 : i32
    return %c0_i32, %c0_i32_0 : i32, i32
  }
  func.func @transform_4(%arg0: i32) -> (i32, i32) {
    %c0_i32 = arith.constant 0 : i32
    %c0_i32_0 = arith.constant 0 : i32
    %c0_i32_1 = arith.constant 0 : i32
    return %c0_i32, %c0_i32_0 : i32, i32
  }
  func.func @transform_5(%arg0: i32) -> (i32, i32) {
    %c0_i32 = arith.constant 0 : i32
    %c0_i32_0 = arith.constant 0 : i32
    %c0_i32_1 = arith.constant 0 : i32
    return %c0_i32, %c0_i32_0 : i32, i32
  }
  func.func @transform_6(%arg0: i32) -> (i32, i32) {
    %c0_i32 = arith.constant 0 : i32
    %c0_i32_0 = arith.constant 0 : i32
    %c0_i32_1 = arith.constant 0 : i32
    return %c0_i32, %c0_i32_0 : i32, i32
  }
  func.func @transform_7(%arg0: i32) -> (i32, i32) {
    %c0_i32 = arith.constant 0 : i32
    %c0_i32_0 = arith.constant 0 : i32
    %c0_i32_1 = arith.constant 0 : i32
    return %c0_i32, %c0_i32_0 : i32, i32
  }
  func.func @transform_8(%arg0: i32) -> (i32, i32) {
    %c0_i32 = arith.constant 0 : i32
    %c0_i32_0 = arith.constant 0 : i32
    %c0_i32_1 = arith.constant 0 : i32
    return %c0_i32, %c0_i32_0 : i32, i32
  }
  func.func @transform_9(%arg0: i32) -> (i32, i32) {
    %c0_i32 = arith.constant 0 : i32
    %c0_i32_0 = arith.constant 0 : i32
    return %arg0, %c0_i32 : i32, i32
  }
  func.func @transform_10(%arg0: i32) -> (i32, i32) {
    %c0_i32 = arith.constant 0 : i32
    %c0_i32_0 = arith.constant 0 : i32
    return %arg0, %c0_i32 : i32, i32
  }
}

</mosaic_0001>

<llo_original>
// kernel: generator_forward.1
$region0: #{generator_forward.1}
  #allocation0 [shape = 'u32[]', space=smem, size = 0x4, offset = 0x4, fixed_abs, tag = 'smem constant byte address 0x4 - core index']
  #allocation1 [shape = 'u32[72,128]{1,0:T(1,128)}', space=vmem, size = 0x9000, scoped, tag = 'internal scratch']
  %s0 = inlined_call_operand.vmem [shape: bf16[16,896], index: 0, kind: input, shape index: {}]
  %s1 = inlined_call_operand.hbm [shape: bf16[896,512], index: 1, kind: input, shape index: {}]
  %s2 = inlined_call_operand.vmem [shape: f32[1,512], index: 2, kind: input, shape index: {}]
  %s3 = inlined_call_operand.hbm [shape: bf16[512,128], index: 3, kind: input, shape index: {}]
  %s4 = inlined_call_operand.vmem [shape: f32[1,128], index: 4, kind: input, shape index: {}]
  %s5 = inlined_call_operand.hbm [shape: bf16[128,512], index: 5, kind: input, shape index: {}]
  %s6 = inlined_call_operand.vmem [shape: f32[1,512], index: 6, kind: input, shape index: {}]
  %s7 = inlined_call_operand.hbm [shape: bf16[512,896], index: 7, kind: input, shape index: {}]
  %s8 = inlined_call_operand.vmem [shape: f32[1,896], index: 8, kind: input, shape index: {}]
  %s9 = inlined_call_operand.vmem [shape: f32[16,128], index: 9, kind: output, shape index: {0}]
  %s10 = inlined_call_operand.vmem [shape: bf16[16,896], index: 10, kind: output, shape index: {1}]
  %11 = xla_tuple %s9, %s10
  %s12 = sld [smem:[#allocation0]]
  $region70: #{generator_forward.1} parent=0
    _
  %s14 = ssub.s32 1, %s12
  %s15 = scalar_select 0, %s14, %s12
  $region1: #{generator_forward.1} parent=0
    #allocation2 [shape = 'u8[917504]{0}', space=vmem, size = 0xe0000, scoped, tag = 'input window, operand 1, single buffered']
    #allocation3 [shape = 's32[1]{0}', space=sflag, size = 0x4, scoped, tag = 'scoped memory for generator_forward.1']
    #allocation4 [shape = 'u8[131072]{0}', space=vmem, size = 0x20000, scoped, tag = 'input window, operand 3, single buffered']
    #allocation5 [shape = 's32[1]{0}', space=sflag, size = 0x4, scoped, tag = 'scoped memory for generator_forward.1']
    #allocation6 [shape = 'u8[131072]{0}', space=vmem, size = 0x20000, scoped, tag = 'input window, operand 5, single buffered']
    #allocation7 [shape = 'u8[917504]{0}', space=vmem, size = 0xe0000, scoped, tag = 'input window, operand 7, single buffered']
    #allocation8 [shape = 's32[1]{0}', space=sflag, size = 0x4, scoped, tag = 'scoped memory for generator_forward.1']
    %16 = vsyncpa [#allocation3], 0
    %17 = vsyncpa [#allocation5], 0
    %18 = vsyncpa [#allocation8], 0
    // Predicated region
    $region2: #{generator_forward.1} parent=1 // pred_check
      _
    $region3: #{generator_forward.1} parent=1 // pred_check_branch
      %20 = sbr.rel (0) target = $region5
    $region4: #{generator_forward.1} parent=1 // pred_region
      _
    $region5: #{generator_forward.1} parent=1 // pred_fallthru
      _
    // Predicated region
    $region6: #{generator_forward.1} parent=1 // pred_check
      _
    $region7: #{generator_forward.1} parent=1 // pred_check_branch
      %22 = sbr.rel (0) target = $region9
    $region8: #{generator_forward.1} parent=1 // pred_region
      %24 = vsyncadd [#allocation3], 0
      %s25 = sshll.u32 %s1, 4
      %s26 = int_to_ptr.hbm [resolvable:$true] %s25
      %s27 = sshll.u32 [#allocation2], 4
      %s28 = int_to_ptr.vmem [resolvable:$true] %s27
      %33 = dma.hbm_to_vmem [thread:$0]  %s26, 28672, %s28, [#allocation3], 256, 256, 16
    $region9: #{generator_forward.1} parent=1 // pred_fallthru
      _
    // Predicated region
    $region10: #{generator_forward.1} parent=1 // pred_check
      _
    $region11: #{generator_forward.1} parent=1 // pred_check_branch
      %35 = sbr.rel (0) target = $region13
    $region12: #{generator_forward.1} parent=1 // pred_region
      _
    $region13: #{generator_forward.1} parent=1 // pred_fallthru
      _
    // Predicated region
    $region14: #{generator_forward.1} parent=1 // pred_check
      _
    $region15: #{generator_forward.1} parent=1 // pred_check_branch
      %37 = sbr.rel (0) target = $region17
    $region16: #{generator_forward.1} parent=1 // pred_region
      %39 = vsyncadd [#allocation5], 0
      %s40 = sshll.u32 %s3, 4
      %s41 = int_to_ptr.hbm [resolvable:$true] %s40
      %s42 = sshll.u32 [#allocation4], 4
      %s43 = int_to_ptr.vmem [resolvable:$true] %s42
      %48 = dma.hbm_to_vmem [thread:$0]  %s41, 4096, %s43, [#allocation5], 64, 64, 4
    $region17: #{generator_forward.1} parent=1 // pred_fallthru
      _
    // Predicated region
    $region18: #{generator_forward.1} parent=1 // pred_check
      _
    $region19: #{generator_forward.1} parent=1 // pred_check_branch
      %50 = sbr.rel (0) target = $region21
    $region20: #{generator_forward.1} parent=1 // pred_region
      _
    $region21: #{generator_forward.1} parent=1 // pred_fallthru
      _
    // Predicated region
    $region22: #{generator_forward.1} parent=1 // pred_check
      _
    $region23: #{generator_forward.1} parent=1 // pred_check_branch
      %52 = sbr.rel (0) target = $region25
    $region24: #{generator_forward.1} parent=1 // pred_region
      %54 = vsyncadd [#allocation5], 0
      %s55 = sshll.u32 %s5, 4
      %s56 = int_to_ptr.hbm [resolvable:$true] %s55
      %s57 = sshll.u32 [#allocation6], 4
      %s58 = int_to_ptr.vmem [resolvable:$true] %s57
      %63 = dma.hbm_to_vmem [thread:$0]  %s56, 4096, %s58, [#allocation5], 256, 256, 16
    $region25: #{generator_forward.1} parent=1 // pred_fallthru
      _
    // Predicated region
    $region26: #{generator_forward.1} parent=1 // pred_check
      _
    $region27: #{generator_forward.1} parent=1 // pred_check_branch
      %65 = sbr.rel (0) target = $region29
    $region28: #{generator_forward.1} parent=1 // pred_region
      _
    $region29: #{generator_forward.1} parent=1 // pred_fallthru
      _
    // Predicated region
    $region30: #{generator_forward.1} parent=1 // pred_check
      _
    $region31: #{generator_forward.1} parent=1 // pred_check_branch
      %67 = sbr.rel (0) target = $region33
    $region32: #{generator_forward.1} parent=1 // pred_region
      %69 = vsyncadd [#allocation8], 0
      %s70 = sshll.u32 %s7, 4
      %s71 = int_to_ptr.hbm [resolvable:$true] %s70
      %s72 = sshll.u32 [#allocation7], 4
      %s73 = int_to_ptr.vmem [resolvable:$true] %s72
      %78 = dma.hbm_to_vmem [thread:$0]  %s71, 28672, %s73, [#allocation8], 448, 448, 28
    $region33: #{generator_forward.1} parent=1 // pred_fallthru
      _
    // Predicated region
    $region34: #{generator_forward.1} parent=1 // pred_check
      _
    $region35: #{generator_forward.1} parent=1 // pred_check_branch
      %80 = sbr.rel (0) target = $region37
    $region36: #{generator_forward.1} parent=1 // pred_region
      _
    $region37: #{generator_forward.1} parent=1 // pred_fallthru
      _
    // Predicated region
    $region38: #{generator_forward.1} parent=1 // pred_check
      _
    $region39: #{generator_forward.1} parent=1 // pred_check_branch
      %82 = sbr.rel (0) target = $region41
    $region40: #{generator_forward.1} parent=1 // pred_region
      %84 = dma.done [#allocation3], 28672
    $region41: #{generator_forward.1} parent=1 // pred_fallthru
      _
    // Predicated region
    $region42: #{generator_forward.1} parent=1 // pred_check
      _
    $region43: #{generator_forward.1} parent=1 // pred_check_branch
      %86 = sbr.rel (0) target = $region45
    $region44: #{generator_forward.1} parent=1 // pred_region
      %88 = dma.done [#allocation5], 4096
    $region45: #{generator_forward.1} parent=1 // pred_fallthru
      _
    // Predicated region
    $region46: #{generator_forward.1} parent=1 // pred_check
      _
    $region47: #{generator_forward.1} parent=1 // pred_check_branch
      %90 = sbr.rel (0) target = $region49
    $region48: #{generator_forward.1} parent=1 // pred_region
      %92 = dma.done [#allocation5], 4096
    $region49: #{generator_forward.1} parent=1 // pred_fallthru
      _
    // Predicated region
    $region50: #{generator_forward.1} parent=1 // pred_check
      _
    $region51: #{generator_forward.1} parent=1 // pred_check_branch
      %94 = sbr.rel (0) target = $region53
    $region52: #{generator_forward.1} parent=1 // pred_region
      %96 = dma.done [#allocation8], 28672
    $region53: #{generator_forward.1} parent=1 // pred_fallthru
      _
    %v97 = vld [vmem:[%s0] sm:$0xff]
    %v98 = vld [vmem:[%s0 + $0x8] sm:$0xff]
    %v99 = vld [vmem:[%s0 + $0x10] sm:$0xff]
    %v100 = vld [vmem:[%s0 + $0x18] sm:$0xf]
    %v101 = vld [vmem:[%s0 + $0x1c] sm:$0xff]
    %v102 = vld [vmem:[%s0 + $0x24] sm:$0xff]
    %v103 = vld [vmem:[%s0 + $0x2c] sm:$0xff]
    %v104 = vld [vmem:[%s0 + $0x34] sm:$0xf]
    %v105 = vld [vmem:[#allocation2] sm:$0xff]
    %v106 = vld [vmem:[#allocation2 + $0x8] sm:$0xff]
    %v107 = vld [vmem:[#allocation2 + $0x10] sm:$0xff]
    %v108 = vld [vmem:[#allocation2 + $0x18] sm:$0xff]
    %v109 = vld [vmem:[#allocation2 + $0x20] sm:$0xff]
    %v110 = vld [vmem:[#allocation2 + $0x28] sm:$0xff]
    %v111 = vld [vmem:[#allocation2 + $0x30] sm:$0xff]
    %v112 = vld [vmem:[#allocation2 + $0x38] sm:$0xff]
    %v113 = vld [vmem:[#allocation2 + $0x40] sm:$0xff]
    %v114 = vld [vmem:[#allocation2 + $0x48] sm:$0xff]
    %v115 = vld [vmem:[#allocation2 + $0x50] sm:$0xff]
    %v116 = vld [vmem:[#allocation2 + $0x58] sm:$0xff]
    %v117 = vld [vmem:[#allocation2 + $0x60] sm:$0xff]
    %v118 = vld [vmem:[#allocation2 + $0x68] sm:$0xff]
    %v119 = vld [vmem:[#allocation2 + $0x70] sm:$0xff]
    %v120 = vld [vmem:[#allocation2 + $0x78] sm:$0xff]
    %v121 = vld [vmem:[#allocation2 + $0x80] sm:$0xff]
    %v122 = vld [vmem:[#allocation2 + $0x88] sm:$0xff]
    %v123 = vld [vmem:[#allocation2 + $0x90] sm:$0xff]
    %v124 = vld [vmem:[#allocation2 + $0x98] sm:$0xff]
    %v125 = vld [vmem:[#allocation2 + $0xa0] sm:$0xff]
    %v126 = vld [vmem:[#allocation2 + $0xa8] sm:$0xff]
    %v127 = vld [vmem:[#allocation2 + $0xb0] sm:$0xff]
    %v128 = vld [vmem:[#allocation2 + $0xb8] sm:$0xff]
    %v129 = vld [vmem:[#allocation2 + $0xc0] sm:$0xff]
    %v130 = vld [vmem:[#allocation2 + $0xc8] sm:$0xff]
    %v131 = vld [vmem:[#allocation2 + $0xd0] sm:$0xff]
    %v132 = vld [vmem:[#allocation2 + $0xd8] sm:$0xff]
    %v133 = vld [vmem:[#allocation2 + $0xe0] sm:$0xff]
    %v134 = vld [vmem:[#allocation2 + $0xe8] sm:$0xff]
    %v135 = vld [vmem:[#allocation2 + $0xf0] sm:$0xff]
    %v136 = vld [vmem:[#allocation2 + $0xf8] sm:$0xff]
    %v137 = vld [vmem:[#allocation2 + $0x100] sm:$0xff]
    %v138 = vld [vmem:[#allocation2 + $0x108] sm:$0xff]
    %v139 = vld [vmem:[#allocation2 + $0x110] sm:$0xff]
    %v140 = vld [vmem:[#allocation2 + $0x118] sm:$0xff]
    %v141 = vld [vmem:[#allocation2 + $0x120] sm:$0xff]
    %v142 = vld [vmem:[#allocation2 + $0x128] sm:$0xff]
    %v143 = vld [vmem:[#allocation2 + $0x130] sm:$0xff]
    %v144 = vld [vmem:[#allocation2 + $0x138] sm:$0xff]
    %v145 = vld [vmem:[#allocation2 + $0x140] sm:$0xff]
    %v146 = vld [vmem:[#allocation2 + $0x148] sm:$0xff]
    %v147 = vld [vmem:[#allocation2 + $0x150] sm:$0xff]
    %v148 = vld [vmem:[#allocation2 + $0x158] sm:$0xff]
    %v149 = vld [vmem:[#allocation2 + $0x160] sm:$0xff]
    %v150 = vld [vmem:[#allocation2 + $0x168] sm:$0xff]
    %v151 = vld [vmem:[#allocation2 + $0x170] sm:$0xff]
    %v152 = vld [vmem:[#allocation2 + $0x178] sm:$0xff]
    %v153 = vld [vmem:[#allocation2 + $0x180] sm:$0xff]
    %v154 = vld [vmem:[#allocation2 + $0x188] sm:$0xff]
    %v155 = vld [vmem:[#allocation2 + $0x190] sm:$0xff]
    %v156 = vld [vmem:[#allocation2 + $0x198] sm:$0xff]
    %v157 = vld [vmem:[#allocation2 + $0x1a0] sm:$0xff]
    %v158 = vld [vmem:[#allocation2 + $0x1a8] sm:$0xff]
    %v159 = vld [vmem:[#allocation2 + $0x1b0] sm:$0xff]
    %v160 = vld [vmem:[#allocation2 + $0x1b8] sm:$0xff]
    %v161 = vld [vmem:[#allocation2 + $0x1c0] sm:$0xff]
    %v162 = vld [vmem:[#allocation2 + $0x1c8] sm:$0xff]
    %v163 = vld [vmem:[#allocation2 + $0x1d0] sm:$0xff]
    %v164 = vld [vmem:[#allocation2 + $0x1d8] sm:$0xff]
    %v165 = vld [vmem:[#allocation2 + $0x1e0] sm:$0xff]
    %v166 = vld [vmem:[#allocation2 + $0x1e8] sm:$0xff]
    %v167 = vld [vmem:[#allocation2 + $0x1f0] sm:$0xff]
    %v168 = vld [vmem:[#allocation2 + $0x1f8] sm:$0xff]
    %v169 = vld [vmem:[#allocation2 + $0x200] sm:$0xff]
    %v170 = vld [vmem:[#allocation2 + $0x208] sm:$0xff]
    %v171 = vld [vmem:[#allocation2 + $0x210] sm:$0xff]
    %v172 = vld [vmem:[#allocation2 + $0x218] sm:$0xff]
    %v173 = vld [vmem:[#allocation2 + $0x220] sm:$0xff]
    %v174 = vld [vmem:[#allocation2 + $0x228] sm:$0xff]
    %v175 = vld [vmem:[#allocation2 + $0x230] sm:$0xff]
    %v176 = vld [vmem:[#allocation2 + $0x238] sm:$0xff]
    %v177 = vld [vmem:[#allocation2 + $0x240] sm:$0xff]
    %v178 = vld [vmem:[#allocation2 + $0x248] sm:$0xff]
    %v179 = vld [vmem:[#allocation2 + $0x250] sm:$0xff]
    %v180 = vld [vmem:[#allocation2 + $0x258] sm:$0xff]
    %v181 = vld [vmem:[#allocation2 + $0x260] sm:$0xff]
    %v182 = vld [vmem:[#allocation2 + $0x268] sm:$0xff]
    %v183 = vld [vmem:[#allocation2 + $0x270] sm:$0xff]
    %v184 = vld [vmem:[#allocation2 + $0x278] sm:$0xff]
    %v185 = vld [vmem:[#allocation2 + $0x280] sm:$0xff]
    %v186 = vld [vmem:[#allocation2 + $0x288] sm:$0xff]
    %v187 = vld [vmem:[#allocation2 + $0x290] sm:$0xff]
    %v188 = vld [vmem:[#allocation2 + $0x298] sm:$0xff]
    %v189 = vld [vmem:[#allocation2 + $0x2a0] sm:$0xff]
    %v190 = vld [vmem:[#allocation2 + $0x2a8] sm:$0xff]
    %v191 = vld [vmem:[#allocation2 + $0x2b0] sm:$0xff]
    %v192 = vld [vmem:[#allocation2 + $0x2b8] sm:$0xff]
    %v193 = vld [vmem:[#allocation2 + $0x2c0] sm:$0xff]
    %v194 = vld [vmem:[#allocation2 + $0x2c8] sm:$0xff]
    %v195 = vld [vmem:[#allocation2 + $0x2d0] sm:$0xff]
    %v196 = vld [vmem:[#allocation2 + $0x2d8] sm:$0xff]
    %v197 = vld [vmem:[#allocation2 + $0x2e0] sm:$0xff]
    %v198 = vld [vmem:[#allocation2 + $0x2e8] sm:$0xff]
    %v199 = vld [vmem:[#allocation2 + $0x2f0] sm:$0xff]
    %v200 = vld [vmem:[#allocation2 + $0x2f8] sm:$0xff]
    %v201 = vld [vmem:[#allocation2 + $0x300] sm:$0xff]
    %v202 = vld [vmem:[#allocation2 + $0x308] sm:$0xff]
    %v203 = vld [vmem:[#allocation2 + $0x310] sm:$0xff]
    %v204 = vld [vmem:[#allocation2 + $0x318] sm:$0xff]
    %v205 = vld [vmem:[#allocation2 + $0x320] sm:$0xff]
    %v206 = vld [vmem:[#allocation2 + $0x328] sm:$0xff]
    %v207 = vld [vmem:[#allocation2 + $0x330] sm:$0xff]
    %v208 = vld [vmem:[#allocation2 + $0x338] sm:$0xff]
    %v209 = vld [vmem:[#allocation2 + $0x340] sm:$0xff]
    %v210 = vld [vmem:[#allocation2 + $0x348] sm:$0xff]
    %v211 = vld [vmem:[#allocation2 + $0x350] sm:$0xff]
    %v212 = vld [vmem:[#allocation2 + $0x358] sm:$0xff]
    %v213 = vld [vmem:[#allocation2 + $0x360] sm:$0xff]
    %v214 = vld [vmem:[#allocation2 + $0x368] sm:$0xff]
    %v215 = vld [vmem:[#allocation2 + $0x370] sm:$0xff]
    %v216 = vld [vmem:[#allocation2 + $0x378] sm:$0xff]
    %v217 = vld [vmem:[#allocation2 + $0x380] sm:$0xff]
    %v218 = vld [vmem:[#allocation2 + $0x388] sm:$0xff]
    %v219 = vld [vmem:[#allocation2 + $0x390] sm:$0xff]
    %v220 = vld [vmem:[#allocation2 + $0x398] sm:$0xff]
    %v221 = vld [vmem:[#allocation2 + $0x3a0] sm:$0xff]
    %v222 = vld [vmem:[#allocation2 + $0x3a8] sm:$0xff]
    %v223 = vld [vmem:[#allocation2 + $0x3b0] sm:$0xff]
    %v224 = vld [vmem:[#allocation2 + $0x3b8] sm:$0xff]
    %v225 = vld [vmem:[#allocation2 + $0x3c0] sm:$0xff]
    %v226 = vld [vmem:[#allocation2 + $0x3c8] sm:$0xff]
    %v227 = vld [vmem:[#allocation2 + $0x3d0] sm:$0xff]
    %v228 = vld [vmem:[#allocation2 + $0x3d8] sm:$0xff]
    %v229 = vld [vmem:[#allocation2 + $0x3e0] sm:$0xff]
    %v230 = vld [vmem:[#allocation2 + $0x3e8] sm:$0xff]
    %v231 = vld [vmem:[#allocation2 + $0x3f0] sm:$0xff]
    %v232 = vld [vmem:[#allocation2 + $0x3f8] sm:$0xff]
    %v233 = vld [vmem:[#allocation2 + $0x400] sm:$0xff]
    %v234 = vld [vmem:[#allocation2 + $0x408] sm:$0xff]
    %v235 = vld [vmem:[#allocation2 + $0x410] sm:$0xff]
    %v236 = vld [vmem:[#allocation2 + $0x418] sm:$0xff]
    %v237 = vld [vmem:[#allocation2 + $0x420] sm:$0xff]
    %v238 = vld [vmem:[#allocation2 + $0x428] sm:$0xff]
    %v239 = vld [vmem:[#allocation2 + $0x430] sm:$0xff]
    %v240 = vld [vmem:[#allocation2 + $0x438] sm:$0xff]
    %v241 = vld [vmem:[#allocation2 + $0x440] sm:$0xff]
    %v242 = vld [vmem:[#allocation2 + $0x448] sm:$0xff]
    %v243 = vld [vmem:[#allocation2 + $0x450] sm:$0xff]
    %v244 = vld [vmem:[#allocation2 + $0x458] sm:$0xff]
    %v245 = vld [vmem:[#allocation2 + $0x460] sm:$0xff]
    %v246 = vld [vmem:[#allocation2 + $0x468] sm:$0xff]
    %v247 = vld [vmem:[#allocation2 + $0x470] sm:$0xff]
    %v248 = vld [vmem:[#allocation2 + $0x478] sm:$0xff]
    %v249 = vld [vmem:[#allocation2 + $0x480] sm:$0xff]
    %v250 = vld [vmem:[#allocation2 + $0x488] sm:$0xff]
    %v251 = vld [vmem:[#allocation2 + $0x490] sm:$0xff]
    %v252 = vld [vmem:[#allocation2 + $0x498] sm:$0xff]
    %v253 = vld [vmem:[#allocation2 + $0x4a0] sm:$0xff]
    %v254 = vld [vmem:[#allocation2 + $0x4a8] sm:$0xff]
    %v255 = vld [vmem:[#allocation2 + $0x4b0] sm:$0xff]
    %v256 = vld [vmem:[#allocation2 + $0x4b8] sm:$0xff]
    %v257 = vld [vmem:[#allocation2 + $0x4c0] sm:$0xff]
    %v258 = vld [vmem:[#allocation2 + $0x4c8] sm:$0xff]
    %v259 = vld [vmem:[#allocation2 + $0x4d0] sm:$0xff]
    %v260 = vld [vmem:[#allocation2 + $0x4d8] sm:$0xff]
    %v261 = vld [vmem:[#allocation2 + $0x4e0] sm:$0xff]
    %v262 = vld [vmem:[#allocation2 + $0x4e8] sm:$0xff]
    %v263 = vld [vmem:[#allocation2 + $0x4f0] sm:$0xff]
    %v264 = vld [vmem:[#allocation2 + $0x4f8] sm:$0xff]
    %v265 = vld [vmem:[#allocation2 + $0x500] sm:$0xff]
    %v266 = vld [vmem:[#allocation2 + $0x508] sm:$0xff]
    %v267 = vld [vmem:[#allocation2 + $0x510] sm:$0xff]
    %v268 = vld [vmem:[#allocation2 + $0x518] sm:$0xff]
    %v269 = vld [vmem:[#allocation2 + $0x520] sm:$0xff]
    %v270 = vld [vmem:[#allocation2 + $0x528] sm:$0xff]
    %v271 = vld [vmem:[#allocation2 + $0x530] sm:$0xff]
    %v272 = vld [vmem:[#allocation2 + $0x538] sm:$0xff]
    %v273 = vld [vmem:[#allocation2 + $0x540] sm:$0xff]
    %v274 = vld [vmem:[#allocation2 + $0x548] sm:$0xff]
    %v275 = vld [vmem:[#allocation2 + $0x550] sm:$0xff]
    %v276 = vld [vmem:[#allocation2 + $0x558] sm:$0xff]
    %v277 = vld [vmem:[#allocation2 + $0x560] sm:$0xff]
    %v278 = vld [vmem:[#allocation2 + $0x568] sm:$0xff]
    %v279 = vld [vmem:[#allocation2 + $0x570] sm:$0xff]
    %v280 = vld [vmem:[#allocation2 + $0x578] sm:$0xff]
    %v281 = vld [vmem:[#allocation2 + $0x580] sm:$0xff]
    %v282 = vld [vmem:[#allocation2 + $0x588] sm:$0xff]
    %v283 = vld [vmem:[#allocation2 + $0x590] sm:$0xff]
    %v284 = vld [vmem:[#allocation2 + $0x598] sm:$0xff]
    %v285 = vld [vmem:[#allocation2 + $0x5a0] sm:$0xff]
    %v286 = vld [vmem:[#allocation2 + $0x5a8] sm:$0xff]
    %v287 = vld [vmem:[#allocation2 + $0x5b0] sm:$0xff]
    %v288 = vld [vmem:[#allocation2 + $0x5b8] sm:$0xff]
    %v289 = vld [vmem:[#allocation2 + $0x5c0] sm:$0xff]
    %v290 = vld [vmem:[#allocation2 + $0x5c8] sm:$0xff]
    %v291 = vld [vmem:[#allocation2 + $0x5d0] sm:$0xff]
    %v292 = vld [vmem:[#allocation2 + $0x5d8] sm:$0xff]
    %v293 = vld [vmem:[#allocation2 + $0x5e0] sm:$0xff]
    %v294 = vld [vmem:[#allocation2 + $0x5e8] sm:$0xff]
    %v295 = vld [vmem:[#allocation2 + $0x5f0] sm:$0xff]
    %v296 = vld [vmem:[#allocation2 + $0x5f8] sm:$0xff]
    %v297 = vld [vmem:[#allocation2 + $0x600] sm:$0xff]
    %v298 = vld [vmem:[#allocation2 + $0x608] sm:$0xff]
    %v299 = vld [vmem:[#allocation2 + $0x610] sm:$0xff]
    %v300 = vld [vmem:[#allocation2 + $0x618] sm:$0xff]
    %v301 = vld [vmem:[#allocation2 + $0x620] sm:$0xff]
    %v302 = vld [vmem:[#allocation2 + $0x628] sm:$0xff]
    %v303 = vld [vmem:[#allocation2 + $0x630] sm:$0xff]
    %v304 = vld [vmem:[#allocation2 + $0x638] sm:$0xff]
    %v305 = vld [vmem:[#allocation2 + $0x640] sm:$0xff]
    %v306 = vld [vmem:[#allocation2 + $0x648] sm:$0xff]
    %v307 = vld [vmem:[#allocation2 + $0x650] sm:$0xff]
    %v308 = vld [vmem:[#allocation2 + $0x658] sm:$0xff]
    %v309 = vld [vmem:[#allocation2 + $0x660] sm:$0xff]
    %v310 = vld [vmem:[#allocation2 + $0x668] sm:$0xff]
    %v311 = vld [vmem:[#allocation2 + $0x670] sm:$0xff]
    %v312 = vld [vmem:[#allocation2 + $0x678] sm:$0xff]
    %v313 = vld [vmem:[#allocation2 + $0x680] sm:$0xff]
    %v314 = vld [vmem:[#allocation2 + $0x688] sm:$0xff]
    %v315 = vld [vmem:[#allocation2 + $0x690] sm:$0xff]
    %v316 = vld [vmem:[#allocation2 + $0x698] sm:$0xff]
    %v317 = vld [vmem:[#allocation2 + $0x6a0] sm:$0xff]
    %v318 = vld [vmem:[#allocation2 + $0x6a8] sm:$0xff]
    %v319 = vld [vmem:[#allocation2 + $0x6b0] sm:$0xff]
    %v320 = vld [vmem:[#allocation2 + $0x6b8] sm:$0xff]
    %v321 = vld [vmem:[#allocation2 + $0x6c0] sm:$0xff]
    %v322 = vld [vmem:[#allocation2 + $0x6c8] sm:$0xff]
    %v323 = vld [vmem:[#allocation2 + $0x6d0] sm:$0xff]
    %v324 = vld [vmem:[#allocation2 + $0x6d8] sm:$0xff]
    %v325 = vld [vmem:[#allocation2 + $0x6e0] sm:$0xff]
    %v326 = vld [vmem:[#allocation2 + $0x6e8] sm:$0xff]
    %v327 = vld [vmem:[#allocation2 + $0x6f0] sm:$0xff]
    %v328 = vld [vmem:[#allocation2 + $0x6f8] sm:$0xff]
    %v329 = vld [vmem:[%s2] sm:$0xf]
    %v331 = vperm.slane %v329, 0
    %v332 = vperm.slane %v329, 1
    %v333 = vperm.slane %v329, 2
    %v334 = vperm.slane %v329, 3
    %v347 = vunpack.c.l.b16 %v97
    %v348 = vunpack.c.h.b16 %v97
    %v349 = vunpack.c.l.b16 %v98
    %v350 = vunpack.c.h.b16 %v98
    %v351 = vunpack.c.l.b16 %v99
    %v352 = vunpack.c.h.b16 %v99
    %v353 = vunpack.c.l.b16 %v100
    %v354 = vunpack.c.l.b16 %v101
    %v355 = vunpack.c.h.b16 %v101
    %v356 = vunpack.c.l.b16 %v102
    %v357 = vunpack.c.h.b16 %v102
    %v358 = vunpack.c.l.b16 %v103
    %v359 = vunpack.c.h.b16 %v103
    %v360 = vunpack.c.l.b16 %v104
    %v361 = vpack.c.b16 %v354, %v347
    %v362 = vpack.c.b16 %v355, %v348
    %v363 = vpack.c.b16 %v356, %v349
    %v364 = vpack.c.b16 %v357, %v350
    %v365 = vpack.c.b16 %v358, %v351
    %v366 = vpack.c.b16 %v359, %v352
    %v367 = vpack.c.b16 %v360, %v353
    %v599 = vunpack.c.l.b16 %v105
    %v600 = vunpack.c.h.b16 %v105
    %v601 = vunpack.c.l.b16 %v106
    %v602 = vunpack.c.h.b16 %v106
    %v603 = vunpack.c.l.b16 %v107
    %v604 = vunpack.c.h.b16 %v107
    %v605 = vunpack.c.l.b16 %v108
    %v606 = vunpack.c.h.b16 %v108
    %v607 = vunpack.c.l.b16 %v109
    %v608 = vunpack.c.h.b16 %v109
    %v609 = vunpack.c.l.b16 %v110
    %v610 = vunpack.c.h.b16 %v110
    %v611 = vunpack.c.l.b16 %v111
    %v612 = vunpack.c.h.b16 %v111
    %v613 = vunpack.c.l.b16 %v112
    %v614 = vunpack.c.h.b16 %v112
    %v615 = vunpack.c.l.b16 %v113
    %v616 = vunpack.c.h.b16 %v113
    %v617 = vunpack.c.l.b16 %v114
    %v618 = vunpack.c.h.b16 %v114
    %v619 = vunpack.c.l.b16 %v115
    %v620 = vunpack.c.h.b16 %v115
    %v621 = vunpack.c.l.b16 %v116
    %v622 = vunpack.c.h.b16 %v116
    %v623 = vunpack.c.l.b16 %v117
    %v624 = vunpack.c.h.b16 %v117
    %v625 = vunpack.c.l.b16 %v118
    %v626 = vunpack.c.h.b16 %v118
    %v627 = vunpack.c.l.b16 %v119
    %v628 = vunpack.c.h.b16 %v119
    %v629 = vunpack.c.l.b16 %v120
    %v630 = vunpack.c.h.b16 %v120
    %v631 = vunpack.c.l.b16 %v121
    %v632 = vunpack.c.h.b16 %v121
    %v633 = vunpack.c.l.b16 %v122
    %v634 = vunpack.c.h.b16 %v122
    %v635 = vunpack.c.l.b16 %v123
    %v636 = vunpack.c.h.b16 %v123
    %v637 = vunpack.c.l.b16 %v124
    %v638 = vunpack.c.h.b16 %v124
    %v639 = vunpack.c.l.b16 %v125
    %v640 = vunpack.c.h.b16 %v125
    %v641 = vunpack.c.l.b16 %v126
    %v642 = vunpack.c.h.b16 %v126
    %v643 = vunpack.c.l.b16 %v127
    %v644 = vunpack.c.h.b16 %v127
    %v645 = vunpack.c.l.b16 %v128
    %v646 = vunpack.c.h.b16 %v128
    %v647 = vunpack.c.l.b16 %v129
    %v648 = vunpack.c.h.b16 %v129
    %v649 = vunpack.c.l.b16 %v130
    %v650 = vunpack.c.h.b16 %v130
    %v651 = vunpack.c.l.b16 %v131
    %v652 = vunpack.c.h.b16 %v131
    %v653 = vunpack.c.l.b16 %v132
    %v654 = vunpack.c.h.b16 %v132
    %v655 = vunpack.c.l.b16 %v133
    %v656 = vunpack.c.h.b16 %v133
    %v657 = vunpack.c.l.b16 %v134
    %v658 = vunpack.c.h.b16 %v134
    %v659 = vunpack.c.l.b16 %v135
    %v660 = vunpack.c.h.b16 %v135
    %v661 = vunpack.c.l.b16 %v136
    %v662 = vunpack.c.h.b16 %v136
    %v663 = vunpack.c.l.b16 %v137
    %v664 = vunpack.c.h.b16 %v137
    %v665 = vunpack.c.l.b16 %v138
    %v666 = vunpack.c.h.b16 %v138
    %v667 = vunpack.c.l.b16 %v139
    %v668 = vunpack.c.h.b16 %v139
    %v669 = vunpack.c.l.b16 %v140
    %v670 = vunpack.c.h.b16 %v140
    %v671 = vunpack.c.l.b16 %v141
    %v672 = vunpack.c.h.b16 %v141
    %v673 = vunpack.c.l.b16 %v142
    %v674 = vunpack.c.h.b16 %v142
    %v675 = vunpack.c.l.b16 %v143
    %v676 = vunpack.c.h.b16 %v143
    %v677 = vunpack.c.l.b16 %v144
    %v678 = vunpack.c.h.b16 %v144
    %v679 = vunpack.c.l.b16 %v145
    %v680 = vunpack.c.h.b16 %v145
    %v681 = vunpack.c.l.b16 %v146
    %v682 = vunpack.c.h.b16 %v146
    %v683 = vunpack.c.l.b16 %v147
    %v684 = vunpack.c.h.b16 %v147
    %v685 = vunpack.c.l.b16 %v148
    %v686 = vunpack.c.h.b16 %v148
    %v687 = vunpack.c.l.b16 %v149
    %v688 = vunpack.c.h.b16 %v149
    %v689 = vunpack.c.l.b16 %v150
    %v690 = vunpack.c.h.b16 %v150
    %v691 = vunpack.c.l.b16 %v151
    %v692 = vunpack.c.h.b16 %v151
    %v693 = vunpack.c.l.b16 %v152
    %v694 = vunpack.c.h.b16 %v152
    %v695 = vunpack.c.l.b16 %v153
    %v696 = vunpack.c.h.b16 %v153
    %v697 = vunpack.c.l.b16 %v154
    %v698 = vunpack.c.h.b16 %v154
    %v699 = vunpack.c.l.b16 %v155
    %v700 = vunpack.c.h.b16 %v155
    %v701 = vunpack.c.l.b16 %v156
    %v702 = vunpack.c.h.b16 %v156
    %v703 = vunpack.c.l.b16 %v157
    %v704 = vunpack.c.h.b16 %v157
    %v705 = vunpack.c.l.b16 %v158
    %v706 = vunpack.c.h.b16 %v158
    %v707 = vunpack.c.l.b16 %v159
    %v708 = vunpack.c.h.b16 %v159
    %v709 = vunpack.c.l.b16 %v160
    %v710 = vunpack.c.h.b16 %v160
    %v711 = vunpack.c.l.b16 %v161
    %v712 = vunpack.c.h.b16 %v161
    %v713 = vunpack.c.l.b16 %v162
    %v714 = vunpack.c.h.b16 %v162
    %v715 = vunpack.c.l.b16 %v163
    %v716 = vunpack.c.h.b16 %v163
    %v717 = vunpack.c.l.b16 %v164
    %v718 = vunpack.c.h.b16 %v164
    %v719 = vunpack.c.l.b16 %v165
    %v720 = vunpack.c.h.b16 %v165
    %v721 = vunpack.c.l.b16 %v166
    %v722 = vunpack.c.h.b16 %v166
    %v723 = vunpack.c.l.b16 %v167
    %v724 = vunpack.c.h.b16 %v167
    %v725 = vunpack.c.l.b16 %v168
    %v726 = vunpack.c.h.b16 %v168
    %v727 = vunpack.c.l.b16 %v169
    %v728 = vunpack.c.h.b16 %v169
    %v729 = vunpack.c.l.b16 %v170
    %v730 = vunpack.c.h.b16 %v170
    %v731 = vunpack.c.l.b16 %v171
    %v732 = vunpack.c.h.b16 %v171
    %v733 = vunpack.c.l.b16 %v172
    %v734 = vunpack.c.h.b16 %v172
    %v735 = vunpack.c.l.b16 %v173
    %v736 = vunpack.c.h.b16 %v173
    %v737 = vunpack.c.l.b16 %v174
    %v738 = vunpack.c.h.b16 %v174
    %v739 = vunpack.c.l.b16 %v175
    %v740 = vunpack.c.h.b16 %v175
    %v741 = vunpack.c.l.b16 %v176
    %v742 = vunpack.c.h.b16 %v176
    %v743 = vunpack.c.l.b16 %v177
    %v744 = vunpack.c.h.b16 %v177
    %v745 = vunpack.c.l.b16 %v178
    %v746 = vunpack.c.h.b16 %v178
    %v747 = vunpack.c.l.b16 %v179
    %v748 = vunpack.c.h.b16 %v179
    %v749 = vunpack.c.l.b16 %v180
    %v750 = vunpack.c.h.b16 %v180
    %v751 = vunpack.c.l.b16 %v181
    %v752 = vunpack.c.h.b16 %v181
    %v753 = vunpack.c.l.b16 %v182
    %v754 = vunpack.c.h.b16 %v182
    %v755 = vunpack.c.l.b16 %v183
    %v756 = vunpack.c.h.b16 %v183
    %v757 = vunpack.c.l.b16 %v184
    %v758 = vunpack.c.h.b16 %v184
    %v759 = vunpack.c.l.b16 %v185
    %v760 = vunpack.c.h.b16 %v185
    %v761 = vunpack.c.l.b16 %v186
    %v762 = vunpack.c.h.b16 %v186
    %v763 = vunpack.c.l.b16 %v187
    %v764 = vunpack.c.h.b16 %v187
    %v765 = vunpack.c.l.b16 %v188
    %v766 = vunpack.c.h.b16 %v188
    %v767 = vunpack.c.l.b16 %v189
    %v768 = vunpack.c.h.b16 %v189
    %v769 = vunpack.c.l.b16 %v190
    %v770 = vunpack.c.h.b16 %v190
    %v771 = vunpack.c.l.b16 %v191
    %v772 = vunpack.c.h.b16 %v191
    %v773 = vunpack.c.l.b16 %v192
    %v774 = vunpack.c.h.b16 %v192
    %v775 = vunpack.c.l.b16 %v193
    %v776 = vunpack.c.h.b16 %v193
    %v777 = vunpack.c.l.b16 %v194
    %v778 = vunpack.c.h.b16 %v194
    %v779 = vunpack.c.l.b16 %v195
    %v780 = vunpack.c.h.b16 %v195
    %v781 = vunpack.c.l.b16 %v196
    %v782 = vunpack.c.h.b16 %v196
    %v783 = vunpack.c.l.b16 %v197
    %v784 = vunpack.c.h.b16 %v197
    %v785 = vunpack.c.l.b16 %v198
    %v786 = vunpack.c.h.b16 %v198
    %v787 = vunpack.c.l.b16 %v199
    %v788 = vunpack.c.h.b16 %v199
    %v789 = vunpack.c.l.b16 %v200
    %v790 = vunpack.c.h.b16 %v200
    %v791 = vunpack.c.l.b16 %v201
    %v792 = vunpack.c.h.b16 %v201
    %v793 = vunpack.c.l.b16 %v202
    %v794 = vunpack.c.h.b16 %v202
    %v795 = vunpack.c.l.b16 %v203
    %v796 = vunpack.c.h.b16 %v203
    %v797 = vunpack.c.l.b16 %v204
    %v798 = vunpack.c.h.b16 %v204
    %v799 = vunpack.c.l.b16 %v205
    %v800 = vunpack.c.h.b16 %v205
    %v801 = vunpack.c.l.b16 %v206
    %v802 = vunpack.c.h.b16 %v206
    %v803 = vunpack.c.l.b16 %v207
    %v804 = vunpack.c.h.b16 %v207
    %v805 = vunpack.c.l.b16 %v208
    %v806 = vunpack.c.h.b16 %v208
    %v807 = vunpack.c.l.b16 %v209
    %v808 = vunpack.c.h.b16 %v209
    %v809 = vunpack.c.l.b16 %v210
    %v810 = vunpack.c.h.b16 %v210
    %v811 = vunpack.c.l.b16 %v211
    %v812 = vunpack.c.h.b16 %v211
    %v813 = vunpack.c.l.b16 %v212
    %v814 = vunpack.c.h.b16 %v212
    %v815 = vunpack.c.l.b16 %v213
    %v816 = vunpack.c.h.b16 %v213
    %v817 = vunpack.c.l.b16 %v214
    %v818 = vunpack.c.h.b16 %v214
    %v819 = vunpack.c.l.b16 %v215
    %v820 = vunpack.c.h.b16 %v215
    %v821 = vunpack.c.l.b16 %v216
    %v822 = vunpack.c.h.b16 %v216
    %v823 = vunpack.c.l.b16 %v217
    %v824 = vunpack.c.h.b16 %v217
    %v825 = vunpack.c.l.b16 %v218
    %v826 = vunpack.c.h.b16 %v218
    %v827 = vunpack.c.l.b16 %v219
    %v828 = vunpack.c.h.b16 %v219
    %v829 = vunpack.c.l.b16 %v220
    %v830 = vunpack.c.h.b16 %v220
    %v831 = vunpack.c.l.b16 %v221
    %v832 = vunpack.c.h.b16 %v221
    %v833 = vunpack.c.l.b16 %v222
    %v834 = vunpack.c.h.b16 %v222
    %v835 = vunpack.c.l.b16 %v223
    %v836 = vunpack.c.h.b16 %v223
    %v837 = vunpack.c.l.b16 %v224
    %v838 = vunpack.c.h.b16 %v224
    %v839 = vunpack.c.l.b16 %v225
    %v840 = vunpack.c.h.b16 %v225
    %v841 = vunpack.c.l.b16 %v226
    %v842 = vunpack.c.h.b16 %v226
    %v843 = vunpack.c.l.b16 %v227
    %v844 = vunpack.c.h.b16 %v227
    %v845 = vunpack.c.l.b16 %v228
    %v846 = vunpack.c.h.b16 %v228
    %v847 = vunpack.c.l.b16 %v229
    %v848 = vunpack.c.h.b16 %v229
    %v849 = vunpack.c.l.b16 %v230
    %v850 = vunpack.c.h.b16 %v230
    %v851 = vunpack.c.l.b16 %v231
    %v852 = vunpack.c.h.b16 %v231
    %v853 = vunpack.c.l.b16 %v232
    %v854 = vunpack.c.h.b16 %v232
    %v855 = vunpack.c.l.b16 %v233
    %v856 = vunpack.c.h.b16 %v233
    %v857 = vunpack.c.l.b16 %v234
    %v858 = vunpack.c.h.b16 %v234
    %v859 = vunpack.c.l.b16 %v235
    %v860 = vunpack.c.h.b16 %v235
    %v861 = vunpack.c.l.b16 %v236
    %v862 = vunpack.c.h.b16 %v236
    %v863 = vunpack.c.l.b16 %v237
    %v864 = vunpack.c.h.b16 %v237
    %v865 = vunpack.c.l.b16 %v238
    %v866 = vunpack.c.h.b16 %v238
    %v867 = vunpack.c.l.b16 %v239
    %v868 = vunpack.c.h.b16 %v239
    %v869 = vunpack.c.l.b16 %v240
    %v870 = vunpack.c.h.b16 %v240
    %v871 = vunpack.c.l.b16 %v241
    %v872 = vunpack.c.h.b16 %v241
    %v873 = vunpack.c.l.b16 %v242
    %v874 = vunpack.c.h.b16 %v242
    %v875 = vunpack.c.l.b16 %v243
    %v876 = vunpack.c.h.b16 %v243
    %v877 = vunpack.c.l.b16 %v244
    %v878 = vunpack.c.h.b16 %v244
    %v879 = vunpack.c.l.b16 %v245
    %v880 = vunpack.c.h.b16 %v245
    %v881 = vunpack.c.l.b16 %v246
    %v882 = vunpack.c.h.b16 %v246
    %v883 = vunpack.c.l.b16 %v247
    %v884 = vunpack.c.h.b16 %v247
    %v885 = vunpack.c.l.b16 %v248
    %v886 = vunpack.c.h.b16 %v248
    %v887 = vunpack.c.l.b16 %v249
    %v888 = vunpack.c.h.b16 %v249
    %v889 = vunpack.c.l.b16 %v250
    %v890 = vunpack.c.h.b16 %v250
    %v891 = vunpack.c.l.b16 %v251
    %v892 = vunpack.c.h.b16 %v251
    %v893 = vunpack.c.l.b16 %v252
    %v894 = vunpack.c.h.b16 %v252
    %v895 = vunpack.c.l.b16 %v253
    %v896 = vunpack.c.h.b16 %v253
    %v897 = vunpack.c.l.b16 %v254
    %v898 = vunpack.c.h.b16 %v254
    %v899 = vunpack.c.l.b16 %v255
    %v900 = vunpack.c.h.b16 %v255
    %v901 = vunpack.c.l.b16 %v256
    %v902 = vunpack.c.h.b16 %v256
    %v903 = vunpack.c.l.b16 %v257
    %v904 = vunpack.c.h.b16 %v257
    %v905 = vunpack.c.l.b16 %v258
    %v906 = vunpack.c.h.b16 %v258
    %v907 = vunpack.c.l.b16 %v259
    %v908 = vunpack.c.h.b16 %v259
    %v909 = vunpack.c.l.b16 %v260
    %v910 = vunpack.c.h.b16 %v260
    %v911 = vunpack.c.l.b16 %v261
    %v912 = vunpack.c.h.b16 %v261
    %v913 = vunpack.c.l.b16 %v262
    %v914 = vunpack.c.h.b16 %v262
    %v915 = vunpack.c.l.b16 %v263
    %v916 = vunpack.c.h.b16 %v263
    %v917 = vunpack.c.l.b16 %v264
    %v918 = vunpack.c.h.b16 %v264
    %v919 = vunpack.c.l.b16 %v265
    %v920 = vunpack.c.h.b16 %v265
    %v921 = vunpack.c.l.b16 %v266
    %v922 = vunpack.c.h.b16 %v266
    %v923 = vunpack.c.l.b16 %v267
    %v924 = vunpack.c.h.b16 %v267
    %v925 = vunpack.c.l.b16 %v268
    %v926 = vunpack.c.h.b16 %v268
    %v927 = vunpack.c.l.b16 %v269
    %v928 = vunpack.c.h.b16 %v269
    %v929 = vunpack.c.l.b16 %v270
    %v930 = vunpack.c.h.b16 %v270
    %v931 = vunpack.c.l.b16 %v271
    %v932 = vunpack.c.h.b16 %v271
    %v933 = vunpack.c.l.b16 %v272
    %v934 = vunpack.c.h.b16 %v272
    %v935 = vunpack.c.l.b16 %v273
    %v936 = vunpack.c.h.b16 %v273
    %v937 = vunpack.c.l.b16 %v274
    %v938 = vunpack.c.h.b16 %v274
    %v939 = vunpack.c.l.b16 %v275
    %v940 = vunpack.c.h.b16 %v275
    %v941 = vunpack.c.l.b16 %v276
    %v942 = vunpack.c.h.b16 %v276
    %v943 = vunpack.c.l.b16 %v277
    %v944 = vunpack.c.h.b16 %v277
    %v945 = vunpack.c.l.b16 %v278
    %v946 = vunpack.c.h.b16 %v278
    %v947 = vunpack.c.l.b16 %v279
    %v948 = vunpack.c.h.b16 %v279
    %v949 = vunpack.c.l.b16 %v280
    %v950 = vunpack.c.h.b16 %v280
    %v951 = vunpack.c.l.b16 %v281
    %v952 = vunpack.c.h.b16 %v281
    %v953 = vunpack.c.l.b16 %v282
    %v954 = vunpack.c.h.b16 %v282
    %v955 = vunpack.c.l.b16 %v283
    %v956 = vunpack.c.h.b16 %v283
    %v957 = vunpack.c.l.b16 %v284
    %v958 = vunpack.c.h.b16 %v284
    %v959 = vunpack.c.l.b16 %v285
    %v960 = vunpack.c.h.b16 %v285
    %v961 = vunpack.c.l.b16 %v286
    %v962 = vunpack.c.h.b16 %v286
    %v963 = vunpack.c.l.b16 %v287
    %v964 = vunpack.c.h.b16 %v287
    %v965 = vunpack.c.l.b16 %v288
    %v966 = vunpack.c.h.b16 %v288
    %v967 = vunpack.c.l.b16 %v289
    %v968 = vunpack.c.h.b16 %v289
    %v969 = vunpack.c.l.b16 %v290
    %v970 = vunpack.c.h.b16 %v290
    %v971 = vunpack.c.l.b16 %v291
    %v972 = vunpack.c.h.b16 %v291
    %v973 = vunpack.c.l.b16 %v292
    %v974 = vunpack.c.h.b16 %v292
    %v975 = vunpack.c.l.b16 %v293
    %v976 = vunpack.c.h.b16 %v293
    %v977 = vunpack.c.l.b16 %v294
    %v978 = vunpack.c.h.b16 %v294
    %v979 = vunpack.c.l.b16 %v295
    %v980 = vunpack.c.h.b16 %v295
    %v981 = vunpack.c.l.b16 %v296
    %v982 = vunpack.c.h.b16 %v296
    %v983 = vunpack.c.l.b16 %v297
    %v984 = vunpack.c.h.b16 %v297
    %v985 = vunpack.c.l.b16 %v298
    %v986 = vunpack.c.h.b16 %v298
    %v987 = vunpack.c.l.b16 %v299
    %v988 = vunpack.c.h.b16 %v299
    %v989 = vunpack.c.l.b16 %v300
    %v990 = vunpack.c.h.b16 %v300
    %v991 = vunpack.c.l.b16 %v301
    %v992 = vunpack.c.h.b16 %v301
    %v993 = vunpack.c.l.b16 %v302
    %v994 = vunpack.c.h.b16 %v302
    %v995 = vunpack.c.l.b16 %v303
    %v996 = vunpack.c.h.b16 %v303
    %v997 = vunpack.c.l.b16 %v304
    %v998 = vunpack.c.h.b16 %v304
    %v999 = vunpack.c.l.b16 %v305
    %v1000 = vunpack.c.h.b16 %v305
    %v1001 = vunpack.c.l.b16 %v306
    %v1002 = vunpack.c.h.b16 %v306
    %v1003 = vunpack.c.l.b16 %v307
    %v1004 = vunpack.c.h.b16 %v307
    %v1005 = vunpack.c.l.b16 %v308
    %v1006 = vunpack.c.h.b16 %v308
    %v1007 = vunpack.c.l.b16 %v309
    %v1008 = vunpack.c.h.b16 %v309
    %v1009 = vunpack.c.l.b16 %v310
    %v1010 = vunpack.c.h.b16 %v310
    %v1011 = vunpack.c.l.b16 %v311
    %v1012 = vunpack.c.h.b16 %v311
    %v1013 = vunpack.c.l.b16 %v312
    %v1014 = vunpack.c.h.b16 %v312
    %v1015 = vunpack.c.l.b16 %v313
    %v1016 = vunpack.c.h.b16 %v313
    %v1017 = vunpack.c.l.b16 %v314
    %v1018 = vunpack.c.h.b16 %v314
    %v1019 = vunpack.c.l.b16 %v315
    %v1020 = vunpack.c.h.b16 %v315
    %v1021 = vunpack.c.l.b16 %v316
    %v1022 = vunpack.c.h.b16 %v316
    %v1023 = vunpack.c.l.b16 %v317
    %v1024 = vunpack.c.h.b16 %v317
    %v1025 = vunpack.c.l.b16 %v318
    %v1026 = vunpack.c.h.b16 %v318
    %v1027 = vunpack.c.l.b16 %v319
    %v1028 = vunpack.c.h.b16 %v319
    %v1029 = vunpack.c.l.b16 %v320
    %v1030 = vunpack.c.h.b16 %v320
    %v1031 = vunpack.c.l.b16 %v321
    %v1032 = vunpack.c.h.b16 %v321
    %v1033 = vunpack.c.l.b16 %v322
    %v1034 = vunpack.c.h.b16 %v322
    %v1035 = vunpack.c.l.b16 %v323
    %v1036 = vunpack.c.h.b16 %v323
    %v1037 = vunpack.c.l.b16 %v324
    %v1038 = vunpack.c.h.b16 %v324
    %v1039 = vunpack.c.l.b16 %v325
    %v1040 = vunpack.c.h.b16 %v325
    %v1041 = vunpack.c.l.b16 %v326
    %v1042 = vunpack.c.h.b16 %v326
    %v1043 = vunpack.c.l.b16 %v327
    %v1044 = vunpack.c.h.b16 %v327
    %v1045 = vunpack.c.l.b16 %v328
    %v1046 = vunpack.c.h.b16 %v328
    %v1047 = vpack.c.b16 %v603, %v599
    %v1048 = vpack.c.b16 %v604, %v600
    %v1049 = vpack.c.b16 %v605, %v601
    %v1050 = vpack.c.b16 %v606, %v602
    %v1051 = vpack.c.b16 %v611, %v607
    %v1052 = vpack.c.b16 %v612, %v608
    %v1053 = vpack.c.b16 %v613, %v609
    %v1054 = vpack.c.b16 %v614, %v610
    %v1055 = vpack.c.b16 %v619, %v615
    %v1056 = vpack.c.b16 %v620, %v616
    %v1057 = vpack.c.b16 %v621, %v617
    %v1058 = vpack.c.b16 %v622, %v618
    %v1059 = vpack.c.b16 %v627, %v623
    %v1060 = vpack.c.b16 %v628, %v624
    %v1061 = vpack.c.b16 %v629, %v625
    %v1062 = vpack.c.b16 %v630, %v626
    %v1063 = vpack.c.b16 %v635, %v631
    %v1064 = vpack.c.b16 %v636, %v632
    %v1065 = vpack.c.b16 %v637, %v633
    %v1066 = vpack.c.b16 %v638, %v634
    %v1067 = vpack.c.b16 %v643, %v639
    %v1068 = vpack.c.b16 %v644, %v640
    %v1069 = vpack.c.b16 %v645, %v641
    %v1070 = vpack.c.b16 %v646, %v642
    %v1071 = vpack.c.b16 %v651, %v647
    %v1072 = vpack.c.b16 %v652, %v648
    %v1073 = vpack.c.b16 %v653, %v649
    %v1074 = vpack.c.b16 %v654, %v650
    %v1075 = vpack.c.b16 %v659, %v655
    %v1076 = vpack.c.b16 %v660, %v656
    %v1077 = vpack.c.b16 %v661, %v657
    %v1078 = vpack.c.b16 %v662, %v658
    %v1079 = vpack.c.b16 %v667, %v663
    %v1080 = vpack.c.b16 %v668, %v664
    %v1081 = vpack.c.b16 %v669, %v665
    %v1082 = vpack.c.b16 %v670, %v666
    %v1083 = vpack.c.b16 %v675, %v671
    %v1084 = vpack.c.b16 %v676, %v672
    %v1085 = vpack.c.b16 %v677, %v673
    %v1086 = vpack.c.b16 %v678, %v674
    %v1087 = vpack.c.b16 %v683, %v679
    %v1088 = vpack.c.b16 %v684, %v680
    %v1089 = vpack.c.b16 %v685, %v681
    %v1090 = vpack.c.b16 %v686, %v682
    %v1091 = vpack.c.b16 %v691, %v687
    %v1092 = vpack.c.b16 %v692, %v688
    %v1093 = vpack.c.b16 %v693, %v689
    %v1094 = vpack.c.b16 %v694, %v690
    %v1095 = vpack.c.b16 %v699, %v695
    %v1096 = vpack.c.b16 %v700, %v696
    %v1097 = vpack.c.b16 %v701, %v697
    %v1098 = vpack.c.b16 %v702, %v698
    %v1099 = vpack.c.b16 %v707, %v703
    %v1100 = vpack.c.b16 %v708, %v704
    %v1101 = vpack.c.b16 %v709, %v705
    %v1102 = vpack.c.b16 %v710, %v706
    %v1103 = vpack.c.b16 %v715, %v711
    %v1104 = vpack.c.b16 %v716, %v712
    %v1105 = vpack.c.b16 %v717, %v713
    %v1106 = vpack.c.b16 %v718, %v714
    %v1107 = vpack.c.b16 %v723, %v719
    %v1108 = vpack.c.b16 %v724, %v720
    %v1109 = vpack.c.b16 %v725, %v721
    %v1110 = vpack.c.b16 %v726, %v722
    %v1111 = vpack.c.b16 %v731, %v727
    %v1112 = vpack.c.b16 %v732, %v728
    %v1113 = vpack.c.b16 %v733, %v729
    %v1114 = vpack.c.b16 %v734, %v730
    %v1115 = vpack.c.b16 %v739, %v735
    %v1116 = vpack.c.b16 %v740, %v736
    %v1117 = vpack.c.b16 %v741, %v737
    %v1118 = vpack.c.b16 %v742, %v738
    %v1119 = vpack.c.b16 %v747, %v743
    %v1120 = vpack.c.b16 %v748, %v744
    %v1121 = vpack.c.b16 %v749, %v745
    %v1122 = vpack.c.b16 %v750, %v746
    %v1123 = vpack.c.b16 %v755, %v751
    %v1124 = vpack.c.b16 %v756, %v752
    %v1125 = vpack.c.b16 %v757, %v753
    %v1126 = vpack.c.b16 %v758, %v754
    %v1127 = vpack.c.b16 %v763, %v759
    %v1128 = vpack.c.b16 %v764, %v760
    %v1129 = vpack.c.b16 %v765, %v761
    %v1130 = vpack.c.b16 %v766, %v762
    %v1131 = vpack.c.b16 %v771, %v767
    %v1132 = vpack.c.b16 %v772, %v768
    %v1133 = vpack.c.b16 %v773, %v769
    %v1134 = vpack.c.b16 %v774, %v770
    %v1135 = vpack.c.b16 %v779, %v775
    %v1136 = vpack.c.b16 %v780, %v776
    %v1137 = vpack.c.b16 %v781, %v777
    %v1138 = vpack.c.b16 %v782, %v778
    %v1139 = vpack.c.b16 %v787, %v783
    %v1140 = vpack.c.b16 %v788, %v784
    %v1141 = vpack.c.b16 %v789, %v785
    %v1142 = vpack.c.b16 %v790, %v786
    %v1143 = vpack.c.b16 %v795, %v791
    %v1144 = vpack.c.b16 %v796, %v792
    %v1145 = vpack.c.b16 %v797, %v793
    %v1146 = vpack.c.b16 %v798, %v794
    %v1147 = vpack.c.b16 %v803, %v799
    %v1148 = vpack.c.b16 %v804, %v800
    %v1149 = vpack.c.b16 %v805, %v801
    %v1150 = vpack.c.b16 %v806, %v802
    %v1151 = vpack.c.b16 %v811, %v807
    %v1152 = vpack.c.b16 %v812, %v808
    %v1153 = vpack.c.b16 %v813, %v809
    %v1154 = vpack.c.b16 %v814, %v810
    %v1155 = vpack.c.b16 %v819, %v815
    %v1156 = vpack.c.b16 %v820, %v816
    %v1157 = vpack.c.b16 %v821, %v817
    %v1158 = vpack.c.b16 %v822, %v818
    %v1159 = vpack.c.b16 %v827, %v823
    %v1160 = vpack.c.b16 %v828, %v824
    %v1161 = vpack.c.b16 %v829, %v825
    %v1162 = vpack.c.b16 %v830, %v826
    %v1163 = vpack.c.b16 %v835, %v831
    %v1164 = vpack.c.b16 %v836, %v832
    %v1165 = vpack.c.b16 %v837, %v833
    %v1166 = vpack.c.b16 %v838, %v834
    %v1167 = vpack.c.b16 %v843, %v839
    %v1168 = vpack.c.b16 %v844, %v840
    %v1169 = vpack.c.b16 %v845, %v841
    %v1170 = vpack.c.b16 %v846, %v842
    %v1171 = vpack.c.b16 %v851, %v847
    %v1172 = vpack.c.b16 %v852, %v848
    %v1173 = vpack.c.b16 %v853, %v849
    %v1174 = vpack.c.b16 %v854, %v850
    %v1175 = vpack.c.b16 %v859, %v855
    %v1176 = vpack.c.b16 %v860, %v856
    %v1177 = vpack.c.b16 %v861, %v857
    %v1178 = vpack.c.b16 %v862, %v858
    %v1179 = vpack.c.b16 %v867, %v863
    %v1180 = vpack.c.b16 %v868, %v864
    %v1181 = vpack.c.b16 %v869, %v865
    %v1182 = vpack.c.b16 %v870, %v866
    %v1183 = vpack.c.b16 %v875, %v871
    %v1184 = vpack.c.b16 %v876, %v872
    %v1185 = vpack.c.b16 %v877, %v873
    %v1186 = vpack.c.b16 %v878, %v874
    %v1187 = vpack.c.b16 %v883, %v879
    %v1188 = vpack.c.b16 %v884, %v880
    %v1189 = vpack.c.b16 %v885, %v881
    %v1190 = vpack.c.b16 %v886, %v882
    %v1191 = vpack.c.b16 %v891, %v887
    %v1192 = vpack.c.b16 %v892, %v888
    %v1193 = vpack.c.b16 %v893, %v889
    %v1194 = vpack.c.b16 %v894, %v890
    %v1195 = vpack.c.b16 %v899, %v895
    %v1196 = vpack.c.b16 %v900, %v896
    %v1197 = vpack.c.b16 %v901, %v897
    %v1198 = vpack.c.b16 %v902, %v898
    %v1199 = vpack.c.b16 %v907, %v903
    %v1200 = vpack.c.b16 %v908, %v904
    %v1201 = vpack.c.b16 %v909, %v905
    %v1202 = vpack.c.b16 %v910, %v906
    %v1203 = vpack.c.b16 %v915, %v911
    %v1204 = vpack.c.b16 %v916, %v912
    %v1205 = vpack.c.b16 %v917, %v913
    %v1206 = vpack.c.b16 %v918, %v914
    %v1207 = vpack.c.b16 %v923, %v919
    %v1208 = vpack.c.b16 %v924, %v920
    %v1209 = vpack.c.b16 %v925, %v921
    %v1210 = vpack.c.b16 %v926, %v922
    %v1211 = vpack.c.b16 %v931, %v927
    %v1212 = vpack.c.b16 %v932, %v928
    %v1213 = vpack.c.b16 %v933, %v929
    %v1214 = vpack.c.b16 %v934, %v930
    %v1215 = vpack.c.b16 %v939, %v935
    %v1216 = vpack.c.b16 %v940, %v936
    %v1217 = vpack.c.b16 %v941, %v937
    %v1218 = vpack.c.b16 %v942, %v938
    %v1219 = vpack.c.b16 %v947, %v943
    %v1220 = vpack.c.b16 %v948, %v944
    %v1221 = vpack.c.b16 %v949, %v945
    %v1222 = vpack.c.b16 %v950, %v946
    %v1223 = vpack.c.b16 %v955, %v951
    %v1224 = vpack.c.b16 %v956, %v952
    %v1225 = vpack.c.b16 %v957, %v953
    %v1226 = vpack.c.b16 %v958, %v954
    %v1227 = vpack.c.b16 %v963, %v959
    %v1228 = vpack.c.b16 %v964, %v960
    %v1229 = vpack.c.b16 %v965, %v961
    %v1230 = vpack.c.b16 %v966, %v962
    %v1231 = vpack.c.b16 %v971, %v967
    %v1232 = vpack.c.b16 %v972, %v968
    %v1233 = vpack.c.b16 %v973, %v969
    %v1234 = vpack.c.b16 %v974, %v970
    %v1235 = vpack.c.b16 %v979, %v975
    %v1236 = vpack.c.b16 %v980, %v976
    %v1237 = vpack.c.b16 %v981, %v977
    %v1238 = vpack.c.b16 %v982, %v978
    %v1239 = vpack.c.b16 %v987, %v983
    %v1240 = vpack.c.b16 %v988, %v984
    %v1241 = vpack.c.b16 %v989, %v985
    %v1242 = vpack.c.b16 %v990, %v986
    %v1243 = vpack.c.b16 %v995, %v991
    %v1244 = vpack.c.b16 %v996, %v992
    %v1245 = vpack.c.b16 %v997, %v993
    %v1246 = vpack.c.b16 %v998, %v994
    %v1247 = vpack.c.b16 %v1003, %v999
    %v1248 = vpack.c.b16 %v1004, %v1000
    %v1249 = vpack.c.b16 %v1005, %v1001
    %v1250 = vpack.c.b16 %v1006, %v1002
    %v1251 = vpack.c.b16 %v1011, %v1007
    %v1252 = vpack.c.b16 %v1012, %v1008
    %v1253 = vpack.c.b16 %v1013, %v1009
    %v1254 = vpack.c.b16 %v1014, %v1010
    %v1255 = vpack.c.b16 %v1019, %v1015
    %v1256 = vpack.c.b16 %v1020, %v1016
    %v1257 = vpack.c.b16 %v1021, %v1017
    %v1258 = vpack.c.b16 %v1022, %v1018
    %v1259 = vpack.c.b16 %v1027, %v1023
    %v1260 = vpack.c.b16 %v1028, %v1024
    %v1261 = vpack.c.b16 %v1029, %v1025
    %v1262 = vpack.c.b16 %v1030, %v1026
    %v1263 = vpack.c.b16 %v1035, %v1031
    %v1264 = vpack.c.b16 %v1036, %v1032
    %v1265 = vpack.c.b16 %v1037, %v1033
    %v1266 = vpack.c.b16 %v1038, %v1034
    %v1267 = vpack.c.b16 %v1043, %v1039
    %v1268 = vpack.c.b16 %v1044, %v1040
    %v1269 = vpack.c.b16 %v1045, %v1041
    %v1270 = vpack.c.b16 %v1046, %v1042
    %1495 = vmatpush.bf16.msra.mxu0 %v1075
    %1496 = vmatpush.bf16.msra.mxu0 %v1071
    %1497 = vmatpush.bf16.msra.mxu0 %v1067
    %1498 = vmatpush.bf16.msra.mxu0 %v1063
    %1499 = vmatpush.bf16.msra.mxu0 %v1059
    %1500 = vmatpush.bf16.msra.mxu0 %v1055
    %1501 = vmatpush.bf16.msra.mxu0 %v1051
    %1502 = vmatpush.bf16.msra.mxu0 %v1047
    %1503 = vmatmul.bf16.gmra.mxu0 %v361
    %v1504 = vpop.f32.mrf.mxu0
    %v1505 = vadd.f32 %v331, %v1504
    %v1506 = vpop.f32.mrf.mxu0
    %v1507 = vadd.f32 %v331, %v1506
    %1508 = vdwg.mxu0
    %1509 = vmatpush.bf16.msra.mxu0 %v1107
    %1510 = vmatpush.bf16.msra.mxu0 %v1103
    %1511 = vmatpush.bf16.msra.mxu0 %v1099
    %1512 = vmatpush.bf16.msra.mxu0 %v1095
    %1513 = vmatpush.bf16.msra.mxu0 %v1091
    %1514 = vmatpush.bf16.msra.mxu0 %v1087
    %1515 = vmatpush.bf16.msra.mxu0 %v1083
    %1516 = vmatpush.bf16.msra.mxu0 %v1079
    %1517 = vmatmul.bf16.gmra.mxu0 %v362
    %v1518 = vpop.f32.mrf.mxu0
    %v1519 = vadd.f32 %v1505, %v1518
    %v1520 = vpop.f32.mrf.mxu0
    %v1521 = vadd.f32 %v1507, %v1520
    %1522 = vdwg.mxu0
    %1523 = vmatpush.bf16.msra.mxu0 %v1139
    %1524 = vmatpush.bf16.msra.mxu0 %v1135
    %1525 = vmatpush.bf16.msra.mxu0 %v1131
    %1526 = vmatpush.bf16.msra.mxu0 %v1127
    %1527 = vmatpush.bf16.msra.mxu0 %v1123
    %1528 = vmatpush.bf16.msra.mxu0 %v1119
    %1529 = vmatpush.bf16.msra.mxu0 %v1115
    %1530 = vmatpush.bf16.msra.mxu0 %v1111
    %1531 = vmatmul.bf16.gmra.mxu0 %v363
    %v1532 = vpop.f32.mrf.mxu0
    %v1533 = vadd.f32 %v1519, %v1532
    %v1534 = vpop.f32.mrf.mxu0
    %v1535 = vadd.f32 %v1521, %v1534
    %1536 = vdwg.mxu0
    %1537 = vmatpush.bf16.msra.mxu0 %v1171
    %1538 = vmatpush.bf16.msra.mxu0 %v1167
    %1539 = vmatpush.bf16.msra.mxu0 %v1163
    %1540 = vmatpush.bf16.msra.mxu0 %v1159
    %1541 = vmatpush.bf16.msra.mxu0 %v1155
    %1542 = vmatpush.bf16.msra.mxu0 %v1151
    %1543 = vmatpush.bf16.msra.mxu0 %v1147
    %1544 = vmatpush.bf16.msra.mxu0 %v1143
    %1545 = vmatmul.bf16.gmra.mxu0 %v364
    %v1546 = vpop.f32.mrf.mxu0
    %v1547 = vadd.f32 %v1533, %v1546
    %v1548 = vpop.f32.mrf.mxu0
    %v1549 = vadd.f32 %v1535, %v1548
    %1550 = vdwg.mxu0
    %1551 = vmatpush.bf16.msra.mxu0 %v1203
    %1552 = vmatpush.bf16.msra.mxu0 %v1199
    %1553 = vmatpush.bf16.msra.mxu0 %v1195
    %1554 = vmatpush.bf16.msra.mxu0 %v1191
    %1555 = vmatpush.bf16.msra.mxu0 %v1187
    %1556 = vmatpush.bf16.msra.mxu0 %v1183
    %1557 = vmatpush.bf16.msra.mxu0 %v1179
    %1558 = vmatpush.bf16.msra.mxu0 %v1175
    %1559 = vmatmul.bf16.gmra.mxu0 %v365
    %v1560 = vpop.f32.mrf.mxu0
    %v1561 = vadd.f32 %v1547, %v1560
    %v1562 = vpop.f32.mrf.mxu0
    %v1563 = vadd.f32 %v1549, %v1562
    %1564 = vdwg.mxu0
    %1565 = vmatpush.bf16.msra.mxu0 %v1235
    %1566 = vmatpush.bf16.msra.mxu0 %v1231
    %1567 = vmatpush.bf16.msra.mxu0 %v1227
    %1568 = vmatpush.bf16.msra.mxu0 %v1223
    %1569 = vmatpush.bf16.msra.mxu0 %v1219
    %1570 = vmatpush.bf16.msra.mxu0 %v1215
    %1571 = vmatpush.bf16.msra.mxu0 %v1211
    %1572 = vmatpush.bf16.msra.mxu0 %v1207
    %1573 = vmatmul.bf16.gmra.mxu0 %v366
    %v1574 = vpop.f32.mrf.mxu0
    %v1575 = vadd.f32 %v1561, %v1574
    %v1576 = vpop.f32.mrf.mxu0
    %v1577 = vadd.f32 %v1563, %v1576
    %1578 = vdwg.mxu0
    %1579 = vmatpush.bf16.msra.mxu0 %v1267
    %1580 = vmatpush.bf16.msra.mxu0 %v1263
    %1581 = vmatpush.bf16.msra.mxu0 %v1259
    %1582 = vmatpush.bf16.msra.mxu0 %v1255
    %1583 = vmatpush.bf16.msra.mxu0 %v1251
    %1584 = vmatpush.bf16.msra.mxu0 %v1247
    %1585 = vmatpush.bf16.msra.mxu0 %v1243
    %1586 = vmatpush.bf16.msra.mxu0 %v1239
    %1587 = vmatmul.bf16.gmra.mxu0 %v367
    %v1588 = vpop.f32.mrf.mxu0
    %v1589 = vadd.f32 %v1575, %v1588
    %v1590 = vpop.f32.mrf.mxu0
    %v1591 = vadd.f32 %v1577, %v1590
    %1592 = vdwg.mxu0
    %1593 = vmatpush.bf16.msra.mxu0 %v1076
    %1594 = vmatpush.bf16.msra.mxu0 %v1072
    %1595 = vmatpush.bf16.msra.mxu0 %v1068
    %1596 = vmatpush.bf16.msra.mxu0 %v1064
    %1597 = vmatpush.bf16.msra.mxu0 %v1060
    %1598 = vmatpush.bf16.msra.mxu0 %v1056
    %1599 = vmatpush.bf16.msra.mxu0 %v1052
    %1600 = vmatpush.bf16.msra.mxu0 %v1048
    %1601 = vmatmul.bf16.gmra.mxu0 %v361
    %v1602 = vpop.f32.mrf.mxu0
    %v1603 = vadd.f32 %v332, %v1602
    %v1604 = vpop.f32.mrf.mxu0
    %v1605 = vadd.f32 %v332, %v1604
    %1606 = vdwg.mxu0
    %1607 = vmatpush.bf16.msra.mxu0 %v1108
    %1608 = vmatpush.bf16.msra.mxu0 %v1104
    %1609 = vmatpush.bf16.msra.mxu0 %v1100
    %1610 = vmatpush.bf16.msra.mxu0 %v1096
    %1611 = vmatpush.bf16.msra.mxu0 %v1092
    %1612 = vmatpush.bf16.msra.mxu0 %v1088
    %1613 = vmatpush.bf16.msra.mxu0 %v1084
    %1614 = vmatpush.bf16.msra.mxu0 %v1080
    %1615 = vmatmul.bf16.gmra.mxu0 %v362
    %v1616 = vpop.f32.mrf.mxu0
    %v1617 = vadd.f32 %v1603, %v1616
    %v1618 = vpop.f32.mrf.mxu0
    %v1619 = vadd.f32 %v1605, %v1618
    %1620 = vdwg.mxu0
    %1621 = vmatpush.bf16.msra.mxu0 %v1140
    %1622 = vmatpush.bf16.msra.mxu0 %v1136
    %1623 = vmatpush.bf16.msra.mxu0 %v1132
    %1624 = vmatpush.bf16.msra.mxu0 %v1128
    %1625 = vmatpush.bf16.msra.mxu0 %v1124
    %1626 = vmatpush.bf16.msra.mxu0 %v1120
    %1627 = vmatpush.bf16.msra.mxu0 %v1116
    %1628 = vmatpush.bf16.msra.mxu0 %v1112
    %1629 = vmatmul.bf16.gmra.mxu0 %v363
    %v1630 = vpop.f32.mrf.mxu0
    %v1631 = vadd.f32 %v1617, %v1630
    %v1632 = vpop.f32.mrf.mxu0
    %v1633 = vadd.f32 %v1619, %v1632
    %1634 = vdwg.mxu0
    %1635 = vmatpush.bf16.msra.mxu0 %v1172
    %1636 = vmatpush.bf16.msra.mxu0 %v1168
    %1637 = vmatpush.bf16.msra.mxu0 %v1164
    %1638 = vmatpush.bf16.msra.mxu0 %v1160
    %1639 = vmatpush.bf16.msra.mxu0 %v1156
    %1640 = vmatpush.bf16.msra.mxu0 %v1152
    %1641 = vmatpush.bf16.msra.mxu0 %v1148
    %1642 = vmatpush.bf16.msra.mxu0 %v1144
    %1643 = vmatmul.bf16.gmra.mxu0 %v364
    %v1644 = vpop.f32.mrf.mxu0
    %v1645 = vadd.f32 %v1631, %v1644
    %v1646 = vpop.f32.mrf.mxu0
    %v1647 = vadd.f32 %v1633, %v1646
    %1648 = vdwg.mxu0
    %1649 = vmatpush.bf16.msra.mxu0 %v1204
    %1650 = vmatpush.bf16.msra.mxu0 %v1200
    %1651 = vmatpush.bf16.msra.mxu0 %v1196
    %1652 = vmatpush.bf16.msra.mxu0 %v1192
    %1653 = vmatpush.bf16.msra.mxu0 %v1188
    %1654 = vmatpush.bf16.msra.mxu0 %v1184
    %1655 = vmatpush.bf16.msra.mxu0 %v1180
    %1656 = vmatpush.bf16.msra.mxu0 %v1176
    %1657 = vmatmul.bf16.gmra.mxu0 %v365
    %v1658 = vpop.f32.mrf.mxu0
    %v1659 = vadd.f32 %v1645, %v1658
    %v1660 = vpop.f32.mrf.mxu0
    %v1661 = vadd.f32 %v1647, %v1660
    %1662 = vdwg.mxu0
    %1663 = vmatpush.bf16.msra.mxu0 %v1236
    %1664 = vmatpush.bf16.msra.mxu0 %v1232
    %1665 = vmatpush.bf16.msra.mxu0 %v1228
    %1666 = vmatpush.bf16.msra.mxu0 %v1224
    %1667 = vmatpush.bf16.msra.mxu0 %v1220
    %1668 = vmatpush.bf16.msra.mxu0 %v1216
    %1669 = vmatpush.bf16.msra.mxu0 %v1212
    %1670 = vmatpush.bf16.msra.mxu0 %v1208
    %1671 = vmatmul.bf16.gmra.mxu0 %v366
    %v1672 = vpop.f32.mrf.mxu0
    %v1673 = vadd.f32 %v1659, %v1672
    %v1674 = vpop.f32.mrf.mxu0
    %v1675 = vadd.f32 %v1661, %v1674
    %1676 = vdwg.mxu0
    %1677 = vmatpush.bf16.msra.mxu0 %v1268
    %1678 = vmatpush.bf16.msra.mxu0 %v1264
    %1679 = vmatpush.bf16.msra.mxu0 %v1260
    %1680 = vmatpush.bf16.msra.mxu0 %v1256
    %1681 = vmatpush.bf16.msra.mxu0 %v1252
    %1682 = vmatpush.bf16.msra.mxu0 %v1248
    %1683 = vmatpush.bf16.msra.mxu0 %v1244
    %1684 = vmatpush.bf16.msra.mxu0 %v1240
    %1685 = vmatmul.bf16.gmra.mxu0 %v367
    %v1686 = vpop.f32.mrf.mxu0
    %v1687 = vadd.f32 %v1673, %v1686
    %v1688 = vpop.f32.mrf.mxu0
    %v1689 = vadd.f32 %v1675, %v1688
    %1690 = vdwg.mxu0
    %1691 = vmatpush.bf16.msra.mxu0 %v1077
    %1692 = vmatpush.bf16.msra.mxu0 %v1073
    %1693 = vmatpush.bf16.msra.mxu0 %v1069
    %1694 = vmatpush.bf16.msra.mxu0 %v1065
    %1695 = vmatpush.bf16.msra.mxu0 %v1061
    %1696 = vmatpush.bf16.msra.mxu0 %v1057
    %1697 = vmatpush.bf16.msra.mxu0 %v1053
    %1698 = vmatpush.bf16.msra.mxu0 %v1049
    %1699 = vmatmul.bf16.gmra.mxu0 %v361
    %v1700 = vpop.f32.mrf.mxu0
    %v1701 = vadd.f32 %v333, %v1700
    %v1702 = vpop.f32.mrf.mxu0
    %v1703 = vadd.f32 %v333, %v1702
    %1704 = vdwg.mxu0
    %1705 = vmatpush.bf16.msra.mxu0 %v1109
    %1706 = vmatpush.bf16.msra.mxu0 %v1105
    %1707 = vmatpush.bf16.msra.mxu0 %v1101
    %1708 = vmatpush.bf16.msra.mxu0 %v1097
    %1709 = vmatpush.bf16.msra.mxu0 %v1093
    %1710 = vmatpush.bf16.msra.mxu0 %v1089
    %1711 = vmatpush.bf16.msra.mxu0 %v1085
    %1712 = vmatpush.bf16.msra.mxu0 %v1081
    %1713 = vmatmul.bf16.gmra.mxu0 %v362
    %v1714 = vpop.f32.mrf.mxu0
    %v1715 = vadd.f32 %v1701, %v1714
    %v1716 = vpop.f32.mrf.mxu0
    %v1717 = vadd.f32 %v1703, %v1716
    %1718 = vdwg.mxu0
    %1719 = vmatpush.bf16.msra.mxu0 %v1141
    %1720 = vmatpush.bf16.msra.mxu0 %v1137
    %1721 = vmatpush.bf16.msra.mxu0 %v1133
    %1722 = vmatpush.bf16.msra.mxu0 %v1129
    %1723 = vmatpush.bf16.msra.mxu0 %v1125
    %1724 = vmatpush.bf16.msra.mxu0 %v1121
    %1725 = vmatpush.bf16.msra.mxu0 %v1117
    %1726 = vmatpush.bf16.msra.mxu0 %v1113
    %1727 = vmatmul.bf16.gmra.mxu0 %v363
    %v1728 = vpop.f32.mrf.mxu0
    %v1729 = vadd.f32 %v1715, %v1728
    %v1730 = vpop.f32.mrf.mxu0
    %v1731 = vadd.f32 %v1717, %v1730
    %1732 = vdwg.mxu0
    %1733 = vmatpush.bf16.msra.mxu0 %v1173
    %1734 = vmatpush.bf16.msra.mxu0 %v1169
    %1735 = vmatpush.bf16.msra.mxu0 %v1165
    %1736 = vmatpush.bf16.msra.mxu0 %v1161
    %1737 = vmatpush.bf16.msra.mxu0 %v1157
    %1738 = vmatpush.bf16.msra.mxu0 %v1153
    %1739 = vmatpush.bf16.msra.mxu0 %v1149
    %1740 = vmatpush.bf16.msra.mxu0 %v1145
    %1741 = vmatmul.bf16.gmra.mxu0 %v364
    %v1742 = vpop.f32.mrf.mxu0
    %v1743 = vadd.f32 %v1729, %v1742
    %v1744 = vpop.f32.mrf.mxu0
    %v1745 = vadd.f32 %v1731, %v1744
    %1746 = vdwg.mxu0
    %1747 = vmatpush.bf16.msra.mxu0 %v1205
    %1748 = vmatpush.bf16.msra.mxu0 %v1201
    %1749 = vmatpush.bf16.msra.mxu0 %v1197
    %1750 = vmatpush.bf16.msra.mxu0 %v1193
    %1751 = vmatpush.bf16.msra.mxu0 %v1189
    %1752 = vmatpush.bf16.msra.mxu0 %v1185
    %1753 = vmatpush.bf16.msra.mxu0 %v1181
    %1754 = vmatpush.bf16.msra.mxu0 %v1177
    %1755 = vmatmul.bf16.gmra.mxu0 %v365
    %v1756 = vpop.f32.mrf.mxu0
    %v1757 = vadd.f32 %v1743, %v1756
    %v1758 = vpop.f32.mrf.mxu0
    %v1759 = vadd.f32 %v1745, %v1758
    %1760 = vdwg.mxu0
    %1761 = vmatpush.bf16.msra.mxu0 %v1237
    %1762 = vmatpush.bf16.msra.mxu0 %v1233
    %1763 = vmatpush.bf16.msra.mxu0 %v1229
    %1764 = vmatpush.bf16.msra.mxu0 %v1225
    %1765 = vmatpush.bf16.msra.mxu0 %v1221
    %1766 = vmatpush.bf16.msra.mxu0 %v1217
    %1767 = vmatpush.bf16.msra.mxu0 %v1213
    %1768 = vmatpush.bf16.msra.mxu0 %v1209
    %1769 = vmatmul.bf16.gmra.mxu0 %v366
    %v1770 = vpop.f32.mrf.mxu0
    %v1771 = vadd.f32 %v1757, %v1770
    %v1772 = vpop.f32.mrf.mxu0
    %v1773 = vadd.f32 %v1759, %v1772
    %1774 = vdwg.mxu0
    %1775 = vmatpush.bf16.msra.mxu0 %v1269
    %1776 = vmatpush.bf16.msra.mxu0 %v1265
    %1777 = vmatpush.bf16.msra.mxu0 %v1261
    %1778 = vmatpush.bf16.msra.mxu0 %v1257
    %1779 = vmatpush.bf16.msra.mxu0 %v1253
    %1780 = vmatpush.bf16.msra.mxu0 %v1249
    %1781 = vmatpush.bf16.msra.mxu0 %v1245
    %1782 = vmatpush.bf16.msra.mxu0 %v1241
    %1783 = vmatmul.bf16.gmra.mxu0 %v367
    %v1784 = vpop.f32.mrf.mxu0
    %v1785 = vadd.f32 %v1771, %v1784
    %v1786 = vpop.f32.mrf.mxu0
    %v1787 = vadd.f32 %v1773, %v1786
    %1788 = vdwg.mxu0
    %1789 = vmatpush.bf16.msra.mxu0 %v1078
    %1790 = vmatpush.bf16.msra.mxu0 %v1074
    %1791 = vmatpush.bf16.msra.mxu0 %v1070
    %1792 = vmatpush.bf16.msra.mxu0 %v1066
    %1793 = vmatpush.bf16.msra.mxu0 %v1062
    %1794 = vmatpush.bf16.msra.mxu0 %v1058
    %1795 = vmatpush.bf16.msra.mxu0 %v1054
    %1796 = vmatpush.bf16.msra.mxu0 %v1050
    %1797 = vmatmul.bf16.gmra.mxu0 %v361
    %v1798 = vpop.f32.mrf.mxu0
    %v1799 = vadd.f32 %v334, %v1798
    %v1800 = vpop.f32.mrf.mxu0
    %v1801 = vadd.f32 %v334, %v1800
    %1802 = vdwg.mxu0
    %1803 = vmatpush.bf16.msra.mxu0 %v1110
    %1804 = vmatpush.bf16.msra.mxu0 %v1106
    %1805 = vmatpush.bf16.msra.mxu0 %v1102
    %1806 = vmatpush.bf16.msra.mxu0 %v1098
    %1807 = vmatpush.bf16.msra.mxu0 %v1094
    %1808 = vmatpush.bf16.msra.mxu0 %v1090
    %1809 = vmatpush.bf16.msra.mxu0 %v1086
    %1810 = vmatpush.bf16.msra.mxu0 %v1082
    %1811 = vmatmul.bf16.gmra.mxu0 %v362
    %v1812 = vpop.f32.mrf.mxu0
    %v1813 = vadd.f32 %v1799, %v1812
    %v1814 = vpop.f32.mrf.mxu0
    %v1815 = vadd.f32 %v1801, %v1814
    %1816 = vdwg.mxu0
    %1817 = vmatpush.bf16.msra.mxu0 %v1142
    %1818 = vmatpush.bf16.msra.mxu0 %v1138
    %1819 = vmatpush.bf16.msra.mxu0 %v1134
    %1820 = vmatpush.bf16.msra.mxu0 %v1130
    %1821 = vmatpush.bf16.msra.mxu0 %v1126
    %1822 = vmatpush.bf16.msra.mxu0 %v1122
    %1823 = vmatpush.bf16.msra.mxu0 %v1118
    %1824 = vmatpush.bf16.msra.mxu0 %v1114
    %1825 = vmatmul.bf16.gmra.mxu0 %v363
    %v1826 = vpop.f32.mrf.mxu0
    %v1827 = vadd.f32 %v1813, %v1826
    %v1828 = vpop.f32.mrf.mxu0
    %v1829 = vadd.f32 %v1815, %v1828
    %1830 = vdwg.mxu0
    %1831 = vmatpush.bf16.msra.mxu0 %v1174
    %1832 = vmatpush.bf16.msra.mxu0 %v1170
    %1833 = vmatpush.bf16.msra.mxu0 %v1166
    %1834 = vmatpush.bf16.msra.mxu0 %v1162
    %1835 = vmatpush.bf16.msra.mxu0 %v1158
    %1836 = vmatpush.bf16.msra.mxu0 %v1154
    %1837 = vmatpush.bf16.msra.mxu0 %v1150
    %1838 = vmatpush.bf16.msra.mxu0 %v1146
    %1839 = vmatmul.bf16.gmra.mxu0 %v364
    %v1840 = vpop.f32.mrf.mxu0
    %v1841 = vadd.f32 %v1827, %v1840
    %v1842 = vpop.f32.mrf.mxu0
    %v1843 = vadd.f32 %v1829, %v1842
    %1844 = vdwg.mxu0
    %1845 = vmatpush.bf16.msra.mxu0 %v1206
    %1846 = vmatpush.bf16.msra.mxu0 %v1202
    %1847 = vmatpush.bf16.msra.mxu0 %v1198
    %1848 = vmatpush.bf16.msra.mxu0 %v1194
    %1849 = vmatpush.bf16.msra.mxu0 %v1190
    %1850 = vmatpush.bf16.msra.mxu0 %v1186
    %1851 = vmatpush.bf16.msra.mxu0 %v1182
    %1852 = vmatpush.bf16.msra.mxu0 %v1178
    %1853 = vmatmul.bf16.gmra.mxu0 %v365
    %v1854 = vpop.f32.mrf.mxu0
    %v1855 = vadd.f32 %v1841, %v1854
    %v1856 = vpop.f32.mrf.mxu0
    %v1857 = vadd.f32 %v1843, %v1856
    %1858 = vdwg.mxu0
    %1859 = vmatpush.bf16.msra.mxu0 %v1238
    %1860 = vmatpush.bf16.msra.mxu0 %v1234
    %1861 = vmatpush.bf16.msra.mxu0 %v1230
    %1862 = vmatpush.bf16.msra.mxu0 %v1226
    %1863 = vmatpush.bf16.msra.mxu0 %v1222
    %1864 = vmatpush.bf16.msra.mxu0 %v1218
    %1865 = vmatpush.bf16.msra.mxu0 %v1214
    %1866 = vmatpush.bf16.msra.mxu0 %v1210
    %1867 = vmatmul.bf16.gmra.mxu0 %v366
    %v1868 = vpop.f32.mrf.mxu0
    %v1869 = vadd.f32 %v1855, %v1868
    %v1870 = vpop.f32.mrf.mxu0
    %v1871 = vadd.f32 %v1857, %v1870
    %1872 = vdwg.mxu0
    %1873 = vmatpush.bf16.msra.mxu0 %v1270
    %1874 = vmatpush.bf16.msra.mxu0 %v1266
    %1875 = vmatpush.bf16.msra.mxu0 %v1262
    %1876 = vmatpush.bf16.msra.mxu0 %v1258
    %1877 = vmatpush.bf16.msra.mxu0 %v1254
    %1878 = vmatpush.bf16.msra.mxu0 %v1250
    %1879 = vmatpush.bf16.msra.mxu0 %v1246
    %1880 = vmatpush.bf16.msra.mxu0 %v1242
    %1881 = vmatmul.bf16.gmra.mxu0 %v367
    %v1882 = vpop.f32.mrf.mxu0
    %v1883 = vadd.f32 %v1869, %v1882
    %v1884 = vpop.f32.mrf.mxu0
    %v1885 = vadd.f32 %v1871, %v1884
    %1886 = vdwg.mxu0
    %v1887 = vmax.f32 %v1589, 0.0
    %v1888 = vmax.f32 %v1687, 0.0
    %v1889 = vmax.f32 %v1785, 0.0
    %v1890 = vmax.f32 %v1883, 0.0
    %v1891 = vmax.f32 %v1591, 0.0
    %v1892 = vmax.f32 %v1689, 0.0
    %v1893 = vmax.f32 %v1787, 0.0
    %v1894 = vmax.f32 %v1885, 0.0
    %v1895 = vpack.c.bf16 %v1891, %v1887
    %v1896 = vpack.c.bf16 %v1892, %v1888
    %v1897 = vpack.c.bf16 %v1893, %v1889
    %v1898 = vpack.c.bf16 %v1894, %v1890
    %v1899 = vld [vmem:[#allocation4] sm:$0xf]
    %v1900 = vld [vmem:[#allocation4 + $0x4] sm:$0xf]
    %v1901 = vld [vmem:[#allocation4 + $0x8] sm:$0xf]
    %v1902 = vld [vmem:[#allocation4 + $0xc] sm:$0xf]
    %v1903 = vld [vmem:[#allocation4 + $0x10] sm:$0xf]
    %v1904 = vld [vmem:[#allocation4 + $0x14] sm:$0xf]
    %v1905 = vld [vmem:[#allocation4 + $0x18] sm:$0xf]
    %v1906 = vld [vmem:[#allocation4 + $0x1c] sm:$0xf]
    %v1907 = vld [vmem:[#allocation4 + $0x20] sm:$0xf]
    %v1908 = vld [vmem:[#allocation4 + $0x24] sm:$0xf]
    %v1909 = vld [vmem:[#allocation4 + $0x28] sm:$0xf]
    %v1910 = vld [vmem:[#allocation4 + $0x2c] sm:$0xf]
    %v1911 = vld [vmem:[#allocation4 + $0x30] sm:$0xf]
    %v1912 = vld [vmem:[#allocation4 + $0x34] sm:$0xf]
    %v1913 = vld [vmem:[#allocation4 + $0x38] sm:$0xf]
    %v1914 = vld [vmem:[#allocation4 + $0x3c] sm:$0xf]
    %v1915 = vld [vmem:[#allocation4 + $0x40] sm:$0xf]
    %v1916 = vld [vmem:[#allocation4 + $0x44] sm:$0xf]
    %v1917 = vld [vmem:[#allocation4 + $0x48] sm:$0xf]
    %v1918 = vld [vmem:[#allocation4 + $0x4c] sm:$0xf]
    %v1919 = vld [vmem:[#allocation4 + $0x50] sm:$0xf]
    %v1920 = vld [vmem:[#allocation4 + $0x54] sm:$0xf]
    %v1921 = vld [vmem:[#allocation4 + $0x58] sm:$0xf]
    %v1922 = vld [vmem:[#allocation4 + $0x5c] sm:$0xf]
    %v1923 = vld [vmem:[#allocation4 + $0x60] sm:$0xf]
    %v1924 = vld [vmem:[#allocation4 + $0x64] sm:$0xf]
    %v1925 = vld [vmem:[#allocation4 + $0x68] sm:$0xf]
    %v1926 = vld [vmem:[#allocation4 + $0x6c] sm:$0xf]
    %v1927 = vld [vmem:[#allocation4 + $0x70] sm:$0xf]
    %v1928 = vld [vmem:[#allocation4 + $0x74] sm:$0xf]
    %v1929 = vld [vmem:[#allocation4 + $0x78] sm:$0xf]
    %v1930 = vld [vmem:[#allocation4 + $0x7c] sm:$0xf]
    %v1931 = vld [vmem:[#allocation4 + $0x80] sm:$0xf]
    %v1932 = vld [vmem:[#allocation4 + $0x84] sm:$0xf]
    %v1933 = vld [vmem:[#allocation4 + $0x88] sm:$0xf]
    %v1934 = vld [vmem:[#allocation4 + $0x8c] sm:$0xf]
    %v1935 = vld [vmem:[#allocation4 + $0x90] sm:$0xf]
    %v1936 = vld [vmem:[#allocation4 + $0x94] sm:$0xf]
    %v1937 = vld [vmem:[#allocation4 + $0x98] sm:$0xf]
    %v1938 = vld [vmem:[#allocation4 + $0x9c] sm:$0xf]
    %v1939 = vld [vmem:[#allocation4 + $0xa0] sm:$0xf]
    %v1940 = vld [vmem:[#allocation4 + $0xa4] sm:$0xf]
    %v1941 = vld [vmem:[#allocation4 + $0xa8] sm:$0xf]
    %v1942 = vld [vmem:[#allocation4 + $0xac] sm:$0xf]
    %v1943 = vld [vmem:[#allocation4 + $0xb0] sm:$0xf]
    %v1944 = vld [vmem:[#allocation4 + $0xb4] sm:$0xf]
    %v1945 = vld [vmem:[#allocation4 + $0xb8] sm:$0xf]
    %v1946 = vld [vmem:[#allocation4 + $0xbc] sm:$0xf]
    %v1947 = vld [vmem:[#allocation4 + $0xc0] sm:$0xf]
    %v1948 = vld [vmem:[#allocation4 + $0xc4] sm:$0xf]
    %v1949 = vld [vmem:[#allocation4 + $0xc8] sm:$0xf]
    %v1950 = vld [vmem:[#allocation4 + $0xcc] sm:$0xf]
    %v1951 = vld [vmem:[#allocation4 + $0xd0] sm:$0xf]
    %v1952 = vld [vmem:[#allocation4 + $0xd4] sm:$0xf]
    %v1953 = vld [vmem:[#allocation4 + $0xd8] sm:$0xf]
    %v1954 = vld [vmem:[#allocation4 + $0xdc] sm:$0xf]
    %v1955 = vld [vmem:[#allocation4 + $0xe0] sm:$0xf]
    %v1956 = vld [vmem:[#allocation4 + $0xe4] sm:$0xf]
    %v1957 = vld [vmem:[#allocation4 + $0xe8] sm:$0xf]
    %v1958 = vld [vmem:[#allocation4 + $0xec] sm:$0xf]
    %v1959 = vld [vmem:[#allocation4 + $0xf0] sm:$0xf]
    %v1960 = vld [vmem:[#allocation4 + $0xf4] sm:$0xf]
    %v1961 = vld [vmem:[#allocation4 + $0xf8] sm:$0xf]
    %v1962 = vld [vmem:[#allocation4 + $0xfc] sm:$0xf]
    %v1963 = vld [vmem:[%s4] sm:$0x1]
    %v1965 = vperm.slane %v1963, 0
    %v2031 = vunpack.c.l.b16 %v1899
    %v2032 = vunpack.c.l.b16 %v1900
    %v2033 = vunpack.c.l.b16 %v1901
    %v2034 = vunpack.c.l.b16 %v1902
    %v2035 = vunpack.c.l.b16 %v1903
    %v2036 = vunpack.c.l.b16 %v1904
    %v2037 = vunpack.c.l.b16 %v1905
    %v2038 = vunpack.c.l.b16 %v1906
    %v2039 = vunpack.c.l.b16 %v1907
    %v2040 = vunpack.c.l.b16 %v1908
    %v2041 = vunpack.c.l.b16 %v1909
    %v2042 = vunpack.c.l.b16 %v1910
    %v2043 = vunpack.c.l.b16 %v1911
    %v2044 = vunpack.c.l.b16 %v1912
    %v2045 = vunpack.c.l.b16 %v1913
    %v2046 = vunpack.c.l.b16 %v1914
    %v2047 = vunpack.c.l.b16 %v1915
    %v2048 = vunpack.c.l.b16 %v1916
    %v2049 = vunpack.c.l.b16 %v1917
    %v2050 = vunpack.c.l.b16 %v1918
    %v2051 = vunpack.c.l.b16 %v1919
    %v2052 = vunpack.c.l.b16 %v1920
    %v2053 = vunpack.c.l.b16 %v1921
    %v2054 = vunpack.c.l.b16 %v1922
    %v2055 = vunpack.c.l.b16 %v1923
    %v2056 = vunpack.c.l.b16 %v1924
    %v2057 = vunpack.c.l.b16 %v1925
    %v2058 = vunpack.c.l.b16 %v1926
    %v2059 = vunpack.c.l.b16 %v1927
    %v2060 = vunpack.c.l.b16 %v1928
    %v2061 = vunpack.c.l.b16 %v1929
    %v2062 = vunpack.c.l.b16 %v1930
    %v2063 = vunpack.c.l.b16 %v1931
    %v2064 = vunpack.c.l.b16 %v1932
    %v2065 = vunpack.c.l.b16 %v1933
    %v2066 = vunpack.c.l.b16 %v1934
    %v2067 = vunpack.c.l.b16 %v1935
    %v2068 = vunpack.c.l.b16 %v1936
    %v2069 = vunpack.c.l.b16 %v1937
    %v2070 = vunpack.c.l.b16 %v1938
    %v2071 = vunpack.c.l.b16 %v1939
    %v2072 = vunpack.c.l.b16 %v1940
    %v2073 = vunpack.c.l.b16 %v1941
    %v2074 = vunpack.c.l.b16 %v1942
    %v2075 = vunpack.c.l.b16 %v1943
    %v2076 = vunpack.c.l.b16 %v1944
    %v2077 = vunpack.c.l.b16 %v1945
    %v2078 = vunpack.c.l.b16 %v1946
    %v2079 = vunpack.c.l.b16 %v1947
    %v2080 = vunpack.c.l.b16 %v1948
    %v2081 = vunpack.c.l.b16 %v1949
    %v2082 = vunpack.c.l.b16 %v1950
    %v2083 = vunpack.c.l.b16 %v1951
    %v2084 = vunpack.c.l.b16 %v1952
    %v2085 = vunpack.c.l.b16 %v1953
    %v2086 = vunpack.c.l.b16 %v1954
    %v2087 = vunpack.c.l.b16 %v1955
    %v2088 = vunpack.c.l.b16 %v1956
    %v2089 = vunpack.c.l.b16 %v1957
    %v2090 = vunpack.c.l.b16 %v1958
    %v2091 = vunpack.c.l.b16 %v1959
    %v2092 = vunpack.c.l.b16 %v1960
    %v2093 = vunpack.c.l.b16 %v1961
    %v2094 = vunpack.c.l.b16 %v1962
    %v2095 = vpack.c.b16 %v2032, %v2031
    %v2096 = vpack.c.b16 %v2034, %v2033
    %v2097 = vpack.c.b16 %v2036, %v2035
    %v2098 = vpack.c.b16 %v2038, %v2037
    %v2099 = vpack.c.b16 %v2040, %v2039
    %v2100 = vpack.c.b16 %v2042, %v2041
    %v2101 = vpack.c.b16 %v2044, %v2043
    %v2102 = vpack.c.b16 %v2046, %v2045
    %v2103 = vpack.c.b16 %v2048, %v2047
    %v2104 = vpack.c.b16 %v2050, %v2049
    %v2105 = vpack.c.b16 %v2052, %v2051
    %v2106 = vpack.c.b16 %v2054, %v2053
    %v2107 = vpack.c.b16 %v2056, %v2055
    %v2108 = vpack.c.b16 %v2058, %v2057
    %v2109 = vpack.c.b16 %v2060, %v2059
    %v2110 = vpack.c.b16 %v2062, %v2061
    %v2111 = vpack.c.b16 %v2064, %v2063
    %v2112 = vpack.c.b16 %v2066, %v2065
    %v2113 = vpack.c.b16 %v2068, %v2067
    %v2114 = vpack.c.b16 %v2070, %v2069
    %v2115 = vpack.c.b16 %v2072, %v2071
    %v2116 = vpack.c.b16 %v2074, %v2073
    %v2117 = vpack.c.b16 %v2076, %v2075
    %v2118 = vpack.c.b16 %v2078, %v2077
    %v2119 = vpack.c.b16 %v2080, %v2079
    %v2120 = vpack.c.b16 %v2082, %v2081
    %v2121 = vpack.c.b16 %v2084, %v2083
    %v2122 = vpack.c.b16 %v2086, %v2085
    %v2123 = vpack.c.b16 %v2088, %v2087
    %v2124 = vpack.c.b16 %v2090, %v2089
    %v2125 = vpack.c.b16 %v2092, %v2091
    %v2126 = vpack.c.b16 %v2094, %v2093
    %2159 = vmatpush.bf16.msra.mxu0 %v2102
    %2160 = vmatpush.bf16.msra.mxu0 %v2101
    %2161 = vmatpush.bf16.msra.mxu0 %v2100
    %2162 = vmatpush.bf16.msra.mxu0 %v2099
    %2163 = vmatpush.bf16.msra.mxu0 %v2098
    %2164 = vmatpush.bf16.msra.mxu0 %v2097
    %2165 = vmatpush.bf16.msra.mxu0 %v2096
    %2166 = vmatpush.bf16.msra.mxu0 %v2095
    %2167 = vmatmul.bf16.gmra.mxu0 %v1895
    %v2168 = vpop.f32.mrf.mxu0
    %v2169 = vadd.f32 %v1965, %v2168
    %v2170 = vpop.f32.mrf.mxu0
    %v2171 = vadd.f32 %v1965, %v2170
    %2172 = vdwg.mxu0
    %2173 = vmatpush.bf16.msra.mxu0 %v2110
    %2174 = vmatpush.bf16.msra.mxu0 %v2109
    %2175 = vmatpush.bf16.msra.mxu0 %v2108
    %2176 = vmatpush.bf16.msra.mxu0 %v2107
    %2177 = vmatpush.bf16.msra.mxu0 %v2106
    %2178 = vmatpush.bf16.msra.mxu0 %v2105
    %2179 = vmatpush.bf16.msra.mxu0 %v2104
    %2180 = vmatpush.bf16.msra.mxu0 %v2103
    %2181 = vmatmul.bf16.gmra.mxu0 %v1896
    %v2182 = vpop.f32.mrf.mxu0
    %v2183 = vadd.f32 %v2169, %v2182
    %v2184 = vpop.f32.mrf.mxu0
    %v2185 = vadd.f32 %v2171, %v2184
    %2186 = vdwg.mxu0
    %2187 = vmatpush.bf16.msra.mxu0 %v2118
    %2188 = vmatpush.bf16.msra.mxu0 %v2117
    %2189 = vmatpush.bf16.msra.mxu0 %v2116
    %2190 = vmatpush.bf16.msra.mxu0 %v2115
    %2191 = vmatpush.bf16.msra.mxu0 %v2114
    %2192 = vmatpush.bf16.msra.mxu0 %v2113
    %2193 = vmatpush.bf16.msra.mxu0 %v2112
    %2194 = vmatpush.bf16.msra.mxu0 %v2111
    %2195 = vmatmul.bf16.gmra.mxu0 %v1897
    %v2196 = vpop.f32.mrf.mxu0
    %v2197 = vadd.f32 %v2183, %v2196
    %v2198 = vpop.f32.mrf.mxu0
    %v2199 = vadd.f32 %v2185, %v2198
    %2200 = vdwg.mxu0
    %2201 = vmatpush.bf16.msra.mxu0 %v2126
    %2202 = vmatpush.bf16.msra.mxu0 %v2125
    %2203 = vmatpush.bf16.msra.mxu0 %v2124
    %2204 = vmatpush.bf16.msra.mxu0 %v2123
    %2205 = vmatpush.bf16.msra.mxu0 %v2122
    %2206 = vmatpush.bf16.msra.mxu0 %v2121
    %2207 = vmatpush.bf16.msra.mxu0 %v2120
    %2208 = vmatpush.bf16.msra.mxu0 %v2119
    %2209 = vmatmul.bf16.gmra.mxu0 %v1898
    %v2210 = vpop.f32.mrf.mxu0
    %v2211 = vadd.f32 %v2197, %v2210
    %v2212 = vpop.f32.mrf.mxu0
    %v2213 = vadd.f32 %v2199, %v2212
    %2214 = vdwg.mxu0
    %2215 = vst [vmem:[%s9] sm:$0xff] %v2211
    %2216 = vst [vmem:[%s9 + $0x8] sm:$0xff] %v2213
    %v2217 = vpack.c.bf16 %v2213, %v2211
    %v2218 = vld [vmem:[#allocation6] sm:$0xff]
    %v2219 = vld [vmem:[#allocation6 + $0x8] sm:$0xff]
    %v2220 = vld [vmem:[#allocation6 + $0x10] sm:$0xff]
    %v2221 = vld [vmem:[#allocation6 + $0x18] sm:$0xff]
    %v2222 = vld [vmem:[#allocation6 + $0x20] sm:$0xff]
    %v2223 = vld [vmem:[#allocation6 + $0x28] sm:$0xff]
    %v2224 = vld [vmem:[#allocation6 + $0x30] sm:$0xff]
    %v2225 = vld [vmem:[#allocation6 + $0x38] sm:$0xff]
    %v2226 = vld [vmem:[#allocation6 + $0x40] sm:$0xff]
    %v2227 = vld [vmem:[#allocation6 + $0x48] sm:$0xff]
    %v2228 = vld [vmem:[#allocation6 + $0x50] sm:$0xff]
    %v2229 = vld [vmem:[#allocation6 + $0x58] sm:$0xff]
    %v2230 = vld [vmem:[#allocation6 + $0x60] sm:$0xff]
    %v2231 = vld [vmem:[#allocation6 + $0x68] sm:$0xff]
    %v2232 = vld [vmem:[#allocation6 + $0x70] sm:$0xff]
    %v2233 = vld [vmem:[#allocation6 + $0x78] sm:$0xff]
    %v2234 = vld [vmem:[#allocation6 + $0x80] sm:$0xff]
    %v2235 = vld [vmem:[#allocation6 + $0x88] sm:$0xff]
    %v2236 = vld [vmem:[#allocation6 + $0x90] sm:$0xff]
    %v2237 = vld [vmem:[#allocation6 + $0x98] sm:$0xff]
    %v2238 = vld [vmem:[#allocation6 + $0xa0] sm:$0xff]
    %v2239 = vld [vmem:[#allocation6 + $0xa8] sm:$0xff]
    %v2240 = vld [vmem:[#allocation6 + $0xb0] sm:$0xff]
    %v2241 = vld [vmem:[#allocation6 + $0xb8] sm:$0xff]
    %v2242 = vld [vmem:[#allocation6 + $0xc0] sm:$0xff]
    %v2243 = vld [vmem:[#allocation6 + $0xc8] sm:$0xff]
    %v2244 = vld [vmem:[#allocation6 + $0xd0] sm:$0xff]
    %v2245 = vld [vmem:[#allocation6 + $0xd8] sm:$0xff]
    %v2246 = vld [vmem:[#allocation6 + $0xe0] sm:$0xff]
    %v2247 = vld [vmem:[#allocation6 + $0xe8] sm:$0xff]
    %v2248 = vld [vmem:[#allocation6 + $0xf0] sm:$0xff]
    %v2249 = vld [vmem:[#allocation6 + $0xf8] sm:$0xff]
    %v2250 = vld [vmem:[%s6] sm:$0xf]
    %v2252 = vperm.slane %v2250, 0
    %v2253 = vperm.slane %v2250, 1
    %v2254 = vperm.slane %v2250, 2
    %v2255 = vperm.slane %v2250, 3
    %v2292 = vunpack.c.l.b16 %v2218
    %v2293 = vunpack.c.h.b16 %v2218
    %v2294 = vunpack.c.l.b16 %v2219
    %v2295 = vunpack.c.h.b16 %v2219
    %v2296 = vunpack.c.l.b16 %v2220
    %v2297 = vunpack.c.h.b16 %v2220
    %v2298 = vunpack.c.l.b16 %v2221
    %v2299 = vunpack.c.h.b16 %v2221
    %v2300 = vunpack.c.l.b16 %v2222
    %v2301 = vunpack.c.h.b16 %v2222
    %v2302 = vunpack.c.l.b16 %v2223
    %v2303 = vunpack.c.h.b16 %v2223
    %v2304 = vunpack.c.l.b16 %v2224
    %v2305 = vunpack.c.h.b16 %v2224
    %v2306 = vunpack.c.l.b16 %v2225
    %v2307 = vunpack.c.h.b16 %v2225
    %v2308 = vunpack.c.l.b16 %v2226
    %v2309 = vunpack.c.h.b16 %v2226
    %v2310 = vunpack.c.l.b16 %v2227
    %v2311 = vunpack.c.h.b16 %v2227
    %v2312 = vunpack.c.l.b16 %v2228
    %v2313 = vunpack.c.h.b16 %v2228
    %v2314 = vunpack.c.l.b16 %v2229
    %v2315 = vunpack.c.h.b16 %v2229
    %v2316 = vunpack.c.l.b16 %v2230
    %v2317 = vunpack.c.h.b16 %v2230
    %v2318 = vunpack.c.l.b16 %v2231
    %v2319 = vunpack.c.h.b16 %v2231
    %v2320 = vunpack.c.l.b16 %v2232
    %v2321 = vunpack.c.h.b16 %v2232
    %v2322 = vunpack.c.l.b16 %v2233
    %v2323 = vunpack.c.h.b16 %v2233
    %v2324 = vunpack.c.l.b16 %v2234
    %v2325 = vunpack.c.h.b16 %v2234
    %v2326 = vunpack.c.l.b16 %v2235
    %v2327 = vunpack.c.h.b16 %v2235
    %v2328 = vunpack.c.l.b16 %v2236
    %v2329 = vunpack.c.h.b16 %v2236
    %v2330 = vunpack.c.l.b16 %v2237
    %v2331 = vunpack.c.h.b16 %v2237
    %v2332 = vunpack.c.l.b16 %v2238
    %v2333 = vunpack.c.h.b16 %v2238
    %v2334 = vunpack.c.l.b16 %v2239
    %v2335 = vunpack.c.h.b16 %v2239
    %v2336 = vunpack.c.l.b16 %v2240
    %v2337 = vunpack.c.h.b16 %v2240
    %v2338 = vunpack.c.l.b16 %v2241
    %v2339 = vunpack.c.h.b16 %v2241
    %v2340 = vunpack.c.l.b16 %v2242
    %v2341 = vunpack.c.h.b16 %v2242
    %v2342 = vunpack.c.l.b16 %v2243
    %v2343 = vunpack.c.h.b16 %v2243
    %v2344 = vunpack.c.l.b16 %v2244
    %v2345 = vunpack.c.h.b16 %v2244
    %v2346 = vunpack.c.l.b16 %v2245
    %v2347 = vunpack.c.h.b16 %v2245
    %v2348 = vunpack.c.l.b16 %v2246
    %v2349 = vunpack.c.h.b16 %v2246
    %v2350 = vunpack.c.l.b16 %v2247
    %v2351 = vunpack.c.h.b16 %v2247
    %v2352 = vunpack.c.l.b16 %v2248
    %v2353 = vunpack.c.h.b16 %v2248
    %v2354 = vunpack.c.l.b16 %v2249
    %v2355 = vunpack.c.h.b16 %v2249
    %v2356 = vpack.c.b16 %v2296, %v2292
    %v2357 = vpack.c.b16 %v2297, %v2293
    %v2358 = vpack.c.b16 %v2298, %v2294
    %v2359 = vpack.c.b16 %v2299, %v2295
    %v2360 = vpack.c.b16 %v2304, %v2300
    %v2361 = vpack.c.b16 %v2305, %v2301
    %v2362 = vpack.c.b16 %v2306, %v2302
    %v2363 = vpack.c.b16 %v2307, %v2303
    %v2364 = vpack.c.b16 %v2312, %v2308
    %v2365 = vpack.c.b16 %v2313, %v2309
    %v2366 = vpack.c.b16 %v2314, %v2310
    %v2367 = vpack.c.b16 %v2315, %v2311
    %v2368 = vpack.c.b16 %v2320, %v2316
    %v2369 = vpack.c.b16 %v2321, %v2317
    %v2370 = vpack.c.b16 %v2322, %v2318
    %v2371 = vpack.c.b16 %v2323, %v2319
    %v2372 = vpack.c.b16 %v2328, %v2324
    %v2373 = vpack.c.b16 %v2329, %v2325
    %v2374 = vpack.c.b16 %v2330, %v2326
    %v2375 = vpack.c.b16 %v2331, %v2327
    %v2376 = vpack.c.b16 %v2336, %v2332
    %v2377 = vpack.c.b16 %v2337, %v2333
    %v2378 = vpack.c.b16 %v2338, %v2334
    %v2379 = vpack.c.b16 %v2339, %v2335
    %v2380 = vpack.c.b16 %v2344, %v2340
    %v2381 = vpack.c.b16 %v2345, %v2341
    %v2382 = vpack.c.b16 %v2346, %v2342
    %v2383 = vpack.c.b16 %v2347, %v2343
    %v2384 = vpack.c.b16 %v2352, %v2348
    %v2385 = vpack.c.b16 %v2353, %v2349
    %v2386 = vpack.c.b16 %v2354, %v2350
    %v2387 = vpack.c.b16 %v2355, %v2351
    %2420 = vmatpush.bf16.msra.mxu0 %v2384
    %2421 = vmatpush.bf16.msra.mxu0 %v2380
    %2422 = vmatpush.bf16.msra.mxu0 %v2376
    %2423 = vmatpush.bf16.msra.mxu0 %v2372
    %2424 = vmatpush.bf16.msra.mxu0 %v2368
    %2425 = vmatpush.bf16.msra.mxu0 %v2364
    %2426 = vmatpush.bf16.msra.mxu0 %v2360
    %2427 = vmatpush.bf16.msra.mxu0 %v2356
    %2428 = vmatmul.bf16.gmra.mxu0 %v2217
    %v2429 = vpop.f32.mrf.mxu0
    %v2430 = vadd.f32 %v2252, %v2429
    %v2431 = vpop.f32.mrf.mxu0
    %v2432 = vadd.f32 %v2252, %v2431
    %2433 = vdwg.mxu0
    %2434 = vmatpush.bf16.msra.mxu0 %v2385
    %2435 = vmatpush.bf16.msra.mxu0 %v2381
    %2436 = vmatpush.bf16.msra.mxu0 %v2377
    %2437 = vmatpush.bf16.msra.mxu0 %v2373
    %2438 = vmatpush.bf16.msra.mxu0 %v2369
    %2439 = vmatpush.bf16.msra.mxu0 %v2365
    %2440 = vmatpush.bf16.msra.mxu0 %v2361
    %2441 = vmatpush.bf16.msra.mxu0 %v2357
    %2442 = vmatmul.bf16.gmra.mxu0 %v2217
    %v2443 = vpop.f32.mrf.mxu0
    %v2444 = vadd.f32 %v2253, %v2443
    %v2445 = vpop.f32.mrf.mxu0
    %v2446 = vadd.f32 %v2253, %v2445
    %2447 = vdwg.mxu0
    %2448 = vmatpush.bf16.msra.mxu0 %v2386
    %2449 = vmatpush.bf16.msra.mxu0 %v2382
    %2450 = vmatpush.bf16.msra.mxu0 %v2378
    %2451 = vmatpush.bf16.msra.mxu0 %v2374
    %2452 = vmatpush.bf16.msra.mxu0 %v2370
    %2453 = vmatpush.bf16.msra.mxu0 %v2366
    %2454 = vmatpush.bf16.msra.mxu0 %v2362
    %2455 = vmatpush.bf16.msra.mxu0 %v2358
    %2456 = vmatmul.bf16.gmra.mxu0 %v2217
    %v2457 = vpop.f32.mrf.mxu0
    %v2458 = vadd.f32 %v2254, %v2457
    %v2459 = vpop.f32.mrf.mxu0
    %v2460 = vadd.f32 %v2254, %v2459
    %2461 = vdwg.mxu0
    %2462 = vmatpush.bf16.msra.mxu0 %v2387
    %2463 = vmatpush.bf16.msra.mxu0 %v2383
    %2464 = vmatpush.bf16.msra.mxu0 %v2379
    %2465 = vmatpush.bf16.msra.mxu0 %v2375
    %2466 = vmatpush.bf16.msra.mxu0 %v2371
    %2467 = vmatpush.bf16.msra.mxu0 %v2367
    %2468 = vmatpush.bf16.msra.mxu0 %v2363
    %2469 = vmatpush.bf16.msra.mxu0 %v2359
    %2470 = vmatmul.bf16.gmra.mxu0 %v2217
    %v2471 = vpop.f32.mrf.mxu0
    %v2472 = vadd.f32 %v2255, %v2471
    %v2473 = vpop.f32.mrf.mxu0
    %v2474 = vadd.f32 %v2255, %v2473
    %2475 = vdwg.mxu0
    %v2476 = vmax.f32 %v2430, 0.0
    %v2477 = vmax.f32 %v2444, 0.0
    %v2478 = vmax.f32 %v2458, 0.0
    %v2479 = vmax.f32 %v2472, 0.0
    %v2480 = vmax.f32 %v2432, 0.0
    %v2481 = vmax.f32 %v2446, 0.0
    %v2482 = vmax.f32 %v2460, 0.0
    %v2483 = vmax.f32 %v2474, 0.0
    %v2484 = vpack.c.bf16 %v2480, %v2476
    %v2485 = vpack.c.bf16 %v2481, %v2477
    %v2486 = vpack.c.bf16 %v2482, %v2478
    %v2487 = vpack.c.bf16 %v2483, %v2479
    %v2488 = vld [vmem:[#allocation7] sm:$0xff]
    %v2489 = vld [vmem:[#allocation7 + $0x8] sm:$0xff]
    %v2490 = vld [vmem:[#allocation7 + $0x10] sm:$0xff]
    %v2491 = vld [vmem:[#allocation7 + $0x18] sm:$0xf]
    %v2492 = vld [vmem:[#allocation7 + $0x1c] sm:$0xff]
    %v2493 = vld [vmem:[#allocation7 + $0x24] sm:$0xff]
    %v2494 = vld [vmem:[#allocation7 + $0x2c] sm:$0xff]
    %v2495 = vld [vmem:[#allocation7 + $0x34] sm:$0xf]
    %v2496 = vld [vmem:[#allocation7 + $0x38] sm:$0xff]
    %v2497 = vld [vmem:[#allocation7 + $0x40] sm:$0xff]
    %v2498 = vld [vmem:[#allocation7 + $0x48] sm:$0xff]
    %v2499 = vld [vmem:[#allocation7 + $0x50] sm:$0xf]
    %v2500 = vld [vmem:[#allocation7 + $0x54] sm:$0xff]
    %v2501 = vld [vmem:[#allocation7 + $0x5c] sm:$0xff]
    %v2502 = vld [vmem:[#allocation7 + $0x64] sm:$0xff]
    %v2503 = vld [vmem:[#allocation7 + $0x6c] sm:$0xf]
    %v2504 = vld [vmem:[#allocation7 + $0x70] sm:$0xff]
    %v2505 = vld [vmem:[#allocation7 + $0x78] sm:$0xff]
    %v2506 = vld [vmem:[#allocation7 + $0x80] sm:$0xff]
    %v2507 = vld [vmem:[#allocation7 + $0x88] sm:$0xf]
    %v2508 = vld [vmem:[#allocation7 + $0x8c] sm:$0xff]
    %v2509 = vld [vmem:[#allocation7 + $0x94] sm:$0xff]
    %v2510 = vld [vmem:[#allocation7 + $0x9c] sm:$0xff]
    %v2511 = vld [vmem:[#allocation7 + $0xa4] sm:$0xf]
    %v2512 = vld [vmem:[#allocation7 + $0xa8] sm:$0xff]
    %v2513 = vld [vmem:[#allocation7 + $0xb0] sm:$0xff]
    %v2514 = vld [vmem:[#allocation7 + $0xb8] sm:$0xff]
    %v2515 = vld [vmem:[#allocation7 + $0xc0] sm:$0xf]
    %v2516 = vld [vmem:[#allocation7 + $0xc4] sm:$0xff]
    %v2517 = vld [vmem:[#allocation7 + $0xcc] sm:$0xff]
    %v2518 = vld [vmem:[#allocation7 + $0xd4] sm:$0xff]
    %v2519 = vld [vmem:[#allocation7 + $0xdc] sm:$0xf]
    %v2520 = vld [vmem:[#allocation7 + $0xe0] sm:$0xff]
    %v2521 = vld [vmem:[#allocation7 + $0xe8] sm:$0xff]
    %v2522 = vld [vmem:[#allocation7 + $0xf0] sm:$0xff]
    %v2523 = vld [vmem:[#allocation7 + $0xf8] sm:$0xf]
    %v2524 = vld [vmem:[#allocation7 + $0xfc] sm:$0xff]
    %v2525 = vld [vmem:[#allocation7 + $0x104] sm:$0xff]
    %v2526 = vld [vmem:[#allocation7 + $0x10c] sm:$0xff]
    %v2527 = vld [vmem:[#allocation7 + $0x114] sm:$0xf]
    %v2528 = vld [vmem:[#allocation7 + $0x118] sm:$0xff]
    %v2529 = vld [vmem:[#allocation7 + $0x120] sm:$0xff]
    %v2530 = vld [vmem:[#allocation7 + $0x128] sm:$0xff]
    %v2531 = vld [vmem:[#allocation7 + $0x130] sm:$0xf]
    %v2532 = vld [vmem:[#allocation7 + $0x134] sm:$0xff]
    %v2533 = vld [vmem:[#allocation7 + $0x13c] sm:$0xff]
    %v2534 = vld [vmem:[#allocation7 + $0x144] sm:$0xff]
    %v2535 = vld [vmem:[#allocation7 + $0x14c] sm:$0xf]
    %v2536 = vld [vmem:[#allocation7 + $0x150] sm:$0xff]
    %v2537 = vld [vmem:[#allocation7 + $0x158] sm:$0xff]
    %v2538 = vld [vmem:[#allocation7 + $0x160] sm:$0xff]
    %v2539 = vld [vmem:[#allocation7 + $0x168] sm:$0xf]
    %v2540 = vld [vmem:[#allocation7 + $0x16c] sm:$0xff]
    %v2541 = vld [vmem:[#allocation7 + $0x174] sm:$0xff]
    %v2542 = vld [vmem:[#allocation7 + $0x17c] sm:$0xff]
    %v2543 = vld [vmem:[#allocation7 + $0x184] sm:$0xf]
    %v2544 = vld [vmem:[#allocation7 + $0x188] sm:$0xff]
    %v2545 = vld [vmem:[#allocation7 + $0x190] sm:$0xff]
    %v2546 = vld [vmem:[#allocation7 + $0x198] sm:$0xff]
    %v2547 = vld [vmem:[#allocation7 + $0x1a0] sm:$0xf]
    %v2548 = vld [vmem:[#allocation7 + $0x1a4] sm:$0xff]
    %v2549 = vld [vmem:[#allocation7 + $0x1ac] sm:$0xff]
    %v2550 = vld [vmem:[#allocation7 + $0x1b4] sm:$0xff]
    %v2551 = vld [vmem:[#allocation7 + $0x1bc] sm:$0xf]
    %v2552 = vld [vmem:[#allocation7 + $0x1c0] sm:$0xff]
    %v2553 = vld [vmem:[#allocation7 + $0x1c8] sm:$0xff]
    %v2554 = vld [vmem:[#allocation7 + $0x1d0] sm:$0xff]
    %v2555 = vld [vmem:[#allocation7 + $0x1d8] sm:$0xf]
    %v2556 = vld [vmem:[#allocation7 + $0x1dc] sm:$0xff]
    %v2557 = vld [vmem:[#allocation7 + $0x1e4] sm:$0xff]
    %v2558 = vld [vmem:[#allocation7 + $0x1ec] sm:$0xff]
    %v2559 = vld [vmem:[#allocation7 + $0x1f4] sm:$0xf]
    %v2560 = vld [vmem:[#allocation7 + $0x1f8] sm:$0xff]
    %v2561 = vld [vmem:[#allocation7 + $0x200] sm:$0xff]
    %v2562 = vld [vmem:[#allocation7 + $0x208] sm:$0xff]
    %v2563 = vld [vmem:[#allocation7 + $0x210] sm:$0xf]
    %v2564 = vld [vmem:[#allocation7 + $0x214] sm:$0xff]
    %v2565 = vld [vmem:[#allocation7 + $0x21c] sm:$0xff]
    %v2566 = vld [vmem:[#allocation7 + $0x224] sm:$0xff]
    %v2567 = vld [vmem:[#allocation7 + $0x22c] sm:$0xf]
    %v2568 = vld [vmem:[#allocation7 + $0x230] sm:$0xff]
    %v2569 = vld [vmem:[#allocation7 + $0x238] sm:$0xff]
    %v2570 = vld [vmem:[#allocation7 + $0x240] sm:$0xff]
    %v2571 = vld [vmem:[#allocation7 + $0x248] sm:$0xf]
    %v2572 = vld [vmem:[#allocation7 + $0x24c] sm:$0xff]
    %v2573 = vld [vmem:[#allocation7 + $0x254] sm:$0xff]
    %v2574 = vld [vmem:[#allocation7 + $0x25c] sm:$0xff]
    %v2575 = vld [vmem:[#allocation7 + $0x264] sm:$0xf]
    %v2576 = vld [vmem:[#allocation7 + $0x268] sm:$0xff]
    %v2577 = vld [vmem:[#allocation7 + $0x270] sm:$0xff]
    %v2578 = vld [vmem:[#allocation7 + $0x278] sm:$0xff]
    %v2579 = vld [vmem:[#allocation7 + $0x280] sm:$0xf]
    %v2580 = vld [vmem:[#allocation7 + $0x284] sm:$0xff]
    %v2581 = vld [vmem:[#allocation7 + $0x28c] sm:$0xff]
    %v2582 = vld [vmem:[#allocation7 + $0x294] sm:$0xff]
    %v2583 = vld [vmem:[#allocation7 + $0x29c] sm:$0xf]
    %v2584 = vld [vmem:[#allocation7 + $0x2a0] sm:$0xff]
    %v2585 = vld [vmem:[#allocation7 + $0x2a8] sm:$0xff]
    %v2586 = vld [vmem:[#allocation7 + $0x2b0] sm:$0xff]
    %v2587 = vld [vmem:[#allocation7 + $0x2b8] sm:$0xf]
    %v2588 = vld [vmem:[#allocation7 + $0x2bc] sm:$0xff]
    %v2589 = vld [vmem:[#allocation7 + $0x2c4] sm:$0xff]
    %v2590 = vld [vmem:[#allocation7 + $0x2cc] sm:$0xff]
    %v2591 = vld [vmem:[#allocation7 + $0x2d4] sm:$0xf]
    %v2592 = vld [vmem:[#allocation7 + $0x2d8] sm:$0xff]
    %v2593 = vld [vmem:[#allocation7 + $0x2e0] sm:$0xff]
    %v2594 = vld [vmem:[#allocation7 + $0x2e8] sm:$0xff]
    %v2595 = vld [vmem:[#allocation7 + $0x2f0] sm:$0xf]
    %v2596 = vld [vmem:[#allocation7 + $0x2f4] sm:$0xff]
    %v2597 = vld [vmem:[#allocation7 + $0x2fc] sm:$0xff]
    %v2598 = vld [vmem:[#allocation7 + $0x304] sm:$0xff]
    %v2599 = vld [vmem:[#allocation7 + $0x30c] sm:$0xf]
    %v2600 = vld [vmem:[#allocation7 + $0x310] sm:$0xff]
    %v2601 = vld [vmem:[#allocation7 + $0x318] sm:$0xff]
    %v2602 = vld [vmem:[#allocation7 + $0x320] sm:$0xff]
    %v2603 = vld [vmem:[#allocation7 + $0x328] sm:$0xf]
    %v2604 = vld [vmem:[#allocation7 + $0x32c] sm:$0xff]
    %v2605 = vld [vmem:[#allocation7 + $0x334] sm:$0xff]
    %v2606 = vld [vmem:[#allocation7 + $0x33c] sm:$0xff]
    %v2607 = vld [vmem:[#allocation7 + $0x344] sm:$0xf]
    %v2608 = vld [vmem:[#allocation7 + $0x348] sm:$0xff]
    %v2609 = vld [vmem:[#allocation7 + $0x350] sm:$0xff]
    %v2610 = vld [vmem:[#allocation7 + $0x358] sm:$0xff]
    %v2611 = vld [vmem:[#allocation7 + $0x360] sm:$0xf]
    %v2612 = vld [vmem:[#allocation7 + $0x364] sm:$0xff]
    %v2613 = vld [vmem:[#allocation7 + $0x36c] sm:$0xff]
    %v2614 = vld [vmem:[#allocation7 + $0x374] sm:$0xff]
    %v2615 = vld [vmem:[#allocation7 + $0x37c] sm:$0xf]
    %v2616 = vld [vmem:[#allocation7 + $0x380] sm:$0xff]
    %v2617 = vld [vmem:[#allocation7 + $0x388] sm:$0xff]
    %v2618 = vld [vmem:[#allocation7 + $0x390] sm:$0xff]
    %v2619 = vld [vmem:[#allocation7 + $0x398] sm:$0xf]
    %v2620 = vld [vmem:[#allocation7 + $0x39c] sm:$0xff]
    %v2621 = vld [vmem:[#allocation7 + $0x3a4] sm:$0xff]
    %v2622 = vld [vmem:[#allocation7 + $0x3ac] sm:$0xff]
    %v2623 = vld [vmem:[#allocation7 + $0x3b4] sm:$0xf]
    %v2624 = vld [vmem:[#allocation7 + $0x3b8] sm:$0xff]
    %v2625 = vld [vmem:[#allocation7 + $0x3c0] sm:$0xff]
    %v2626 = vld [vmem:[#allocation7 + $0x3c8] sm:$0xff]
    %v2627 = vld [vmem:[#allocation7 + $0x3d0] sm:$0xf]
    %v2628 = vld [vmem:[#allocation7 + $0x3d4] sm:$0xff]
    %v2629 = vld [vmem:[#allocation7 + $0x3dc] sm:$0xff]
    %v2630 = vld [vmem:[#allocation7 + $0x3e4] sm:$0xff]
    %v2631 = vld [vmem:[#allocation7 + $0x3ec] sm:$0xf]
    %v2632 = vld [vmem:[#allocation7 + $0x3f0] sm:$0xff]
    %v2633 = vld [vmem:[#allocation7 + $0x3f8] sm:$0xff]
    %v2634 = vld [vmem:[#allocation7 + $0x400] sm:$0xff]
    %v2635 = vld [vmem:[#allocation7 + $0x408] sm:$0xf]
    %v2636 = vld [vmem:[#allocation7 + $0x40c] sm:$0xff]
    %v2637 = vld [vmem:[#allocation7 + $0x414] sm:$0xff]
    %v2638 = vld [vmem:[#allocation7 + $0x41c] sm:$0xff]
    %v2639 = vld [vmem:[#allocation7 + $0x424] sm:$0xf]
    %v2640 = vld [vmem:[#allocation7 + $0x428] sm:$0xff]
    %v2641 = vld [vmem:[#allocation7 + $0x430] sm:$0xff]
    %v2642 = vld [vmem:[#allocation7 + $0x438] sm:$0xff]
    %v2643 = vld [vmem:[#allocation7 + $0x440] sm:$0xf]
    %v2644 = vld [vmem:[#allocation7 + $0x444] sm:$0xff]
    %v2645 = vld [vmem:[#allocation7 + $0x44c] sm:$0xff]
    %v2646 = vld [vmem:[#allocation7 + $0x454] sm:$0xff]
    %v2647 = vld [vmem:[#allocation7 + $0x45c] sm:$0xf]
    %v2648 = vld [vmem:[#allocation7 + $0x460] sm:$0xff]
    %v2649 = vld [vmem:[#allocation7 + $0x468] sm:$0xff]
    %v2650 = vld [vmem:[#allocation7 + $0x470] sm:$0xff]
    %v2651 = vld [vmem:[#allocation7 + $0x478] sm:$0xf]
    %v2652 = vld [vmem:[#allocation7 + $0x47c] sm:$0xff]
    %v2653 = vld [vmem:[#allocation7 + $0x484] sm:$0xff]
    %v2654 = vld [vmem:[#allocation7 + $0x48c] sm:$0xff]
    %v2655 = vld [vmem:[#allocation7 + $0x494] sm:$0xf]
    %v2656 = vld [vmem:[#allocation7 + $0x498] sm:$0xff]
    %v2657 = vld [vmem:[#allocation7 + $0x4a0] sm:$0xff]
    %v2658 = vld [vmem:[#allocation7 + $0x4a8] sm:$0xff]
    %v2659 = vld [vmem:[#allocation7 + $0x4b0] sm:$0xf]
    %v2660 = vld [vmem:[#allocation7 + $0x4b4] sm:$0xff]
    %v2661 = vld [vmem:[#allocation7 + $0x4bc] sm:$0xff]
    %v2662 = vld [vmem:[#allocation7 + $0x4c4] sm:$0xff]
    %v2663 = vld [vmem:[#allocation7 + $0x4cc] sm:$0xf]
    %v2664 = vld [vmem:[#allocation7 + $0x4d0] sm:$0xff]
    %v2665 = vld [vmem:[#allocation7 + $0x4d8] sm:$0xff]
    %v2666 = vld [vmem:[#allocation7 + $0x4e0] sm:$0xff]
    %v2667 = vld [vmem:[#allocation7 + $0x4e8] sm:$0xf]
    %v2668 = vld [vmem:[#allocation7 + $0x4ec] sm:$0xff]
    %v2669 = vld [vmem:[#allocation7 + $0x4f4] sm:$0xff]
    %v2670 = vld [vmem:[#allocation7 + $0x4fc] sm:$0xff]
    %v2671 = vld [vmem:[#allocation7 + $0x504] sm:$0xf]
    %v2672 = vld [vmem:[#allocation7 + $0x508] sm:$0xff]
    %v2673 = vld [vmem:[#allocation7 + $0x510] sm:$0xff]
    %v2674 = vld [vmem:[#allocation7 + $0x518] sm:$0xff]
    %v2675 = vld [vmem:[#allocation7 + $0x520] sm:$0xf]
    %v2676 = vld [vmem:[#allocation7 + $0x524] sm:$0xff]
    %v2677 = vld [vmem:[#allocation7 + $0x52c] sm:$0xff]
    %v2678 = vld [vmem:[#allocation7 + $0x534] sm:$0xff]
    %v2679 = vld [vmem:[#allocation7 + $0x53c] sm:$0xf]
    %v2680 = vld [vmem:[#allocation7 + $0x540] sm:$0xff]
    %v2681 = vld [vmem:[#allocation7 + $0x548] sm:$0xff]
    %v2682 = vld [vmem:[#allocation7 + $0x550] sm:$0xff]
    %v2683 = vld [vmem:[#allocation7 + $0x558] sm:$0xf]
    %v2684 = vld [vmem:[#allocation7 + $0x55c] sm:$0xff]
    %v2685 = vld [vmem:[#allocation7 + $0x564] sm:$0xff]
    %v2686 = vld [vmem:[#allocation7 + $0x56c] sm:$0xff]
    %v2687 = vld [vmem:[#allocation7 + $0x574] sm:$0xf]
    %v2688 = vld [vmem:[#allocation7 + $0x578] sm:$0xff]
    %v2689 = vld [vmem:[#allocation7 + $0x580] sm:$0xff]
    %v2690 = vld [vmem:[#allocation7 + $0x588] sm:$0xff]
    %v2691 = vld [vmem:[#allocation7 + $0x590] sm:$0xf]
    %v2692 = vld [vmem:[#allocation7 + $0x594] sm:$0xff]
    %v2693 = vld [vmem:[#allocation7 + $0x59c] sm:$0xff]
    %v2694 = vld [vmem:[#allocation7 + $0x5a4] sm:$0xff]
    %v2695 = vld [vmem:[#allocation7 + $0x5ac] sm:$0xf]
    %v2696 = vld [vmem:[#allocation7 + $0x5b0] sm:$0xff]
    %v2697 = vld [vmem:[#allocation7 + $0x5b8] sm:$0xff]
    %v2698 = vld [vmem:[#allocation7 + $0x5c0] sm:$0xff]
    %v2699 = vld [vmem:[#allocation7 + $0x5c8] sm:$0xf]
    %v2700 = vld [vmem:[#allocation7 + $0x5cc] sm:$0xff]
    %v2701 = vld [vmem:[#allocation7 + $0x5d4] sm:$0xff]
    %v2702 = vld [vmem:[#allocation7 + $0x5dc] sm:$0xff]
    %v2703 = vld [vmem:[#allocation7 + $0x5e4] sm:$0xf]
    %v2704 = vld [vmem:[#allocation7 + $0x5e8] sm:$0xff]
    %v2705 = vld [vmem:[#allocation7 + $0x5f0] sm:$0xff]
    %v2706 = vld [vmem:[#allocation7 + $0x5f8] sm:$0xff]
    %v2707 = vld [vmem:[#allocation7 + $0x600] sm:$0xf]
    %v2708 = vld [vmem:[#allocation7 + $0x604] sm:$0xff]
    %v2709 = vld [vmem:[#allocation7 + $0x60c] sm:$0xff]
    %v2710 = vld [vmem:[#allocation7 + $0x614] sm:$0xff]
    %v2711 = vld [vmem:[#allocation7 + $0x61c] sm:$0xf]
    %v2712 = vld [vmem:[#allocation7 + $0x620] sm:$0xff]
    %v2713 = vld [vmem:[#allocation7 + $0x628] sm:$0xff]
    %v2714 = vld [vmem:[#allocation7 + $0x630] sm:$0xff]
    %v2715 = vld [vmem:[#allocation7 + $0x638] sm:$0xf]
    %v2716 = vld [vmem:[#allocation7 + $0x63c] sm:$0xff]
    %v2717 = vld [vmem:[#allocation7 + $0x644] sm:$0xff]
    %v2718 = vld [vmem:[#allocation7 + $0x64c] sm:$0xff]
    %v2719 = vld [vmem:[#allocation7 + $0x654] sm:$0xf]
    %v2720 = vld [vmem:[#allocation7 + $0x658] sm:$0xff]
    %v2721 = vld [vmem:[#allocation7 + $0x660] sm:$0xff]
    %v2722 = vld [vmem:[#allocation7 + $0x668] sm:$0xff]
    %v2723 = vld [vmem:[#allocation7 + $0x670] sm:$0xf]
    %v2724 = vld [vmem:[#allocation7 + $0x674] sm:$0xff]
    %v2725 = vld [vmem:[#allocation7 + $0x67c] sm:$0xff]
    %v2726 = vld [vmem:[#allocation7 + $0x684] sm:$0xff]
    %v2727 = vld [vmem:[#allocation7 + $0x68c] sm:$0xf]
    %v2728 = vld [vmem:[#allocation7 + $0x690] sm:$0xff]
    %v2729 = vld [vmem:[#allocation7 + $0x698] sm:$0xff]
    %v2730 = vld [vmem:[#allocation7 + $0x6a0] sm:$0xff]
    %v2731 = vld [vmem:[#allocation7 + $0x6a8] sm:$0xf]
    %v2732 = vld [vmem:[#allocation7 + $0x6ac] sm:$0xff]
    %v2733 = vld [vmem:[#allocation7 + $0x6b4] sm:$0xff]
    %v2734 = vld [vmem:[#allocation7 + $0x6bc] sm:$0xff]
    %v2735 = vld [vmem:[#allocation7 + $0x6c4] sm:$0xf]
    %v2736 = vld [vmem:[#allocation7 + $0x6c8] sm:$0xff]
    %v2737 = vld [vmem:[#allocation7 + $0x6d0] sm:$0xff]
    %v2738 = vld [vmem:[#allocation7 + $0x6d8] sm:$0xff]
    %v2739 = vld [vmem:[#allocation7 + $0x6e0] sm:$0xf]
    %v2740 = vld [vmem:[#allocation7 + $0x6e4] sm:$0xff]
    %v2741 = vld [vmem:[#allocation7 + $0x6ec] sm:$0xff]
    %v2742 = vld [vmem:[#allocation7 + $0x6f4] sm:$0xff]
    %v2743 = vld [vmem:[#allocation7 + $0x6fc] sm:$0xf]
    %v2744 = vld [vmem:[%s8] sm:$0xff]
    %v2746 = vperm.slane %v2744, 0
    %v2747 = vperm.slane %v2744, 1
    %v2748 = vperm.slane %v2744, 2
    %v2749 = vperm.slane %v2744, 3
    %v2750 = vperm.slane %v2744, 4
    %v2751 = vperm.slane %v2744, 5
    %v2752 = vperm.slane %v2744, 6
    %v3016 = vunpack.c.l.b16 %v2488
    %v3017 = vunpack.c.h.b16 %v2488
    %v3018 = vunpack.c.l.b16 %v2489
    %v3019 = vunpack.c.h.b16 %v2489
    %v3020 = vunpack.c.l.b16 %v2490
    %v3021 = vunpack.c.h.b16 %v2490
    %v3022 = vunpack.c.l.b16 %v2491
    %v3023 = vunpack.c.l.b16 %v2492
    %v3024 = vunpack.c.h.b16 %v2492
    %v3025 = vunpack.c.l.b16 %v2493
    %v3026 = vunpack.c.h.b16 %v2493
    %v3027 = vunpack.c.l.b16 %v2494
    %v3028 = vunpack.c.h.b16 %v2494
    %v3029 = vunpack.c.l.b16 %v2495
    %v3030 = vunpack.c.l.b16 %v2496
    %v3031 = vunpack.c.h.b16 %v2496
    %v3032 = vunpack.c.l.b16 %v2497
    %v3033 = vunpack.c.h.b16 %v2497
    %v3034 = vunpack.c.l.b16 %v2498
    %v3035 = vunpack.c.h.b16 %v2498
    %v3036 = vunpack.c.l.b16 %v2499
    %v3037 = vunpack.c.l.b16 %v2500
    %v3038 = vunpack.c.h.b16 %v2500
    %v3039 = vunpack.c.l.b16 %v2501
    %v3040 = vunpack.c.h.b16 %v2501
    %v3041 = vunpack.c.l.b16 %v2502
    %v3042 = vunpack.c.h.b16 %v2502
    %v3043 = vunpack.c.l.b16 %v2503
    %v3044 = vunpack.c.l.b16 %v2504
    %v3045 = vunpack.c.h.b16 %v2504
    %v3046 = vunpack.c.l.b16 %v2505
    %v3047 = vunpack.c.h.b16 %v2505
    %v3048 = vunpack.c.l.b16 %v2506
    %v3049 = vunpack.c.h.b16 %v2506
    %v3050 = vunpack.c.l.b16 %v2507
    %v3051 = vunpack.c.l.b16 %v2508
    %v3052 = vunpack.c.h.b16 %v2508
    %v3053 = vunpack.c.l.b16 %v2509
    %v3054 = vunpack.c.h.b16 %v2509
    %v3055 = vunpack.c.l.b16 %v2510
    %v3056 = vunpack.c.h.b16 %v2510
    %v3057 = vunpack.c.l.b16 %v2511
    %v3058 = vunpack.c.l.b16 %v2512
    %v3059 = vunpack.c.h.b16 %v2512
    %v3060 = vunpack.c.l.b16 %v2513
    %v3061 = vunpack.c.h.b16 %v2513
    %v3062 = vunpack.c.l.b16 %v2514
    %v3063 = vunpack.c.h.b16 %v2514
    %v3064 = vunpack.c.l.b16 %v2515
    %v3065 = vunpack.c.l.b16 %v2516
    %v3066 = vunpack.c.h.b16 %v2516
    %v3067 = vunpack.c.l.b16 %v2517
    %v3068 = vunpack.c.h.b16 %v2517
    %v3069 = vunpack.c.l.b16 %v2518
    %v3070 = vunpack.c.h.b16 %v2518
    %v3071 = vunpack.c.l.b16 %v2519
    %v3072 = vunpack.c.l.b16 %v2520
    %v3073 = vunpack.c.h.b16 %v2520
    %v3074 = vunpack.c.l.b16 %v2521
    %v3075 = vunpack.c.h.b16 %v2521
    %v3076 = vunpack.c.l.b16 %v2522
    %v3077 = vunpack.c.h.b16 %v2522
    %v3078 = vunpack.c.l.b16 %v2523
    %v3079 = vunpack.c.l.b16 %v2524
    %v3080 = vunpack.c.h.b16 %v2524
    %v3081 = vunpack.c.l.b16 %v2525
    %v3082 = vunpack.c.h.b16 %v2525
    %v3083 = vunpack.c.l.b16 %v2526
    %v3084 = vunpack.c.h.b16 %v2526
    %v3085 = vunpack.c.l.b16 %v2527
    %v3086 = vunpack.c.l.b16 %v2528
    %v3087 = vunpack.c.h.b16 %v2528
    %v3088 = vunpack.c.l.b16 %v2529
    %v3089 = vunpack.c.h.b16 %v2529
    %v3090 = vunpack.c.l.b16 %v2530
    %v3091 = vunpack.c.h.b16 %v2530
    %v3092 = vunpack.c.l.b16 %v2531
    %v3093 = vunpack.c.l.b16 %v2532
    %v3094 = vunpack.c.h.b16 %v2532
    %v3095 = vunpack.c.l.b16 %v2533
    %v3096 = vunpack.c.h.b16 %v2533
    %v3097 = vunpack.c.l.b16 %v2534
    %v3098 = vunpack.c.h.b16 %v2534
    %v3099 = vunpack.c.l.b16 %v2535
    %v3100 = vunpack.c.l.b16 %v2536
    %v3101 = vunpack.c.h.b16 %v2536
    %v3102 = vunpack.c.l.b16 %v2537
    %v3103 = vunpack.c.h.b16 %v2537
    %v3104 = vunpack.c.l.b16 %v2538
    %v3105 = vunpack.c.h.b16 %v2538
    %v3106 = vunpack.c.l.b16 %v2539
    %v3107 = vunpack.c.l.b16 %v2540
    %v3108 = vunpack.c.h.b16 %v2540
    %v3109 = vunpack.c.l.b16 %v2541
    %v3110 = vunpack.c.h.b16 %v2541
    %v3111 = vunpack.c.l.b16 %v2542
    %v3112 = vunpack.c.h.b16 %v2542
    %v3113 = vunpack.c.l.b16 %v2543
    %v3114 = vunpack.c.l.b16 %v2544
    %v3115 = vunpack.c.h.b16 %v2544
    %v3116 = vunpack.c.l.b16 %v2545
    %v3117 = vunpack.c.h.b16 %v2545
    %v3118 = vunpack.c.l.b16 %v2546
    %v3119 = vunpack.c.h.b16 %v2546
    %v3120 = vunpack.c.l.b16 %v2547
    %v3121 = vunpack.c.l.b16 %v2548
    %v3122 = vunpack.c.h.b16 %v2548
    %v3123 = vunpack.c.l.b16 %v2549
    %v3124 = vunpack.c.h.b16 %v2549
    %v3125 = vunpack.c.l.b16 %v2550
    %v3126 = vunpack.c.h.b16 %v2550
    %v3127 = vunpack.c.l.b16 %v2551
    %v3128 = vunpack.c.l.b16 %v2552
    %v3129 = vunpack.c.h.b16 %v2552
    %v3130 = vunpack.c.l.b16 %v2553
    %v3131 = vunpack.c.h.b16 %v2553
    %v3132 = vunpack.c.l.b16 %v2554
    %v3133 = vunpack.c.h.b16 %v2554
    %v3134 = vunpack.c.l.b16 %v2555
    %v3135 = vunpack.c.l.b16 %v2556
    %v3136 = vunpack.c.h.b16 %v2556
    %v3137 = vunpack.c.l.b16 %v2557
    %v3138 = vunpack.c.h.b16 %v2557
    %v3139 = vunpack.c.l.b16 %v2558
    %v3140 = vunpack.c.h.b16 %v2558
    %v3141 = vunpack.c.l.b16 %v2559
    %v3142 = vunpack.c.l.b16 %v2560
    %v3143 = vunpack.c.h.b16 %v2560
    %v3144 = vunpack.c.l.b16 %v2561
    %v3145 = vunpack.c.h.b16 %v2561
    %v3146 = vunpack.c.l.b16 %v2562
    %v3147 = vunpack.c.h.b16 %v2562
    %v3148 = vunpack.c.l.b16 %v2563
    %v3149 = vunpack.c.l.b16 %v2564
    %v3150 = vunpack.c.h.b16 %v2564
    %v3151 = vunpack.c.l.b16 %v2565
    %v3152 = vunpack.c.h.b16 %v2565
    %v3153 = vunpack.c.l.b16 %v2566
    %v3154 = vunpack.c.h.b16 %v2566
    %v3155 = vunpack.c.l.b16 %v2567
    %v3156 = vunpack.c.l.b16 %v2568
    %v3157 = vunpack.c.h.b16 %v2568
    %v3158 = vunpack.c.l.b16 %v2569
    %v3159 = vunpack.c.h.b16 %v2569
    %v3160 = vunpack.c.l.b16 %v2570
    %v3161 = vunpack.c.h.b16 %v2570
    %v3162 = vunpack.c.l.b16 %v2571
    %v3163 = vunpack.c.l.b16 %v2572
    %v3164 = vunpack.c.h.b16 %v2572
    %v3165 = vunpack.c.l.b16 %v2573
    %v3166 = vunpack.c.h.b16 %v2573
    %v3167 = vunpack.c.l.b16 %v2574
    %v3168 = vunpack.c.h.b16 %v2574
    %v3169 = vunpack.c.l.b16 %v2575
    %v3170 = vunpack.c.l.b16 %v2576
    %v3171 = vunpack.c.h.b16 %v2576
    %v3172 = vunpack.c.l.b16 %v2577
    %v3173 = vunpack.c.h.b16 %v2577
    %v3174 = vunpack.c.l.b16 %v2578
    %v3175 = vunpack.c.h.b16 %v2578
    %v3176 = vunpack.c.l.b16 %v2579
    %v3177 = vunpack.c.l.b16 %v2580
    %v3178 = vunpack.c.h.b16 %v2580
    %v3179 = vunpack.c.l.b16 %v2581
    %v3180 = vunpack.c.h.b16 %v2581
    %v3181 = vunpack.c.l.b16 %v2582
    %v3182 = vunpack.c.h.b16 %v2582
    %v3183 = vunpack.c.l.b16 %v2583
    %v3184 = vunpack.c.l.b16 %v2584
    %v3185 = vunpack.c.h.b16 %v2584
    %v3186 = vunpack.c.l.b16 %v2585
    %v3187 = vunpack.c.h.b16 %v2585
    %v3188 = vunpack.c.l.b16 %v2586
    %v3189 = vunpack.c.h.b16 %v2586
    %v3190 = vunpack.c.l.b16 %v2587
    %v3191 = vunpack.c.l.b16 %v2588
    %v3192 = vunpack.c.h.b16 %v2588
    %v3193 = vunpack.c.l.b16 %v2589
    %v3194 = vunpack.c.h.b16 %v2589
    %v3195 = vunpack.c.l.b16 %v2590
    %v3196 = vunpack.c.h.b16 %v2590
    %v3197 = vunpack.c.l.b16 %v2591
    %v3198 = vunpack.c.l.b16 %v2592
    %v3199 = vunpack.c.h.b16 %v2592
    %v3200 = vunpack.c.l.b16 %v2593
    %v3201 = vunpack.c.h.b16 %v2593
    %v3202 = vunpack.c.l.b16 %v2594
    %v3203 = vunpack.c.h.b16 %v2594
    %v3204 = vunpack.c.l.b16 %v2595
    %v3205 = vunpack.c.l.b16 %v2596
    %v3206 = vunpack.c.h.b16 %v2596
    %v3207 = vunpack.c.l.b16 %v2597
    %v3208 = vunpack.c.h.b16 %v2597
    %v3209 = vunpack.c.l.b16 %v2598
    %v3210 = vunpack.c.h.b16 %v2598
    %v3211 = vunpack.c.l.b16 %v2599
    %v3212 = vunpack.c.l.b16 %v2600
    %v3213 = vunpack.c.h.b16 %v2600
    %v3214 = vunpack.c.l.b16 %v2601
    %v3215 = vunpack.c.h.b16 %v2601
    %v3216 = vunpack.c.l.b16 %v2602
    %v3217 = vunpack.c.h.b16 %v2602
    %v3218 = vunpack.c.l.b16 %v2603
    %v3219 = vunpack.c.l.b16 %v2604
    %v3220 = vunpack.c.h.b16 %v2604
    %v3221 = vunpack.c.l.b16 %v2605
    %v3222 = vunpack.c.h.b16 %v2605
    %v3223 = vunpack.c.l.b16 %v2606
    %v3224 = vunpack.c.h.b16 %v2606
    %v3225 = vunpack.c.l.b16 %v2607
    %v3226 = vunpack.c.l.b16 %v2608
    %v3227 = vunpack.c.h.b16 %v2608
    %v3228 = vunpack.c.l.b16 %v2609
    %v3229 = vunpack.c.h.b16 %v2609
    %v3230 = vunpack.c.l.b16 %v2610
    %v3231 = vunpack.c.h.b16 %v2610
    %v3232 = vunpack.c.l.b16 %v2611
    %v3233 = vunpack.c.l.b16 %v2612
    %v3234 = vunpack.c.h.b16 %v2612
    %v3235 = vunpack.c.l.b16 %v2613
    %v3236 = vunpack.c.h.b16 %v2613
    %v3237 = vunpack.c.l.b16 %v2614
    %v3238 = vunpack.c.h.b16 %v2614
    %v3239 = vunpack.c.l.b16 %v2615
    %v3240 = vunpack.c.l.b16 %v2616
    %v3241 = vunpack.c.h.b16 %v2616
    %v3242 = vunpack.c.l.b16 %v2617
    %v3243 = vunpack.c.h.b16 %v2617
    %v3244 = vunpack.c.l.b16 %v2618
    %v3245 = vunpack.c.h.b16 %v2618
    %v3246 = vunpack.c.l.b16 %v2619
    %v3247 = vunpack.c.l.b16 %v2620
    %v3248 = vunpack.c.h.b16 %v2620
    %v3249 = vunpack.c.l.b16 %v2621
    %v3250 = vunpack.c.h.b16 %v2621
    %v3251 = vunpack.c.l.b16 %v2622
    %v3252 = vunpack.c.h.b16 %v2622
    %v3253 = vunpack.c.l.b16 %v2623
    %v3254 = vunpack.c.l.b16 %v2624
    %v3255 = vunpack.c.h.b16 %v2624
    %v3256 = vunpack.c.l.b16 %v2625
    %v3257 = vunpack.c.h.b16 %v2625
    %v3258 = vunpack.c.l.b16 %v2626
    %v3259 = vunpack.c.h.b16 %v2626
    %v3260 = vunpack.c.l.b16 %v2627
    %v3261 = vunpack.c.l.b16 %v2628
    %v3262 = vunpack.c.h.b16 %v2628
    %v3263 = vunpack.c.l.b16 %v2629
    %v3264 = vunpack.c.h.b16 %v2629
    %v3265 = vunpack.c.l.b16 %v2630
    %v3266 = vunpack.c.h.b16 %v2630
    %v3267 = vunpack.c.l.b16 %v2631
    %v3268 = vunpack.c.l.b16 %v2632
    %v3269 = vunpack.c.h.b16 %v2632
    %v3270 = vunpack.c.l.b16 %v2633
    %v3271 = vunpack.c.h.b16 %v2633
    %v3272 = vunpack.c.l.b16 %v2634
    %v3273 = vunpack.c.h.b16 %v2634
    %v3274 = vunpack.c.l.b16 %v2635
    %v3275 = vunpack.c.l.b16 %v2636
    %v3276 = vunpack.c.h.b16 %v2636
    %v3277 = vunpack.c.l.b16 %v2637
    %v3278 = vunpack.c.h.b16 %v2637
    %v3279 = vunpack.c.l.b16 %v2638
    %v3280 = vunpack.c.h.b16 %v2638
    %v3281 = vunpack.c.l.b16 %v2639
    %v3282 = vunpack.c.l.b16 %v2640
    %v3283 = vunpack.c.h.b16 %v2640
    %v3284 = vunpack.c.l.b16 %v2641
    %v3285 = vunpack.c.h.b16 %v2641
    %v3286 = vunpack.c.l.b16 %v2642
    %v3287 = vunpack.c.h.b16 %v2642
    %v3288 = vunpack.c.l.b16 %v2643
    %v3289 = vunpack.c.l.b16 %v2644
    %v3290 = vunpack.c.h.b16 %v2644
    %v3291 = vunpack.c.l.b16 %v2645
    %v3292 = vunpack.c.h.b16 %v2645
    %v3293 = vunpack.c.l.b16 %v2646
    %v3294 = vunpack.c.h.b16 %v2646
    %v3295 = vunpack.c.l.b16 %v2647
    %v3296 = vunpack.c.l.b16 %v2648
    %v3297 = vunpack.c.h.b16 %v2648
    %v3298 = vunpack.c.l.b16 %v2649
    %v3299 = vunpack.c.h.b16 %v2649
    %v3300 = vunpack.c.l.b16 %v2650
    %v3301 = vunpack.c.h.b16 %v2650
    %v3302 = vunpack.c.l.b16 %v2651
    %v3303 = vunpack.c.l.b16 %v2652
    %v3304 = vunpack.c.h.b16 %v2652
    %v3305 = vunpack.c.l.b16 %v2653
    %v3306 = vunpack.c.h.b16 %v2653
    %v3307 = vunpack.c.l.b16 %v2654
    %v3308 = vunpack.c.h.b16 %v2654
    %v3309 = vunpack.c.l.b16 %v2655
    %v3310 = vunpack.c.l.b16 %v2656
    %v3311 = vunpack.c.h.b16 %v2656
    %v3312 = vunpack.c.l.b16 %v2657
    %v3313 = vunpack.c.h.b16 %v2657
    %v3314 = vunpack.c.l.b16 %v2658
    %v3315 = vunpack.c.h.b16 %v2658
    %v3316 = vunpack.c.l.b16 %v2659
    %v3317 = vunpack.c.l.b16 %v2660
    %v3318 = vunpack.c.h.b16 %v2660
    %v3319 = vunpack.c.l.b16 %v2661
    %v3320 = vunpack.c.h.b16 %v2661
    %v3321 = vunpack.c.l.b16 %v2662
    %v3322 = vunpack.c.h.b16 %v2662
    %v3323 = vunpack.c.l.b16 %v2663
    %v3324 = vunpack.c.l.b16 %v2664
    %v3325 = vunpack.c.h.b16 %v2664
    %v3326 = vunpack.c.l.b16 %v2665
    %v3327 = vunpack.c.h.b16 %v2665
    %v3328 = vunpack.c.l.b16 %v2666
    %v3329 = vunpack.c.h.b16 %v2666
    %v3330 = vunpack.c.l.b16 %v2667
    %v3331 = vunpack.c.l.b16 %v2668
    %v3332 = vunpack.c.h.b16 %v2668
    %v3333 = vunpack.c.l.b16 %v2669
    %v3334 = vunpack.c.h.b16 %v2669
    %v3335 = vunpack.c.l.b16 %v2670
    %v3336 = vunpack.c.h.b16 %v2670
    %v3337 = vunpack.c.l.b16 %v2671
    %v3338 = vunpack.c.l.b16 %v2672
    %v3339 = vunpack.c.h.b16 %v2672
    %v3340 = vunpack.c.l.b16 %v2673
    %v3341 = vunpack.c.h.b16 %v2673
    %v3342 = vunpack.c.l.b16 %v2674
    %v3343 = vunpack.c.h.b16 %v2674
    %v3344 = vunpack.c.l.b16 %v2675
    %v3345 = vunpack.c.l.b16 %v2676
    %v3346 = vunpack.c.h.b16 %v2676
    %v3347 = vunpack.c.l.b16 %v2677
    %v3348 = vunpack.c.h.b16 %v2677
    %v3349 = vunpack.c.l.b16 %v2678
    %v3350 = vunpack.c.h.b16 %v2678
    %v3351 = vunpack.c.l.b16 %v2679
    %v3352 = vunpack.c.l.b16 %v2680
    %v3353 = vunpack.c.h.b16 %v2680
    %v3354 = vunpack.c.l.b16 %v2681
    %v3355 = vunpack.c.h.b16 %v2681
    %v3356 = vunpack.c.l.b16 %v2682
    %v3357 = vunpack.c.h.b16 %v2682
    %v3358 = vunpack.c.l.b16 %v2683
    %v3359 = vunpack.c.l.b16 %v2684
    %v3360 = vunpack.c.h.b16 %v2684
    %v3361 = vunpack.c.l.b16 %v2685
    %v3362 = vunpack.c.h.b16 %v2685
    %v3363 = vunpack.c.l.b16 %v2686
    %v3364 = vunpack.c.h.b16 %v2686
    %v3365 = vunpack.c.l.b16 %v2687
    %v3366 = vunpack.c.l.b16 %v2688
    %v3367 = vunpack.c.h.b16 %v2688
    %v3368 = vunpack.c.l.b16 %v2689
    %v3369 = vunpack.c.h.b16 %v2689
    %v3370 = vunpack.c.l.b16 %v2690
    %v3371 = vunpack.c.h.b16 %v2690
    %v3372 = vunpack.c.l.b16 %v2691
    %v3373 = vunpack.c.l.b16 %v2692
    %v3374 = vunpack.c.h.b16 %v2692
    %v3375 = vunpack.c.l.b16 %v2693
    %v3376 = vunpack.c.h.b16 %v2693
    %v3377 = vunpack.c.l.b16 %v2694
    %v3378 = vunpack.c.h.b16 %v2694
    %v3379 = vunpack.c.l.b16 %v2695
    %v3380 = vunpack.c.l.b16 %v2696
    %v3381 = vunpack.c.h.b16 %v2696
    %v3382 = vunpack.c.l.b16 %v2697
    %v3383 = vunpack.c.h.b16 %v2697
    %v3384 = vunpack.c.l.b16 %v2698
    %v3385 = vunpack.c.h.b16 %v2698
    %v3386 = vunpack.c.l.b16 %v2699
    %v3387 = vunpack.c.l.b16 %v2700
    %v3388 = vunpack.c.h.b16 %v2700
    %v3389 = vunpack.c.l.b16 %v2701
    %v3390 = vunpack.c.h.b16 %v2701
    %v3391 = vunpack.c.l.b16 %v2702
    %v3392 = vunpack.c.h.b16 %v2702
    %v3393 = vunpack.c.l.b16 %v2703
    %v3394 = vunpack.c.l.b16 %v2704
    %v3395 = vunpack.c.h.b16 %v2704
    %v3396 = vunpack.c.l.b16 %v2705
    %v3397 = vunpack.c.h.b16 %v2705
    %v3398 = vunpack.c.l.b16 %v2706
    %v3399 = vunpack.c.h.b16 %v2706
    %v3400 = vunpack.c.l.b16 %v2707
    %v3401 = vunpack.c.l.b16 %v2708
    %v3402 = vunpack.c.h.b16 %v2708
    %v3403 = vunpack.c.l.b16 %v2709
    %v3404 = vunpack.c.h.b16 %v2709
    %v3405 = vunpack.c.l.b16 %v2710
    %v3406 = vunpack.c.h.b16 %v2710
    %v3407 = vunpack.c.l.b16 %v2711
    %v3408 = vunpack.c.l.b16 %v2712
    %v3409 = vunpack.c.h.b16 %v2712
    %v3410 = vunpack.c.l.b16 %v2713
    %v3411 = vunpack.c.h.b16 %v2713
    %v3412 = vunpack.c.l.b16 %v2714
    %v3413 = vunpack.c.h.b16 %v2714
    %v3414 = vunpack.c.l.b16 %v2715
    %v3415 = vunpack.c.l.b16 %v2716
    %v3416 = vunpack.c.h.b16 %v2716
    %v3417 = vunpack.c.l.b16 %v2717
    %v3418 = vunpack.c.h.b16 %v2717
    %v3419 = vunpack.c.l.b16 %v2718
    %v3420 = vunpack.c.h.b16 %v2718
    %v3421 = vunpack.c.l.b16 %v2719
    %v3422 = vunpack.c.l.b16 %v2720
    %v3423 = vunpack.c.h.b16 %v2720
    %v3424 = vunpack.c.l.b16 %v2721
    %v3425 = vunpack.c.h.b16 %v2721
    %v3426 = vunpack.c.l.b16 %v2722
    %v3427 = vunpack.c.h.b16 %v2722
    %v3428 = vunpack.c.l.b16 %v2723
    %v3429 = vunpack.c.l.b16 %v2724
    %v3430 = vunpack.c.h.b16 %v2724
    %v3431 = vunpack.c.l.b16 %v2725
    %v3432 = vunpack.c.h.b16 %v2725
    %v3433 = vunpack.c.l.b16 %v2726
    %v3434 = vunpack.c.h.b16 %v2726
    %v3435 = vunpack.c.l.b16 %v2727
    %v3436 = vunpack.c.l.b16 %v2728
    %v3437 = vunpack.c.h.b16 %v2728
    %v3438 = vunpack.c.l.b16 %v2729
    %v3439 = vunpack.c.h.b16 %v2729
    %v3440 = vunpack.c.l.b16 %v2730
    %v3441 = vunpack.c.h.b16 %v2730
    %v3442 = vunpack.c.l.b16 %v2731
    %v3443 = vunpack.c.l.b16 %v2732
    %v3444 = vunpack.c.h.b16 %v2732
    %v3445 = vunpack.c.l.b16 %v2733
    %v3446 = vunpack.c.h.b16 %v2733
    %v3447 = vunpack.c.l.b16 %v2734
    %v3448 = vunpack.c.h.b16 %v2734
    %v3449 = vunpack.c.l.b16 %v2735
    %v3450 = vunpack.c.l.b16 %v2736
    %v3451 = vunpack.c.h.b16 %v2736
    %v3452 = vunpack.c.l.b16 %v2737
    %v3453 = vunpack.c.h.b16 %v2737
    %v3454 = vunpack.c.l.b16 %v2738
    %v3455 = vunpack.c.h.b16 %v2738
    %v3456 = vunpack.c.l.b16 %v2739
    %v3457 = vunpack.c.l.b16 %v2740
    %v3458 = vunpack.c.h.b16 %v2740
    %v3459 = vunpack.c.l.b16 %v2741
    %v3460 = vunpack.c.h.b16 %v2741
    %v3461 = vunpack.c.l.b16 %v2742
    %v3462 = vunpack.c.h.b16 %v2742
    %v3463 = vunpack.c.l.b16 %v2743
    %v3464 = vpack.c.b16 %v3023, %v3016
    %v3465 = vpack.c.b16 %v3024, %v3017
    %v3466 = vpack.c.b16 %v3025, %v3018
    %v3467 = vpack.c.b16 %v3026, %v3019
    %v3468 = vpack.c.b16 %v3027, %v3020
    %v3469 = vpack.c.b16 %v3028, %v3021
    %v3470 = vpack.c.b16 %v3029, %v3022
    %v3471 = vpack.c.b16 %v3037, %v3030
    %v3472 = vpack.c.b16 %v3038, %v3031
    %v3473 = vpack.c.b16 %v3039, %v3032
    %v3474 = vpack.c.b16 %v3040, %v3033
    %v3475 = vpack.c.b16 %v3041, %v3034
    %v3476 = vpack.c.b16 %v3042, %v3035
    %v3477 = vpack.c.b16 %v3043, %v3036
    %v3478 = vpack.c.b16 %v3051, %v3044
    %v3479 = vpack.c.b16 %v3052, %v3045
    %v3480 = vpack.c.b16 %v3053, %v3046
    %v3481 = vpack.c.b16 %v3054, %v3047
    %v3482 = vpack.c.b16 %v3055, %v3048
    %v3483 = vpack.c.b16 %v3056, %v3049
    %v3484 = vpack.c.b16 %v3057, %v3050
    %v3485 = vpack.c.b16 %v3065, %v3058
    %v3486 = vpack.c.b16 %v3066, %v3059
    %v3487 = vpack.c.b16 %v3067, %v3060
    %v3488 = vpack.c.b16 %v3068, %v3061
    %v3489 = vpack.c.b16 %v3069, %v3062
    %v3490 = vpack.c.b16 %v3070, %v3063
    %v3491 = vpack.c.b16 %v3071, %v3064
    %v3492 = vpack.c.b16 %v3079, %v3072
    %v3493 = vpack.c.b16 %v3080, %v3073
    %v3494 = vpack.c.b16 %v3081, %v3074
    %v3495 = vpack.c.b16 %v3082, %v3075
    %v3496 = vpack.c.b16 %v3083, %v3076
    %v3497 = vpack.c.b16 %v3084, %v3077
    %v3498 = vpack.c.b16 %v3085, %v3078
    %v3499 = vpack.c.b16 %v3093, %v3086
    %v3500 = vpack.c.b16 %v3094, %v3087
    %v3501 = vpack.c.b16 %v3095, %v3088
    %v3502 = vpack.c.b16 %v3096, %v3089
    %v3503 = vpack.c.b16 %v3097, %v3090
    %v3504 = vpack.c.b16 %v3098, %v3091
    %v3505 = vpack.c.b16 %v3099, %v3092
    %v3506 = vpack.c.b16 %v3107, %v3100
    %v3507 = vpack.c.b16 %v3108, %v3101
    %v3508 = vpack.c.b16 %v3109, %v3102
    %v3509 = vpack.c.b16 %v3110, %v3103
    %v3510 = vpack.c.b16 %v3111, %v3104
    %v3511 = vpack.c.b16 %v3112, %v3105
    %v3512 = vpack.c.b16 %v3113, %v3106
    %v3513 = vpack.c.b16 %v3121, %v3114
    %v3514 = vpack.c.b16 %v3122, %v3115
    %v3515 = vpack.c.b16 %v3123, %v3116
    %v3516 = vpack.c.b16 %v3124, %v3117
    %v3517 = vpack.c.b16 %v3125, %v3118
    %v3518 = vpack.c.b16 %v3126, %v3119
    %v3519 = vpack.c.b16 %v3127, %v3120
    %v3520 = vpack.c.b16 %v3135, %v3128
    %v3521 = vpack.c.b16 %v3136, %v3129
    %v3522 = vpack.c.b16 %v3137, %v3130
    %v3523 = vpack.c.b16 %v3138, %v3131
    %v3524 = vpack.c.b16 %v3139, %v3132
    %v3525 = vpack.c.b16 %v3140, %v3133
    %v3526 = vpack.c.b16 %v3141, %v3134
    %v3527 = vpack.c.b16 %v3149, %v3142
    %v3528 = vpack.c.b16 %v3150, %v3143
    %v3529 = vpack.c.b16 %v3151, %v3144
    %v3530 = vpack.c.b16 %v3152, %v3145
    %v3531 = vpack.c.b16 %v3153, %v3146
    %v3532 = vpack.c.b16 %v3154, %v3147
    %v3533 = vpack.c.b16 %v3155, %v3148
    %v3534 = vpack.c.b16 %v3163, %v3156
    %v3535 = vpack.c.b16 %v3164, %v3157
    %v3536 = vpack.c.b16 %v3165, %v3158
    %v3537 = vpack.c.b16 %v3166, %v3159
    %v3538 = vpack.c.b16 %v3167, %v3160
    %v3539 = vpack.c.b16 %v3168, %v3161
    %v3540 = vpack.c.b16 %v3169, %v3162
    %v3541 = vpack.c.b16 %v3177, %v3170
    %v3542 = vpack.c.b16 %v3178, %v3171
    %v3543 = vpack.c.b16 %v3179, %v3172
    %v3544 = vpack.c.b16 %v3180, %v3173
    %v3545 = vpack.c.b16 %v3181, %v3174
    %v3546 = vpack.c.b16 %v3182, %v3175
    %v3547 = vpack.c.b16 %v3183, %v3176
    %v3548 = vpack.c.b16 %v3191, %v3184
    %v3549 = vpack.c.b16 %v3192, %v3185
    %v3550 = vpack.c.b16 %v3193, %v3186
    %v3551 = vpack.c.b16 %v3194, %v3187
    %v3552 = vpack.c.b16 %v3195, %v3188
    %v3553 = vpack.c.b16 %v3196, %v3189
    %v3554 = vpack.c.b16 %v3197, %v3190
    %v3555 = vpack.c.b16 %v3205, %v3198
    %v3556 = vpack.c.b16 %v3206, %v3199
    %v3557 = vpack.c.b16 %v3207, %v3200
    %v3558 = vpack.c.b16 %v3208, %v3201
    %v3559 = vpack.c.b16 %v3209, %v3202
    %v3560 = vpack.c.b16 %v3210, %v3203
    %v3561 = vpack.c.b16 %v3211, %v3204
    %v3562 = vpack.c.b16 %v3219, %v3212
    %v3563 = vpack.c.b16 %v3220, %v3213
    %v3564 = vpack.c.b16 %v3221, %v3214
    %v3565 = vpack.c.b16 %v3222, %v3215
    %v3566 = vpack.c.b16 %v3223, %v3216
    %v3567 = vpack.c.b16 %v3224, %v3217
    %v3568 = vpack.c.b16 %v3225, %v3218
    %v3569 = vpack.c.b16 %v3233, %v3226
    %v3570 = vpack.c.b16 %v3234, %v3227
    %v3571 = vpack.c.b16 %v3235, %v3228
    %v3572 = vpack.c.b16 %v3236, %v3229
    %v3573 = vpack.c.b16 %v3237, %v3230
    %v3574 = vpack.c.b16 %v3238, %v3231
    %v3575 = vpack.c.b16 %v3239, %v3232
    %v3576 = vpack.c.b16 %v3247, %v3240
    %v3577 = vpack.c.b16 %v3248, %v3241
    %v3578 = vpack.c.b16 %v3249, %v3242
    %v3579 = vpack.c.b16 %v3250, %v3243
    %v3580 = vpack.c.b16 %v3251, %v3244
    %v3581 = vpack.c.b16 %v3252, %v3245
    %v3582 = vpack.c.b16 %v3253, %v3246
    %v3583 = vpack.c.b16 %v3261, %v3254
    %v3584 = vpack.c.b16 %v3262, %v3255
    %v3585 = vpack.c.b16 %v3263, %v3256
    %v3586 = vpack.c.b16 %v3264, %v3257
    %v3587 = vpack.c.b16 %v3265, %v3258
    %v3588 = vpack.c.b16 %v3266, %v3259
    %v3589 = vpack.c.b16 %v3267, %v3260
    %v3590 = vpack.c.b16 %v3275, %v3268
    %v3591 = vpack.c.b16 %v3276, %v3269
    %v3592 = vpack.c.b16 %v3277, %v3270
    %v3593 = vpack.c.b16 %v3278, %v3271
    %v3594 = vpack.c.b16 %v3279, %v3272
    %v3595 = vpack.c.b16 %v3280, %v3273
    %v3596 = vpack.c.b16 %v3281, %v3274
    %v3597 = vpack.c.b16 %v3289, %v3282
    %v3598 = vpack.c.b16 %v3290, %v3283
    %v3599 = vpack.c.b16 %v3291, %v3284
    %v3600 = vpack.c.b16 %v3292, %v3285
    %v3601 = vpack.c.b16 %v3293, %v3286
    %v3602 = vpack.c.b16 %v3294, %v3287
    %v3603 = vpack.c.b16 %v3295, %v3288
    %v3604 = vpack.c.b16 %v3303, %v3296
    %v3605 = vpack.c.b16 %v3304, %v3297
    %v3606 = vpack.c.b16 %v3305, %v3298
    %v3607 = vpack.c.b16 %v3306, %v3299
    %v3608 = vpack.c.b16 %v3307, %v3300
    %v3609 = vpack.c.b16 %v3308, %v3301
    %v3610 = vpack.c.b16 %v3309, %v3302
    %v3611 = vpack.c.b16 %v3317, %v3310
    %v3612 = vpack.c.b16 %v3318, %v3311
    %v3613 = vpack.c.b16 %v3319, %v3312
    %v3614 = vpack.c.b16 %v3320, %v3313
    %v3615 = vpack.c.b16 %v3321, %v3314
    %v3616 = vpack.c.b16 %v3322, %v3315
    %v3617 = vpack.c.b16 %v3323, %v3316
    %v3618 = vpack.c.b16 %v3331, %v3324
    %v3619 = vpack.c.b16 %v3332, %v3325
    %v3620 = vpack.c.b16 %v3333, %v3326
    %v3621 = vpack.c.b16 %v3334, %v3327
    %v3622 = vpack.c.b16 %v3335, %v3328
    %v3623 = vpack.c.b16 %v3336, %v3329
    %v3624 = vpack.c.b16 %v3337, %v3330
    %v3625 = vpack.c.b16 %v3345, %v3338
    %v3626 = vpack.c.b16 %v3346, %v3339
    %v3627 = vpack.c.b16 %v3347, %v3340
    %v3628 = vpack.c.b16 %v3348, %v3341
    %v3629 = vpack.c.b16 %v3349, %v3342
    %v3630 = vpack.c.b16 %v3350, %v3343
    %v3631 = vpack.c.b16 %v3351, %v3344
    %v3632 = vpack.c.b16 %v3359, %v3352
    %v3633 = vpack.c.b16 %v3360, %v3353
    %v3634 = vpack.c.b16 %v3361, %v3354
    %v3635 = vpack.c.b16 %v3362, %v3355
    %v3636 = vpack.c.b16 %v3363, %v3356
    %v3637 = vpack.c.b16 %v3364, %v3357
    %v3638 = vpack.c.b16 %v3365, %v3358
    %v3639 = vpack.c.b16 %v3373, %v3366
    %v3640 = vpack.c.b16 %v3374, %v3367
    %v3641 = vpack.c.b16 %v3375, %v3368
    %v3642 = vpack.c.b16 %v3376, %v3369
    %v3643 = vpack.c.b16 %v3377, %v3370
    %v3644 = vpack.c.b16 %v3378, %v3371
    %v3645 = vpack.c.b16 %v3379, %v3372
    %v3646 = vpack.c.b16 %v3387, %v3380
    %v3647 = vpack.c.b16 %v3388, %v3381
    %v3648 = vpack.c.b16 %v3389, %v3382
    %v3649 = vpack.c.b16 %v3390, %v3383
    %v3650 = vpack.c.b16 %v3391, %v3384
    %v3651 = vpack.c.b16 %v3392, %v3385
    %v3652 = vpack.c.b16 %v3393, %v3386
    %v3653 = vpack.c.b16 %v3401, %v3394
    %v3654 = vpack.c.b16 %v3402, %v3395
    %v3655 = vpack.c.b16 %v3403, %v3396
    %v3656 = vpack.c.b16 %v3404, %v3397
    %v3657 = vpack.c.b16 %v3405, %v3398
    %v3658 = vpack.c.b16 %v3406, %v3399
    %v3659 = vpack.c.b16 %v3407, %v3400
    %v3660 = vpack.c.b16 %v3415, %v3408
    %v3661 = vpack.c.b16 %v3416, %v3409
    %v3662 = vpack.c.b16 %v3417, %v3410
    %v3663 = vpack.c.b16 %v3418, %v3411
    %v3664 = vpack.c.b16 %v3419, %v3412
    %v3665 = vpack.c.b16 %v3420, %v3413
    %v3666 = vpack.c.b16 %v3421, %v3414
    %v3667 = vpack.c.b16 %v3429, %v3422
    %v3668 = vpack.c.b16 %v3430, %v3423
    %v3669 = vpack.c.b16 %v3431, %v3424
    %v3670 = vpack.c.b16 %v3432, %v3425
    %v3671 = vpack.c.b16 %v3433, %v3426
    %v3672 = vpack.c.b16 %v3434, %v3427
    %v3673 = vpack.c.b16 %v3435, %v3428
    %v3674 = vpack.c.b16 %v3443, %v3436
    %v3675 = vpack.c.b16 %v3444, %v3437
    %v3676 = vpack.c.b16 %v3445, %v3438
    %v3677 = vpack.c.b16 %v3446, %v3439
    %v3678 = vpack.c.b16 %v3447, %v3440
    %v3679 = vpack.c.b16 %v3448, %v3441
    %v3680 = vpack.c.b16 %v3449, %v3442
    %v3681 = vpack.c.b16 %v3457, %v3450
    %v3682 = vpack.c.b16 %v3458, %v3451
    %v3683 = vpack.c.b16 %v3459, %v3452
    %v3684 = vpack.c.b16 %v3460, %v3453
    %v3685 = vpack.c.b16 %v3461, %v3454
    %v3686 = vpack.c.b16 %v3462, %v3455
    %v3687 = vpack.c.b16 %v3463, %v3456
    %3912 = vmatpush.bf16.msra.mxu0 %v3513
    %3913 = vmatpush.bf16.msra.mxu0 %v3506
    %3914 = vmatpush.bf16.msra.mxu0 %v3499
    %3915 = vmatpush.bf16.msra.mxu0 %v3492
    %3916 = vmatpush.bf16.msra.mxu0 %v3485
    %3917 = vmatpush.bf16.msra.mxu0 %v3478
    %3918 = vmatpush.bf16.msra.mxu0 %v3471
    %3919 = vmatpush.bf16.msra.mxu0 %v3464
    %3920 = vmatmul.bf16.gmra.mxu0 %v2484
    %v3921 = vpop.f32.mrf.mxu0
    %v3922 = vadd.f32 %v2746, %v3921
    %v3923 = vpop.f32.mrf.mxu0
    %v3924 = vadd.f32 %v2746, %v3923
    %3925 = vdwg.mxu0
    %3926 = vmatpush.bf16.msra.mxu0 %v3569
    %3927 = vmatpush.bf16.msra.mxu0 %v3562
    %3928 = vmatpush.bf16.msra.mxu0 %v3555
    %3929 = vmatpush.bf16.msra.mxu0 %v3548
    %3930 = vmatpush.bf16.msra.mxu0 %v3541
    %3931 = vmatpush.bf16.msra.mxu0 %v3534
    %3932 = vmatpush.bf16.msra.mxu0 %v3527
    %3933 = vmatpush.bf16.msra.mxu0 %v3520
    %3934 = vmatmul.bf16.gmra.mxu0 %v2485
    %v3935 = vpop.f32.mrf.mxu0
    %v3936 = vadd.f32 %v3922, %v3935
    %v3937 = vpop.f32.mrf.mxu0
    %v3938 = vadd.f32 %v3924, %v3937
    %3939 = vdwg.mxu0
    %3940 = vmatpush.bf16.msra.mxu0 %v3625
    %3941 = vmatpush.bf16.msra.mxu0 %v3618
    %3942 = vmatpush.bf16.msra.mxu0 %v3611
    %3943 = vmatpush.bf16.msra.mxu0 %v3604
    %3944 = vmatpush.bf16.msra.mxu0 %v3597
    %3945 = vmatpush.bf16.msra.mxu0 %v3590
    %3946 = vmatpush.bf16.msra.mxu0 %v3583
    %3947 = vmatpush.bf16.msra.mxu0 %v3576
    %3948 = vmatmul.bf16.gmra.mxu0 %v2486
    %v3949 = vpop.f32.mrf.mxu0
    %v3950 = vadd.f32 %v3936, %v3949
    %v3951 = vpop.f32.mrf.mxu0
    %v3952 = vadd.f32 %v3938, %v3951
    %3953 = vdwg.mxu0
    %3954 = vmatpush.bf16.msra.mxu0 %v3681
    %3955 = vmatpush.bf16.msra.mxu0 %v3674
    %3956 = vmatpush.bf16.msra.mxu0 %v3667
    %3957 = vmatpush.bf16.msra.mxu0 %v3660
    %3958 = vmatpush.bf16.msra.mxu0 %v3653
    %3959 = vmatpush.bf16.msra.mxu0 %v3646
    %3960 = vmatpush.bf16.msra.mxu0 %v3639
    %3961 = vmatpush.bf16.msra.mxu0 %v3632
    %3962 = vmatmul.bf16.gmra.mxu0 %v2487
    %v3963 = vpop.f32.mrf.mxu0
    %v3964 = vadd.f32 %v3950, %v3963
    %v3965 = vpop.f32.mrf.mxu0
    %v3966 = vadd.f32 %v3952, %v3965
    %3967 = vdwg.mxu0
    %3968 = vmatpush.bf16.msra.mxu0 %v3514
    %3969 = vmatpush.bf16.msra.mxu0 %v3507
    %3970 = vmatpush.bf16.msra.mxu0 %v3500
    %3971 = vmatpush.bf16.msra.mxu0 %v3493
    %3972 = vmatpush.bf16.msra.mxu0 %v3486
    %3973 = vmatpush.bf16.msra.mxu0 %v3479
    %3974 = vmatpush.bf16.msra.mxu0 %v3472
    %3975 = vmatpush.bf16.msra.mxu0 %v3465
    %3976 = vmatmul.bf16.gmra.mxu0 %v2484
    %v3977 = vpop.f32.mrf.mxu0
    %v3978 = vadd.f32 %v2747, %v3977
    %v3979 = vpop.f32.mrf.mxu0
    %v3980 = vadd.f32 %v2747, %v3979
    %3981 = vdwg.mxu0
    %3982 = vmatpush.bf16.msra.mxu0 %v3570
    %3983 = vmatpush.bf16.msra.mxu0 %v3563
    %3984 = vmatpush.bf16.msra.mxu0 %v3556
    %3985 = vmatpush.bf16.msra.mxu0 %v3549
    %3986 = vmatpush.bf16.msra.mxu0 %v3542
    %3987 = vmatpush.bf16.msra.mxu0 %v3535
    %3988 = vmatpush.bf16.msra.mxu0 %v3528
    %3989 = vmatpush.bf16.msra.mxu0 %v3521
    %3990 = vmatmul.bf16.gmra.mxu0 %v2485
    %v3991 = vpop.f32.mrf.mxu0
    %v3992 = vadd.f32 %v3978, %v3991
    %v3993 = vpop.f32.mrf.mxu0
    %v3994 = vadd.f32 %v3980, %v3993
    %3995 = vdwg.mxu0
    %3996 = vmatpush.bf16.msra.mxu0 %v3626
    %3997 = vmatpush.bf16.msra.mxu0 %v3619
    %3998 = vmatpush.bf16.msra.mxu0 %v3612
    %3999 = vmatpush.bf16.msra.mxu0 %v3605
    %4000 = vmatpush.bf16.msra.mxu0 %v3598
    %4001 = vmatpush.bf16.msra.mxu0 %v3591
    %4002 = vmatpush.bf16.msra.mxu0 %v3584
    %4003 = vmatpush.bf16.msra.mxu0 %v3577
    %4004 = vmatmul.bf16.gmra.mxu0 %v2486
    %v4005 = vpop.f32.mrf.mxu0
    %v4006 = vadd.f32 %v3992, %v4005
    %v4007 = vpop.f32.mrf.mxu0
    %v4008 = vadd.f32 %v3994, %v4007
    %4009 = vdwg.mxu0
    %4010 = vmatpush.bf16.msra.mxu0 %v3682
    %4011 = vmatpush.bf16.msra.mxu0 %v3675
    %4012 = vmatpush.bf16.msra.mxu0 %v3668
    %4013 = vmatpush.bf16.msra.mxu0 %v3661
    %4014 = vmatpush.bf16.msra.mxu0 %v3654
    %4015 = vmatpush.bf16.msra.mxu0 %v3647
    %4016 = vmatpush.bf16.msra.mxu0 %v3640
    %4017 = vmatpush.bf16.msra.mxu0 %v3633
    %4018 = vmatmul.bf16.gmra.mxu0 %v2487
    %v4019 = vpop.f32.mrf.mxu0
    %v4020 = vadd.f32 %v4006, %v4019
    %v4021 = vpop.f32.mrf.mxu0
    %v4022 = vadd.f32 %v4008, %v4021
    %4023 = vdwg.mxu0
    %4024 = vmatpush.bf16.msra.mxu0 %v3515
    %4025 = vmatpush.bf16.msra.mxu0 %v3508
    %4026 = vmatpush.bf16.msra.mxu0 %v3501
    %4027 = vmatpush.bf16.msra.mxu0 %v3494
    %4028 = vmatpush.bf16.msra.mxu0 %v3487
    %4029 = vmatpush.bf16.msra.mxu0 %v3480
    %4030 = vmatpush.bf16.msra.mxu0 %v3473
    %4031 = vmatpush.bf16.msra.mxu0 %v3466
    %4032 = vmatmul.bf16.gmra.mxu0 %v2484
    %v4033 = vpop.f32.mrf.mxu0
    %v4034 = vadd.f32 %v2748, %v4033
    %v4035 = vpop.f32.mrf.mxu0
    %v4036 = vadd.f32 %v2748, %v4035
    %4037 = vdwg.mxu0
    %4038 = vmatpush.bf16.msra.mxu0 %v3571
    %4039 = vmatpush.bf16.msra.mxu0 %v3564
    %4040 = vmatpush.bf16.msra.mxu0 %v3557
    %4041 = vmatpush.bf16.msra.mxu0 %v3550
    %4042 = vmatpush.bf16.msra.mxu0 %v3543
    %4043 = vmatpush.bf16.msra.mxu0 %v3536
    %4044 = vmatpush.bf16.msra.mxu0 %v3529
    %4045 = vmatpush.bf16.msra.mxu0 %v3522
    %4046 = vmatmul.bf16.gmra.mxu0 %v2485
    %v4047 = vpop.f32.mrf.mxu0
    %v4048 = vadd.f32 %v4034, %v4047
    %v4049 = vpop.f32.mrf.mxu0
    %v4050 = vadd.f32 %v4036, %v4049
    %4051 = vdwg.mxu0
    %4052 = vmatpush.bf16.msra.mxu0 %v3627
    %4053 = vmatpush.bf16.msra.mxu0 %v3620
    %4054 = vmatpush.bf16.msra.mxu0 %v3613
    %4055 = vmatpush.bf16.msra.mxu0 %v3606
    %4056 = vmatpush.bf16.msra.mxu0 %v3599
    %4057 = vmatpush.bf16.msra.mxu0 %v3592
    %4058 = vmatpush.bf16.msra.mxu0 %v3585
    %4059 = vmatpush.bf16.msra.mxu0 %v3578
    %4060 = vmatmul.bf16.gmra.mxu0 %v2486
    %v4061 = vpop.f32.mrf.mxu0
    %v4062 = vadd.f32 %v4048, %v4061
    %v4063 = vpop.f32.mrf.mxu0
    %v4064 = vadd.f32 %v4050, %v4063
    %4065 = vdwg.mxu0
    %4066 = vmatpush.bf16.msra.mxu0 %v3683
    %4067 = vmatpush.bf16.msra.mxu0 %v3676
    %4068 = vmatpush.bf16.msra.mxu0 %v3669
    %4069 = vmatpush.bf16.msra.mxu0 %v3662
    %4070 = vmatpush.bf16.msra.mxu0 %v3655
    %4071 = vmatpush.bf16.msra.mxu0 %v3648
    %4072 = vmatpush.bf16.msra.mxu0 %v3641
    %4073 = vmatpush.bf16.msra.mxu0 %v3634
    %4074 = vmatmul.bf16.gmra.mxu0 %v2487
    %v4075 = vpop.f32.mrf.mxu0
    %v4076 = vadd.f32 %v4062, %v4075
    %v4077 = vpop.f32.mrf.mxu0
    %v4078 = vadd.f32 %v4064, %v4077
    %4079 = vdwg.mxu0
    %4080 = vmatpush.bf16.msra.mxu0 %v3516
    %4081 = vmatpush.bf16.msra.mxu0 %v3509
    %4082 = vmatpush.bf16.msra.mxu0 %v3502
    %4083 = vmatpush.bf16.msra.mxu0 %v3495
    %4084 = vmatpush.bf16.msra.mxu0 %v3488
    %4085 = vmatpush.bf16.msra.mxu0 %v3481
    %4086 = vmatpush.bf16.msra.mxu0 %v3474
    %4087 = vmatpush.bf16.msra.mxu0 %v3467
    %4088 = vmatmul.bf16.gmra.mxu0 %v2484
    %v4089 = vpop.f32.mrf.mxu0
    %v4090 = vadd.f32 %v2749, %v4089
    %v4091 = vpop.f32.mrf.mxu0
    %v4092 = vadd.f32 %v2749, %v4091
    %4093 = vdwg.mxu0
    %4094 = vmatpush.bf16.msra.mxu0 %v3572
    %4095 = vmatpush.bf16.msra.mxu0 %v3565
    %4096 = vmatpush.bf16.msra.mxu0 %v3558
    %4097 = vmatpush.bf16.msra.mxu0 %v3551
    %4098 = vmatpush.bf16.msra.mxu0 %v3544
    %4099 = vmatpush.bf16.msra.mxu0 %v3537
    %4100 = vmatpush.bf16.msra.mxu0 %v3530
    %4101 = vmatpush.bf16.msra.mxu0 %v3523
    %4102 = vmatmul.bf16.gmra.mxu0 %v2485
    %v4103 = vpop.f32.mrf.mxu0
    %v4104 = vadd.f32 %v4090, %v4103
    %v4105 = vpop.f32.mrf.mxu0
    %v4106 = vadd.f32 %v4092, %v4105
    %4107 = vdwg.mxu0
    %4108 = vmatpush.bf16.msra.mxu0 %v3628
    %4109 = vmatpush.bf16.msra.mxu0 %v3621
    %4110 = vmatpush.bf16.msra.mxu0 %v3614
    %4111 = vmatpush.bf16.msra.mxu0 %v3607
    %4112 = vmatpush.bf16.msra.mxu0 %v3600
    %4113 = vmatpush.bf16.msra.mxu0 %v3593
    %4114 = vmatpush.bf16.msra.mxu0 %v3586
    %4115 = vmatpush.bf16.msra.mxu0 %v3579
    %4116 = vmatmul.bf16.gmra.mxu0 %v2486
    %v4117 = vpop.f32.mrf.mxu0
    %v4118 = vadd.f32 %v4104, %v4117
    %v4119 = vpop.f32.mrf.mxu0
    %v4120 = vadd.f32 %v4106, %v4119
    %4121 = vdwg.mxu0
    %4122 = vmatpush.bf16.msra.mxu0 %v3684
    %4123 = vmatpush.bf16.msra.mxu0 %v3677
    %4124 = vmatpush.bf16.msra.mxu0 %v3670
    %4125 = vmatpush.bf16.msra.mxu0 %v3663
    %4126 = vmatpush.bf16.msra.mxu0 %v3656
    %4127 = vmatpush.bf16.msra.mxu0 %v3649
    %4128 = vmatpush.bf16.msra.mxu0 %v3642
    %4129 = vmatpush.bf16.msra.mxu0 %v3635
    %4130 = vmatmul.bf16.gmra.mxu0 %v2487
    %v4131 = vpop.f32.mrf.mxu0
    %v4132 = vadd.f32 %v4118, %v4131
    %v4133 = vpop.f32.mrf.mxu0
    %v4134 = vadd.f32 %v4120, %v4133
    %4135 = vdwg.mxu0
    %4136 = vmatpush.bf16.msra.mxu0 %v3517
    %4137 = vmatpush.bf16.msra.mxu0 %v3510
    %4138 = vmatpush.bf16.msra.mxu0 %v3503
    %4139 = vmatpush.bf16.msra.mxu0 %v3496
    %4140 = vmatpush.bf16.msra.mxu0 %v3489
    %4141 = vmatpush.bf16.msra.mxu0 %v3482
    %4142 = vmatpush.bf16.msra.mxu0 %v3475
    %4143 = vmatpush.bf16.msra.mxu0 %v3468
    %4144 = vmatmul.bf16.gmra.mxu0 %v2484
    %v4145 = vpop.f32.mrf.mxu0
    %v4146 = vadd.f32 %v2750, %v4145
    %v4147 = vpop.f32.mrf.mxu0
    %v4148 = vadd.f32 %v2750, %v4147
    %4149 = vdwg.mxu0
    %4150 = vmatpush.bf16.msra.mxu0 %v3573
    %4151 = vmatpush.bf16.msra.mxu0 %v3566
    %4152 = vmatpush.bf16.msra.mxu0 %v3559
    %4153 = vmatpush.bf16.msra.mxu0 %v3552
    %4154 = vmatpush.bf16.msra.mxu0 %v3545
    %4155 = vmatpush.bf16.msra.mxu0 %v3538
    %4156 = vmatpush.bf16.msra.mxu0 %v3531
    %4157 = vmatpush.bf16.msra.mxu0 %v3524
    %4158 = vmatmul.bf16.gmra.mxu0 %v2485
    %v4159 = vpop.f32.mrf.mxu0
    %v4160 = vadd.f32 %v4146, %v4159
    %v4161 = vpop.f32.mrf.mxu0
    %v4162 = vadd.f32 %v4148, %v4161
    %4163 = vdwg.mxu0
    %4164 = vmatpush.bf16.msra.mxu0 %v3629
    %4165 = vmatpush.bf16.msra.mxu0 %v3622
    %4166 = vmatpush.bf16.msra.mxu0 %v3615
    %4167 = vmatpush.bf16.msra.mxu0 %v3608
    %4168 = vmatpush.bf16.msra.mxu0 %v3601
    %4169 = vmatpush.bf16.msra.mxu0 %v3594
    %4170 = vmatpush.bf16.msra.mxu0 %v3587
    %4171 = vmatpush.bf16.msra.mxu0 %v3580
    %4172 = vmatmul.bf16.gmra.mxu0 %v2486
    %v4173 = vpop.f32.mrf.mxu0
    %v4174 = vadd.f32 %v4160, %v4173
    %v4175 = vpop.f32.mrf.mxu0
    %v4176 = vadd.f32 %v4162, %v4175
    %4177 = vdwg.mxu0
    %4178 = vmatpush.bf16.msra.mxu0 %v3685
    %4179 = vmatpush.bf16.msra.mxu0 %v3678
    %4180 = vmatpush.bf16.msra.mxu0 %v3671
    %4181 = vmatpush.bf16.msra.mxu0 %v3664
    %4182 = vmatpush.bf16.msra.mxu0 %v3657
    %4183 = vmatpush.bf16.msra.mxu0 %v3650
    %4184 = vmatpush.bf16.msra.mxu0 %v3643
    %4185 = vmatpush.bf16.msra.mxu0 %v3636
    %4186 = vmatmul.bf16.gmra.mxu0 %v2487
    %v4187 = vpop.f32.mrf.mxu0
    %v4188 = vadd.f32 %v4174, %v4187
    %v4189 = vpop.f32.mrf.mxu0
    %v4190 = vadd.f32 %v4176, %v4189
    %4191 = vdwg.mxu0
    %4192 = vmatpush.bf16.msra.mxu0 %v3518
    %4193 = vmatpush.bf16.msra.mxu0 %v3511
    %4194 = vmatpush.bf16.msra.mxu0 %v3504
    %4195 = vmatpush.bf16.msra.mxu0 %v3497
    %4196 = vmatpush.bf16.msra.mxu0 %v3490
    %4197 = vmatpush.bf16.msra.mxu0 %v3483
    %4198 = vmatpush.bf16.msra.mxu0 %v3476
    %4199 = vmatpush.bf16.msra.mxu0 %v3469
    %4200 = vmatmul.bf16.gmra.mxu0 %v2484
    %v4201 = vpop.f32.mrf.mxu0
    %v4202 = vadd.f32 %v2751, %v4201
    %v4203 = vpop.f32.mrf.mxu0
    %v4204 = vadd.f32 %v2751, %v4203
    %4205 = vdwg.mxu0
    %4206 = vmatpush.bf16.msra.mxu0 %v3574
    %4207 = vmatpush.bf16.msra.mxu0 %v3567
    %4208 = vmatpush.bf16.msra.mxu0 %v3560
    %4209 = vmatpush.bf16.msra.mxu0 %v3553
    %4210 = vmatpush.bf16.msra.mxu0 %v3546
    %4211 = vmatpush.bf16.msra.mxu0 %v3539
    %4212 = vmatpush.bf16.msra.mxu0 %v3532
    %4213 = vmatpush.bf16.msra.mxu0 %v3525
    %4214 = vmatmul.bf16.gmra.mxu0 %v2485
    %v4215 = vpop.f32.mrf.mxu0
    %v4216 = vadd.f32 %v4202, %v4215
    %v4217 = vpop.f32.mrf.mxu0
    %v4218 = vadd.f32 %v4204, %v4217
    %4219 = vdwg.mxu0
    %4220 = vmatpush.bf16.msra.mxu0 %v3630
    %4221 = vmatpush.bf16.msra.mxu0 %v3623
    %4222 = vmatpush.bf16.msra.mxu0 %v3616
    %4223 = vmatpush.bf16.msra.mxu0 %v3609
    %4224 = vmatpush.bf16.msra.mxu0 %v3602
    %4225 = vmatpush.bf16.msra.mxu0 %v3595
    %4226 = vmatpush.bf16.msra.mxu0 %v3588
    %4227 = vmatpush.bf16.msra.mxu0 %v3581
    %4228 = vmatmul.bf16.gmra.mxu0 %v2486
    %v4229 = vpop.f32.mrf.mxu0
    %v4230 = vadd.f32 %v4216, %v4229
    %v4231 = vpop.f32.mrf.mxu0
    %v4232 = vadd.f32 %v4218, %v4231
    %4233 = vdwg.mxu0
    %4234 = vmatpush.bf16.msra.mxu0 %v3686
    %4235 = vmatpush.bf16.msra.mxu0 %v3679
    %4236 = vmatpush.bf16.msra.mxu0 %v3672
    %4237 = vmatpush.bf16.msra.mxu0 %v3665
    %4238 = vmatpush.bf16.msra.mxu0 %v3658
    %4239 = vmatpush.bf16.msra.mxu0 %v3651
    %4240 = vmatpush.bf16.msra.mxu0 %v3644
    %4241 = vmatpush.bf16.msra.mxu0 %v3637
    %4242 = vmatmul.bf16.gmra.mxu0 %v2487
    %v4243 = vpop.f32.mrf.mxu0
    %v4244 = vadd.f32 %v4230, %v4243
    %v4245 = vpop.f32.mrf.mxu0
    %v4246 = vadd.f32 %v4232, %v4245
    %4247 = vdwg.mxu0
    %4248 = vmatpush.bf16.msra.mxu0 %v3519
    %4249 = vmatpush.bf16.msra.mxu0 %v3512
    %4250 = vmatpush.bf16.msra.mxu0 %v3505
    %4251 = vmatpush.bf16.msra.mxu0 %v3498
    %4252 = vmatpush.bf16.msra.mxu0 %v3491
    %4253 = vmatpush.bf16.msra.mxu0 %v3484
    %4254 = vmatpush.bf16.msra.mxu0 %v3477
    %4255 = vmatpush.bf16.msra.mxu0 %v3470
    %4256 = vmatmul.bf16.gmra.mxu0 %v2484
    %v4257 = vpop.f32.mrf.mxu0
    %v4258 = vadd.f32 %v2752, %v4257
    %v4259 = vpop.f32.mrf.mxu0
    %v4260 = vadd.f32 %v2752, %v4259
    %4261 = vdwg.mxu0
    %4262 = vmatpush.bf16.msra.mxu0 %v3575
    %4263 = vmatpush.bf16.msra.mxu0 %v3568
    %4264 = vmatpush.bf16.msra.mxu0 %v3561
    %4265 = vmatpush.bf16.msra.mxu0 %v3554
    %4266 = vmatpush.bf16.msra.mxu0 %v3547
    %4267 = vmatpush.bf16.msra.mxu0 %v3540
    %4268 = vmatpush.bf16.msra.mxu0 %v3533
    %4269 = vmatpush.bf16.msra.mxu0 %v3526
    %4270 = vmatmul.bf16.gmra.mxu0 %v2485
    %v4271 = vpop.f32.mrf.mxu0
    %v4272 = vadd.f32 %v4258, %v4271
    %v4273 = vpop.f32.mrf.mxu0
    %v4274 = vadd.f32 %v4260, %v4273
    %4275 = vdwg.mxu0
    %4276 = vmatpush.bf16.msra.mxu0 %v3631
    %4277 = vmatpush.bf16.msra.mxu0 %v3624
    %4278 = vmatpush.bf16.msra.mxu0 %v3617
    %4279 = vmatpush.bf16.msra.mxu0 %v3610
    %4280 = vmatpush.bf16.msra.mxu0 %v3603
    %4281 = vmatpush.bf16.msra.mxu0 %v3596
    %4282 = vmatpush.bf16.msra.mxu0 %v3589
    %4283 = vmatpush.bf16.msra.mxu0 %v3582
    %4284 = vmatmul.bf16.gmra.mxu0 %v2486
    %v4285 = vpop.f32.mrf.mxu0
    %v4286 = vadd.f32 %v4272, %v4285
    %v4287 = vpop.f32.mrf.mxu0
    %v4288 = vadd.f32 %v4274, %v4287
    %4289 = vdwg.mxu0
    %4290 = vmatpush.bf16.msra.mxu0 %v3687
    %4291 = vmatpush.bf16.msra.mxu0 %v3680
    %4292 = vmatpush.bf16.msra.mxu0 %v3673
    %4293 = vmatpush.bf16.msra.mxu0 %v3666
    %4294 = vmatpush.bf16.msra.mxu0 %v3659
    %4295 = vmatpush.bf16.msra.mxu0 %v3652
    %4296 = vmatpush.bf16.msra.mxu0 %v3645
    %4297 = vmatpush.bf16.msra.mxu0 %v3638
    %4298 = vmatmul.bf16.gmra.mxu0 %v2487
    %v4299 = vpop.f32.mrf.mxu0
    %v4300 = vadd.f32 %v4286, %v4299
    %v4301 = vpop.f32.mrf.mxu0
    %v4302 = vadd.f32 %v4288, %v4301
    %4303 = vdwg.mxu0
    %v4304 = vtanh.pop %v3964
    %v4305 = vtanh.pop %v4020
    %v4306 = vtanh.pop %v4076
    %v4307 = vtanh.pop %v4132
    %v4308 = vtanh.pop %v4188
    %v4309 = vtanh.pop %v4244
    %v4310 = vtanh.pop %v4300
    %v4311 = vtanh.pop %v3966
    %v4312 = vtanh.pop %v4022
    %v4313 = vtanh.pop %v4078
    %v4314 = vtanh.pop %v4134
    %v4315 = vtanh.pop %v4190
    %v4316 = vtanh.pop %v4246
    %v4317 = vtanh.pop %v4302
    %v4318 = vpack.c.bf16 %v4305, %v4304
    %v4319 = vpack.c.bf16 %v4307, %v4306
    %v4320 = vpack.c.bf16 %v4309, %v4308
    %v4321 = vpack.c.bf16 %v4310, %v4310
    %v4322 = vpack.c.bf16 %v4312, %v4311
    %v4323 = vpack.c.bf16 %v4314, %v4313
    %v4324 = vpack.c.bf16 %v4316, %v4315
    %v4325 = vpack.c.bf16 %v4317, %v4317
    %4326 = vst [vmem:[%s10] sm:$0xff] %v4318
    %4327 = vst [vmem:[%s10 + $0x8] sm:$0xff] %v4319
    %4328 = vst [vmem:[%s10 + $0x10] sm:$0xff] %v4320
    %4329 = vst [vmem:[%s10 + $0x18] sm:$0xf] %v4321
    %4330 = vst [vmem:[%s10 + $0x1c] sm:$0xff] %v4322
    %4331 = vst [vmem:[%s10 + $0x24] sm:$0xff] %v4323
    %4332 = vst [vmem:[%s10 + $0x2c] sm:$0xff] %v4324
    %4333 = vst [vmem:[%s10 + $0x34] sm:$0xf] %v4325
    // Predicated region
    $region54: #{generator_forward.1} parent=1 // pred_check
      _
    $region55: #{generator_forward.1} parent=1 // pred_check_branch
      %4335 = sbr.rel (0) target = $region57
    $region56: #{generator_forward.1} parent=1 // pred_region
      _
    $region57: #{generator_forward.1} parent=1 // pred_fallthru
      _
    // Predicated region
    $region58: #{generator_forward.1} parent=1 // pred_check
      _
    $region59: #{generator_forward.1} parent=1 // pred_check_branch
      %4337 = sbr.rel (0) target = $region61
    $region60: #{generator_forward.1} parent=1 // pred_region
      _
    $region61: #{generator_forward.1} parent=1 // pred_fallthru
      _
    // Predicated region
    $region62: #{generator_forward.1} parent=1 // pred_check
      _
    $region63: #{generator_forward.1} parent=1 // pred_check_branch
      %4339 = sbr.rel (0) target = $region65
    $region64: #{generator_forward.1} parent=1 // pred_region
      _
    $region65: #{generator_forward.1} parent=1 // pred_fallthru
      _
    // Predicated region
    $region66: #{generator_forward.1} parent=1 // pred_check
      _
    $region67: #{generator_forward.1} parent=1 // pred_check_branch
      %4341 = sbr.rel (0) target = $region69
    $region68: #{generator_forward.1} parent=1 // pred_region
      _
    $region69: #{generator_forward.1} parent=1 // pred_fallthru
      _
    %4342 = vsyncpa [#allocation3], 1
    %4343 = vsyncpa [#allocation5], 1
    %4344 = vsyncpa [#allocation8], 1

</llo_original>
